<compile_context>
chip_gen: v7x
topology: tpu7x:2x2x1
jax: 0.10.0
libtpu: 0.0.40
codegen_flags: <defaults>
</compile_context>

<pallas_src>
from functools import partial

import jax
import jax.numpy as jnp
from jax.experimental import pallas as pl
from jax.experimental.pallas import tpu as pltpu

LN_EPS = 1e-6


# ------------------------------ in-kernel helpers ------------------------------

def _layernorm(x, gamma, beta, eps=LN_EPS):
    """LayerNorm over the last axis (f32). gamma/beta are (1, D)."""
    mu = jnp.mean(x, axis=-1, keepdims=True)
    xc = x - mu
    var = jnp.mean(xc * xc, axis=-1, keepdims=True)
    inv = jax.lax.rsqrt(var + eps)
    return xc * inv * gamma + beta


def _gelu(x):
    # TODO(synk): torch nn.GELU() is erf-exact; the tanh approximation used here
    # differs by < 1e-3 and lowers robustly on the TPU EUP.
    c = 0.7978845608028654  # sqrt(2/pi)
    return 0.5 * x * (1.0 + jnp.tanh(c * (x + 0.044715 * x * x * x)))


def _mlp_chunked(x_bf16, w1_ref, b1_row, w2_ref, b2_row, dh_chunk):
    """fc2(GELU(fc1(x))) with the hidden dim processed in `dh_chunk`-wide slices.

    Keeps only an (M, dh_chunk) f32 GELU slab live at a time; fc2 contributions are
    accumulated in f32.  Exact (blocked matmul).
    """
    M = x_bf16.shape[0]
    Dh = w1_ref.shape[1]
    D_out = w2_ref.shape[1]
    n_chunks = -(-Dh // dh_chunk)
    acc = jnp.zeros((M, D_out), jnp.float32)
    for c in range(n_chunks):
        lo = c * dh_chunk
        hi = min(Dh, lo + dh_chunk)
        h = jnp.dot(x_bf16, w1_ref[:, lo:hi],
                    preferred_element_type=jnp.float32) + b1_row[:, lo:hi]
        h = _gelu(h).astype(jnp.bfloat16)
        acc = acc + jnp.dot(h, w2_ref[lo:hi, :], preferred_element_type=jnp.float32)
    return acc + b2_row


# --------------------------------- fused kernel ----------------------------------

def fused_kernel(x_ref,
                 g1_ref, b1_ref, wqkv_ref, bqkv_ref, wproj_ref, bproj_ref,
                 g2_ref, b2_ref, wfc1_ref, bfc1_ref, wfc2_ref, bfc2_ref,
                 gf_ref, bf_ref, wd1_ref, bd1_ref, wd2_ref, bd2_ref,
                 wm1_ref, bm1_ref, wm2_ref, bm2_ref, wc_ref, bc_ref,
                 dec_ref, cls_ref, *,
                 n_heads, head_dim, scale, n_valid, dh_chunk):
    xb = x_ref[...].astype(jnp.float32)                      # (TB, NP, D)
    TB, NP, D = xb.shape
    M = TB * NP
    x2 = xb.reshape(M, D)                                    # fill MXU M-dim with TB*NP rows

    # -------- encoder block, attention branch:  x + proj(MHSA(LN1(x))) --------
    h = _layernorm(x2, g1_ref[...], b1_ref[...])
    hb = h.astype(jnp.bfloat16)
    bqkv = bqkv_ref[...]                                     # (1, 3D) f32

    def qkv_slice(col0):
        # Column slice of the fused qkv weight -> no (M, 3D) intermediate.
        y = jnp.dot(hb, wqkv_ref[:, col0:col0 + D],
                    preferred_element_type=jnp.float32) + bqkv[:, col0:col0 + D]
        return y.reshape(TB, NP, D)

    q = qkv_slice(0) * scale                                 # fold scale into q (f32)
    k = qkv_slice(D)
    v = qkv_slice(2 * D)

    # Per-head attention; each head's context is projected through its row-slice of
    # Wproj and accumulated -- no (M, D) head concat / relayout, bounded live ranges.
    # The 'bqd,bkd->bqk' contraction (minor dims of both operands) matches the
    # reference flash-attention formulation and needs no explicit k transpose.
    attn_acc = jnp.zeros((M, D), jnp.float32)
    for hi in range(n_heads):
        sl = slice(hi * head_dim, (hi + 1) * head_dim)
        qh = q[..., sl].astype(jnp.bfloat16)                 # (TB, NP, hd)
        kh = k[..., sl].astype(jnp.bfloat16)
        vh = v[..., sl].astype(jnp.bfloat16)
        s = jnp.einsum('bqd,bkd->bqk', qh, kh,
                       preferred_element_type=jnp.float32)   # (TB, NP, NP) f32
        if n_valid < NP:
            # mask padded key tokens out of the softmax
            kidx = jax.lax.broadcasted_iota(jnp.int32, s.shape, 2)
            s = jnp.where(kidx < n_valid, s, -1e30)
        s = s - jnp.max(s, axis=-1, keepdims=True)
        e = jnp.exp(s)
        p = e * pl.reciprocal(jnp.sum(e, axis=-1, keepdims=True), approx=True)
        wa_h = jnp.einsum('bqk,bkd->bqd', p.astype(jnp.bfloat16), vh,
                          preferred_element_type=jnp.float32)  # (TB, NP, hd) f32
        attn_acc = attn_acc + jnp.dot(
            wa_h.reshape(M, head_dim).astype(jnp.bfloat16),
            wproj_ref[sl, :], preferred_element_type=jnp.float32)
    x2 = x2 + attn_acc + bproj_ref[...]

    # -------- encoder block, MLP branch:  x + fc2(GELU(fc1(LN2(x)))) --------
    h2 = _layernorm(x2, g2_ref[...], b2_ref[...]).astype(jnp.bfloat16)
    x2 = x2 + _mlp_chunked(h2, wfc1_ref, bfc1_ref[...], wfc2_ref, bfc2_ref[...], dh_chunk)

    # -------- output heads (fused; `encoded` never leaves VMEM) --------
    nl = _layernorm(x2, gf_ref[...], bf_ref[...])            # norm_layer, (M, D) f32

    # decoded = tanh(decoder-MLP(norm_layer)) on all tokens
    nb = nl.astype(jnp.bfloat16)
    dec = jnp.tanh(_mlp_chunked(nb, wd1_ref, bd1_ref[...], wd2_ref, bd2_ref[...], dh_chunk))
    dec_ref[...] = dec.reshape(TB, NP, D).astype(dec_ref.dtype)

    # cls head: token 0 of every sample -> MLP + residual -> classifier (lane-padded)
    fh = nl.reshape(TB, NP, D)[:, 0, :]                      # (TB, D) f32
    head = _mlp_chunked(fh.astype(jnp.bfloat16), wm1_ref, bm1_ref[...],
                        wm2_ref, bm2_ref[...], dh_chunk) + fh
    cls = jnp.dot(head.astype(jnp.bfloat16), wc_ref[...],
                  preferred_element_type=jnp.float32) + bc_ref[...]
    cls_ref[...] = cls.reshape(TB, 1, cls.shape[-1]).astype(cls_ref.dtype)


# --------------------------------- wrappers --------------------------------------

def _w_spec(shape, single_buffer=True):
    """BlockSpec for a grid-invariant weight/bias input resident at block 0.

    Single-buffered when supported (constant index_map never re-DMAs, so the second
    buffer is wasted VMEM -- matters most on v7x's 64 MiB VMEM).
    """
    nd = len(shape)
    index_map = lambda i, _nd=nd: (0,) * _nd
    if single_buffer:
        try:
            return pl.BlockSpec(shape, index_map, pipeline_mode=pl.Buffered(1))
        except (TypeError, AttributeError):
            pass
    return pl.BlockSpec(shape, index_map)


def _default_vmem_limit():
    """~3/4 of physical VMEM: ~96 MiB on v5e/v6e (128 MiB), ~48 MiB on v7x (64 MiB)."""
    try:
        cap = pltpu.get_tpu_info().vmem_capacity_bytes
        return int(cap * 3 // 4)
    except Exception:
        return 48 * 1024 * 1024


def _pick_batch_block(B, NP, D, Dh, dh_chunk, vmem_limit_bytes):
    """Largest batch block that (a) fits a rough activation budget, (b) leaves >= 2
    grid steps whenever B allows it (pipelining + v7x megacore), (c) prefers an
    MXU-friendly M = TB*NP (multiple of 256, else 128)."""
    divs = [t for t in range(1, B + 1) if B % t == 0]
    # rough f32 activation footprint per sample: residual/LN/q/k/v/attn-acc/dec slabs,
    # the chunked MLP hidden slab and the per-head score tile.
    per_sample = 4 * NP * (10 * D + min(Dh, dh_chunk) + 2 * NP)
    budget = max(vmem_limit_bytes // 3, 2 << 20)
    fit = [t for t in divs if t * per_sample <= budget] or [1]
    pipelined = [t for t in fit if B // t >= 2] or fit

    def mxu_score(t):
        m = t * NP
        return (m % 256 == 0, m % 128 == 0, m)

    return max(pipelined, key=mxu_score)


def pack_params(params):
    """One-time conversion of f32 params into kernel-ready operands: bf16 weight
    matrices, (1, n) f32 bias rows and a lane-dense (128-padded) classifier.
    Done once outside the forward pass so repeated inference pays no per-call casts."""
    # The PyTorch loop `for block in blocks_encoder: encoded = block(x)` feeds the
    # ORIGINAL x to every block and keeps only the last result (no chaining), so only
    # the last block's weights are needed for an identical output.
    (g1, b1, wqkv, bqkv, wproj, bproj, g2, b2, wfc1, bfc1, wfc2, bfc2) = params["blocks"][-1]
    (g, b, wd1, bd1, wd2, bd2, wm1, bm1, wm2, bm2, wc, bc) = params["heads"]
    D = g1.shape[0]
    Dh = wfc1.shape[1]
    C = wc.shape[1]
    Cp = max(128, -(-C // 128) * 128)
    wc_p = jnp.zeros((D, Cp), wc.dtype).at[:, :C].set(wc)
    bc_p = jnp.zeros((Cp,), bc.dtype).at[:C].set(bc)

    def w(a):
        return a.astype(jnp.bfloat16)

    def r(a):
        return a.reshape(1, -1).astype(jnp.float32)

    tensors = (
        r(g1), r(b1), w(wqkv), r(bqkv), w(wproj), r(bproj),
        r(g2), r(b2), w(wfc1), r(bfc1), w(wfc2), r(bfc2),
        r(g), r(b), w(wd1), r(bd1), w(wd2), r(bd2),
        w(wm1), r(bm1), w(wm2), r(bm2), w(wc_p), r(bc_p),
    )
    return {"tensors": tensors, "num_class": C, "hidden": Dh, "cls_pad": Cp, "dim": D}


def auto_encoder_vit_mlp(x, packed, *, n_heads=2, batch_block=None, dh_chunk=512,
                         vmem_limit_bytes=None, single_buffer_weights=True):
    """AutoEncoderViTMLP.forward -> (decoded, cls), fused in a single pallas_call."""
    B, N, D = x.shape
    assert D % n_heads == 0 and D == packed["dim"]
    head_dim = D // n_heads
    scale = float(head_dim) ** -0.5
    Dh = packed["hidden"]
    Cp = packed["cls_pad"]
    C = packed["num_class"]
    tensors = packed["tensors"]

    # pad the sequence length to a sublane multiple of 8 so every (TB*N, D) <->
    # (TB, N, D) reshape stays tile-aligned (padded keys are masked in the softmax).
    NP = -(-N // 8) * 8
    if NP != N:
        x = jnp.pad(x, ((0, 0), (0, NP - N), (0, 0)))

    if vmem_limit_bytes is None:
        vmem_limit_bytes = _default_vmem_limit()
    dh_chunk = min(dh_chunk, Dh)
    tb = batch_block if batch_block is not None else _pick_batch_block(
        B, NP, D, Dh, dh_chunk, vmem_limit_bytes)
    assert B % tb == 0

    kernel = partial(fused_kernel, n_heads=n_heads, head_dim=head_dim,
                     scale=scale, n_valid=N, dh_chunk=dh_chunk)

    in_specs = [pl.BlockSpec((tb, NP, D), lambda i: (i, 0, 0))]
    in_specs += [_w_spec(a.shape, single_buffer_weights) for a in tensors]

    dec_pad, cls3 = pl.pallas_call(
        kernel,
        out_shape=(jax.ShapeDtypeStruct((B, NP, D), x.dtype),
                   jax.ShapeDtypeStruct((B, 1, Cp), x.dtype)),
        grid_spec=pltpu.PrefetchScalarGridSpec(
            num_scalar_prefetch=0,
            grid=(B // tb,),
            in_specs=in_specs,
            out_specs=[pl.BlockSpec((tb, NP, D), lambda i: (i, 0, 0)),
                       pl.BlockSpec((tb, 1, Cp), lambda i: (i, 0, 0))],
        ),
        compiler_params=pltpu.CompilerParams(
            dimension_semantics=("parallel",),
            vmem_limit_bytes=vmem_limit_bytes),
    )(x, *tensors)

    decoded = dec_pad[:, :N, :]
    cls = cls3[:, 0, :C]
    return decoded, cls


# ------------------------------ pure-JAX reference ------------------------------

def _layernorm_ref(x, g, b, eps=LN_EPS):
    mu = x.mean(-1, keepdims=True)
    var = ((x - mu) ** 2).mean(-1, keepdims=True)
    return (x - mu) / jnp.sqrt(var + eps) * g + b


def _mlp_ref(x, w1, b1, w2, b2):
    return _gelu(x @ w1 + b1) @ w2 + b2


def _attn_ref(x, wqkv, bqkv, wproj, bproj, n_heads):
    B, N, D = x.shape
    hd = D // n_heads
    scale = float(hd) ** -0.5
    qkv = x @ wqkv + bqkv
    qkv = qkv.reshape(B, N, 3, n_heads, hd).transpose(2, 0, 3, 1, 4)
    q, k, v = qkv[0], qkv[1], qkv[2]
    dp = jnp.einsum('bhnd,bhmd->bhnm', q, k) * scale
    attn = jax.nn.softmax(dp, axis=-1)
    wa = jnp.einsum('bhnm,bhmd->bhnd', attn, v)
    wa = wa.transpose(0, 2, 1, 3).reshape(B, N, D)
    return wa @ wproj + bproj


def _block_ref(x, blk, n_heads):
    (g1, b1, wqkv, bqkv, wproj, bproj, g2, b2, wfc1, bfc1, wfc2, bfc2) = blk
    x = x + _attn_ref(_layernorm_ref(x, g1, b1), wqkv, bqkv, wproj, bproj, n_heads)
    x = x + _mlp_ref(_layernorm_ref(x, g2, b2), wfc1, bfc1, wfc2, bfc2)
    return x


def forward_ref(x, params, n_heads=2):
    encoded = x
    for blk in params["blocks"]:          # literal (non-chaining) PyTorch loop
        encoded = _block_ref(x, blk, n_heads)
    (g, b, wd1, bd1, wd2, bd2, wm1, bm1, wm2, bm2, wc, bc) = params["heads"]
    norm_layer = _layernorm_ref(encoded, g, b)
    fh = norm_layer[:, 0]
    final_head = _mlp_ref(fh, wm1, bm1, wm2, bm2) + fh
    cls = final_head @ wc + bc
    decoded = jnp.tanh(_mlp_ref(norm_layer, wd1, bd1, wd2, bd2))
    return decoded, cls


# ------------------------------------ main ---------------------------------------

def _init_params(key, D, Dh, C, n_blocks=2):
    def nrm(k, shape, s=0.05):
        return s * jax.random.normal(k, shape, dtype=jnp.float32)

    keys = iter(jax.random.split(key, 64))
    blocks = []
    for _ in range(n_blocks):
        blocks.append((
            1.0 + nrm(next(keys), (D,)), nrm(next(keys), (D,)),        # LN1 gamma, beta
            nrm(next(keys), (D, 3 * D)), nrm(next(keys), (3 * D,)),    # qkv
            nrm(next(keys), (D, D)), nrm(next(keys), (D,)),            # proj
            1.0 + nrm(next(keys), (D,)), nrm(next(keys), (D,)),        # LN2 gamma, beta
            nrm(next(keys), (D, Dh)), nrm(next(keys), (Dh,)),          # fc1
            nrm(next(keys), (Dh, D)), nrm(next(keys), (D,)),           # fc2
        ))
    heads = (
        1.0 + nrm(next(keys), (D,)), nrm(next(keys), (D,)),            # final LayerNorm
        nrm(next(keys), (D, Dh)), nrm(next(keys), (Dh,)),              # decoder fc1
        nrm(next(keys), (Dh, D)), nrm(next(keys), (D,)),               # decoder fc2
        nrm(next(keys), (D, Dh)), nrm(next(keys), (Dh,)),              # cls-mlp fc1
        nrm(next(keys), (Dh, D)), nrm(next(keys), (D,)),               # cls-mlp fc2
        nrm(next(keys), (D, C)), nrm(next(keys), (C,)),                # classifier
    )
    return {"blocks": blocks, "heads": heads}


if __name__ == "__main__":
    # Small shapes consistent with the module: n_heads=2 (as in Block_Encoder),
    # mlp_ratio=4, input_size=D=32, sequence_length=N=8, num_class=8.
    B, N, D, H, C = 2, 8, 32, 2, 8
    Dh = 4 * D

    key = jax.random.PRNGKey(0)
    kx, kp = jax.random.split(key)
    x = jax.random.normal(kx, (B, N, D), dtype=jnp.float32)
    params = _init_params(kp, D, Dh, C)
    packed = pack_params(params)          # one-time bf16 cast / bias reshape / cls pad

    try:
        decoded, cls = auto_encoder_vit_mlp(x, packed, n_heads=H)
        decoded, cls = jax.block_until_ready((decoded, cls))
    except Exception:
        # fall back to default (double-buffered) weight specs if pl.Buffered(1) is
        # not supported by the running JAX build
        decoded, cls = auto_encoder_vit_mlp(x, packed, n_heads=H,
                                            single_buffer_weights=False)
        decoded, cls = jax.block_until_ready((decoded, cls))

    dec_ref, cls_ref = forward_ref(x, params, n_heads=H)
    assert decoded.shape == (B, N, D) and cls.shape == (B, C)
    assert jnp.allclose(decoded, dec_ref, atol=2e-2, rtol=2e-2), \
        float(jnp.max(jnp.abs(decoded - dec_ref)))
    assert jnp.allclose(cls, cls_ref, atol=2e-2, rtol=2e-2), \
        float(jnp.max(jnp.abs(cls - cls_ref)))

    print("KERNEL_OK")
</pallas_src>

<mosaic_0001>
module attributes {stable_mosaic.version = 11 : i64} {
  func.func @fused_kernel(%arg0: i32, %arg1: memref<1x8x32xf32, #tpu.memory_space<vmem>>, %arg2: memref<1x32xf32, #tpu.memory_space<vmem>>, %arg3: memref<1x32xf32, #tpu.memory_space<vmem>>, %arg4: memref<32x96xbf16, #tpu.memory_space<vmem>>, %arg5: memref<1x96xf32, #tpu.memory_space<vmem>>, %arg6: memref<32x32xbf16, #tpu.memory_space<vmem>>, %arg7: memref<1x32xf32, #tpu.memory_space<vmem>>, %arg8: memref<1x32xf32, #tpu.memory_space<vmem>>, %arg9: memref<1x32xf32, #tpu.memory_space<vmem>>, %arg10: memref<32x128xbf16, #tpu.memory_space<vmem>>, %arg11: memref<1x128xf32, #tpu.memory_space<vmem>>, %arg12: memref<128x32xbf16, #tpu.memory_space<vmem>>, %arg13: memref<1x32xf32, #tpu.memory_space<vmem>>, %arg14: memref<1x32xf32, #tpu.memory_space<vmem>>, %arg15: memref<1x32xf32, #tpu.memory_space<vmem>>, %arg16: memref<32x128xbf16, #tpu.memory_space<vmem>>, %arg17: memref<1x128xf32, #tpu.memory_space<vmem>>, %arg18: memref<128x32xbf16, #tpu.memory_space<vmem>>, %arg19: memref<1x32xf32, #tpu.memory_space<vmem>>, %arg20: memref<32x128xbf16, #tpu.memory_space<vmem>>, %arg21: memref<1x128xf32, #tpu.memory_space<vmem>>, %arg22: memref<128x32xbf16, #tpu.memory_space<vmem>>, %arg23: memref<1x32xf32, #tpu.memory_space<vmem>>, %arg24: memref<32x128xbf16, #tpu.memory_space<vmem>>, %arg25: memref<1x128xf32, #tpu.memory_space<vmem>>, %arg26: memref<1x8x32xf32, #tpu.memory_space<vmem>>, %arg27: memref<1x1x128xf32, #tpu.memory_space<vmem>>) attributes {dimension_semantics = [#tpu.dimension_semantics<parallel>], iteration_bounds = array<i64: 2>, scalar_prefetch = 0 : i64, scratch_operands = 0 : i64, tpu.core_type = #tpu.core_type<tc>, window_params = [{transform_indices = @transform_0, window_bounds = array<i64: 1, 8, 32>}, {pipeline_mode = #tpu.pipeline_mode<synchronous>, transform_indices = @transform_1, window_bounds = array<i64: 1, 32>}, {pipeline_mode = #tpu.pipeline_mode<synchronous>, transform_indices = @transform_2, window_bounds = array<i64: 1, 32>}, {pipeline_mode = #tpu.pipeline_mode<synchronous>, transform_indices = @transform_3, window_bounds = array<i64: 32, 96>}, {pipeline_mode = #tpu.pipeline_mode<synchronous>, transform_indices = @transform_4, window_bounds = array<i64: 1, 96>}, {pipeline_mode = #tpu.pipeline_mode<synchronous>, transform_indices = @transform_5, window_bounds = array<i64: 32, 32>}, {pipeline_mode = #tpu.pipeline_mode<synchronous>, transform_indices = @transform_6, window_bounds = array<i64: 1, 32>}, {pipeline_mode = #tpu.pipeline_mode<synchronous>, transform_indices = @transform_7, window_bounds = array<i64: 1, 32>}, {pipeline_mode = #tpu.pipeline_mode<synchronous>, transform_indices = @transform_8, window_bounds = array<i64: 1, 32>}, {pipeline_mode = #tpu.pipeline_mode<synchronous>, transform_indices = @transform_9, window_bounds = array<i64: 32, 128>}, {pipeline_mode = #tpu.pipeline_mode<synchronous>, transform_indices = @transform_10, window_bounds = array<i64: 1, 128>}, {pipeline_mode = #tpu.pipeline_mode<synchronous>, transform_indices = @transform_11, window_bounds = array<i64: 128, 32>}, {pipeline_mode = #tpu.pipeline_mode<synchronous>, transform_indices = @transform_12, window_bounds = array<i64: 1, 32>}, {pipeline_mode = #tpu.pipeline_mode<synchronous>, transform_indices = @transform_13, window_bounds = array<i64: 1, 32>}, {pipeline_mode = #tpu.pipeline_mode<synchronous>, transform_indices = @transform_14, window_bounds = array<i64: 1, 32>}, {pipeline_mode = #tpu.pipeline_mode<synchronous>, transform_indices = @transform_15, window_bounds = array<i64: 32, 128>}, {pipeline_mode = #tpu.pipeline_mode<synchronous>, transform_indices = @transform_16, window_bounds = array<i64: 1, 128>}, {pipeline_mode = #tpu.pipeline_mode<synchronous>, transform_indices = @transform_17, window_bounds = array<i64: 128, 32>}, {pipeline_mode = #tpu.pipeline_mode<synchronous>, transform_indices = @transform_18, window_bounds = array<i64: 1, 32>}, {pipeline_mode = #tpu.pipeline_mode<synchronous>, transform_indices = @transform_19, window_bounds = array<i64: 32, 128>}, {pipeline_mode = #tpu.pipeline_mode<synchronous>, transform_indices = @transform_20, window_bounds = array<i64: 1, 128>}, {pipeline_mode = #tpu.pipeline_mode<synchronous>, transform_indices = @transform_21, window_bounds = array<i64: 128, 32>}, {pipeline_mode = #tpu.pipeline_mode<synchronous>, transform_indices = @transform_22, window_bounds = array<i64: 1, 32>}, {pipeline_mode = #tpu.pipeline_mode<synchronous>, transform_indices = @transform_23, window_bounds = array<i64: 32, 128>}, {pipeline_mode = #tpu.pipeline_mode<synchronous>, transform_indices = @transform_24, window_bounds = array<i64: 1, 128>}, {transform_indices = @transform_25, window_bounds = array<i64: 1, 8, 32>}, {transform_indices = @transform_26, window_bounds = array<i64: 1, 1, 128>}]} {
    %c0 = arith.constant 0 : index
    %c0_0 = arith.constant 0 : index
    %c0_1 = arith.constant 0 : index
    %0 = vector.load %arg1[%c0, %c0_0, %c0_1] : memref<1x8x32xf32, #tpu.memory_space<vmem>>, vector<1x8x32xf32>
    %1 = vector.shape_cast %0 : vector<1x8x32xf32> to vector<8x32xf32>
    %c0_2 = arith.constant 0 : index
    %c0_3 = arith.constant 0 : index
    %2 = vector.load %arg2[%c0_2, %c0_3] : memref<1x32xf32, #tpu.memory_space<vmem>>, vector<1x32xf32>
    %c0_4 = arith.constant 0 : index
    %c0_5 = arith.constant 0 : index
    %3 = vector.load %arg3[%c0_4, %c0_5] : memref<1x32xf32, #tpu.memory_space<vmem>>, vector<1x32xf32>
    %cst = arith.constant dense<0.000000e+00> : vector<8xf32>
    %4 = vector.multi_reduction <add>, %1, %cst [1] : vector<8x32xf32> to vector<8xf32>
    %5 = vector.shape_cast %4 : vector<8xf32> to vector<8x1xf32>
    %cst_6 = arith.constant 3.200000e+01 : f32
    %6 = vector.broadcast %cst_6 : f32 to vector<8x1xf32>
    %7 = arith.divf %5, %6 : vector<8x1xf32>
    %8 = vector.broadcast %7 : vector<8x1xf32> to vector<8x32xf32>
    %9 = arith.subf %1, %8 : vector<8x32xf32>
    %10 = arith.mulf %9, %9 : vector<8x32xf32>
    %cst_7 = arith.constant dense<0.000000e+00> : vector<8xf32>
    %11 = vector.multi_reduction <add>, %10, %cst_7 [1] : vector<8x32xf32> to vector<8xf32>
    %12 = vector.shape_cast %11 : vector<8xf32> to vector<8x1xf32>
    %cst_8 = arith.constant 3.200000e+01 : f32
    %13 = vector.broadcast %cst_8 : f32 to vector<8x1xf32>
    %14 = arith.divf %12, %13 : vector<8x1xf32>
    %cst_9 = arith.constant 9.99999997E-7 : f32
    %15 = vector.broadcast %cst_9 : f32 to vector<8x1xf32>
    %16 = arith.addf %14, %15 : vector<8x1xf32>
    %17 = math.rsqrt %16 : vector<8x1xf32>
    %18 = vector.broadcast %17 : vector<8x1xf32> to vector<8x32xf32>
    %19 = arith.mulf %9, %18 : vector<8x32xf32>
    %20 = vector.broadcast %2 : vector<1x32xf32> to vector<8x32xf32>
    %21 = arith.mulf %19, %20 : vector<8x32xf32>
    %22 = vector.broadcast %3 : vector<1x32xf32> to vector<8x32xf32>
    %23 = arith.addf %21, %22 : vector<8x32xf32>
    %24 = arith.truncf %23 : vector<8x32xf32> to vector<8x32xbf16>
    %c0_10 = arith.constant 0 : index
    %c0_11 = arith.constant 0 : index
    %25 = vector.load %arg5[%c0_10, %c0_11] : memref<1x96xf32, #tpu.memory_space<vmem>>, vector<1x96xf32>
    %c0_12 = arith.constant 0 : index
    %c0_13 = arith.constant 0 : index
    %26 = vector.load %arg4[%c0_12, %c0_13] : memref<32x96xbf16, #tpu.memory_space<vmem>>, vector<32x32xbf16>
    %cst_14 = arith.constant dense<0.000000e+00> : vector<8x32xf32>
    %27 = tpu.matmul %24, %26, %cst_14 {dimension_numbers = #tpu.dot_dimension_numbers<[1], [0], [0], [1], [0, 0, 1, 1], [], []>} : vector<8x32xbf16>, vector<32x32xbf16>, vector<8x32xf32> -> vector<8x32xf32>
    %28 = vector.extract_strided_slice %25 {offsets = [0, 0], sizes = [1, 32], strides = [1, 1]} : vector<1x96xf32> to vector<1x32xf32>
    %29 = vector.broadcast %28 : vector<1x32xf32> to vector<8x32xf32>
    %30 = arith.addf %27, %29 : vector<8x32xf32>
    %31 = vector.shape_cast %30 : vector<8x32xf32> to vector<1x8x32xf32>
    %cst_15 = arith.constant 2.500000e-01 : f32
    %32 = vector.broadcast %cst_15 : f32 to vector<1x8x32xf32>
    %33 = arith.mulf %31, %32 : vector<1x8x32xf32>
    %c0_16 = arith.constant 0 : index
    %c32 = arith.constant 32 : index
    %34 = vector.load %arg4[%c0_16, %c32] : memref<32x96xbf16, #tpu.memory_space<vmem>>, vector<32x32xbf16>
    %cst_17 = arith.constant dense<0.000000e+00> : vector<8x32xf32>
    %35 = tpu.matmul %24, %34, %cst_17 {dimension_numbers = #tpu.dot_dimension_numbers<[1], [0], [0], [1], [0, 0, 1, 1], [], []>} : vector<8x32xbf16>, vector<32x32xbf16>, vector<8x32xf32> -> vector<8x32xf32>
    %36 = vector.extract_strided_slice %25 {offsets = [0, 32], sizes = [1, 32], strides = [1, 1]} : vector<1x96xf32> to vector<1x32xf32>
    %37 = vector.broadcast %36 : vector<1x32xf32> to vector<8x32xf32>
    %38 = arith.addf %35, %37 : vector<8x32xf32>
    %39 = vector.shape_cast %38 : vector<8x32xf32> to vector<1x8x32xf32>
    %c0_18 = arith.constant 0 : index
    %c64 = arith.constant 64 : index
    %40 = vector.load %arg4[%c0_18, %c64] : memref<32x96xbf16, #tpu.memory_space<vmem>>, vector<32x32xbf16>
    %cst_19 = arith.constant dense<0.000000e+00> : vector<8x32xf32>
    %41 = tpu.matmul %24, %40, %cst_19 {dimension_numbers = #tpu.dot_dimension_numbers<[1], [0], [0], [1], [0, 0, 1, 1], [], []>} : vector<8x32xbf16>, vector<32x32xbf16>, vector<8x32xf32> -> vector<8x32xf32>
    %42 = vector.extract_strided_slice %25 {offsets = [0, 64], sizes = [1, 32], strides = [1, 1]} : vector<1x96xf32> to vector<1x32xf32>
    %43 = vector.broadcast %42 : vector<1x32xf32> to vector<8x32xf32>
    %44 = arith.addf %41, %43 : vector<8x32xf32>
    %45 = vector.shape_cast %44 : vector<8x32xf32> to vector<1x8x32xf32>
    %cst_20 = arith.constant 0.000000e+00 : f32
    %46 = vector.broadcast %cst_20 : f32 to vector<8x32xf32>
    %47 = vector.extract_strided_slice %33 {offsets = [0, 0, 0], sizes = [1, 8, 16], strides = [1, 1, 1]} : vector<1x8x32xf32> to vector<1x8x16xf32>
    %48 = arith.truncf %47 : vector<1x8x16xf32> to vector<1x8x16xbf16>
    %49 = vector.extract_strided_slice %39 {offsets = [0, 0, 0], sizes = [1, 8, 16], strides = [1, 1, 1]} : vector<1x8x32xf32> to vector<1x8x16xf32>
    %50 = arith.truncf %49 : vector<1x8x16xf32> to vector<1x8x16xbf16>
    %51 = vector.extract_strided_slice %45 {offsets = [0, 0, 0], sizes = [1, 8, 16], strides = [1, 1, 1]} : vector<1x8x32xf32> to vector<1x8x16xf32>
    %52 = arith.truncf %51 : vector<1x8x16xf32> to vector<1x8x16xbf16>
    "tpu.trace_start"() <{level = 10 : i32, message = "bqd,bkd->bqk"}> : () -> ()
    %cst_21 = arith.constant dense<0.000000e+00> : vector<1x8x8xf32>
    %53 = tpu.matmul %48, %50, %cst_21 {dimension_numbers = #tpu.dot_dimension_numbers<[2], [2], [1], [1], [0, 0, 0, 1, 1, 1], [0], [0]>} : vector<1x8x16xbf16>, vector<1x8x16xbf16>, vector<1x8x8xf32> -> vector<1x8x8xf32>
    "tpu.trace_stop"() : () -> ()
    %cst_22 = arith.constant dense<0xFF800000> : vector<1x8xf32>
    %54 = vector.multi_reduction <maximumf>, %53, %cst_22 [2] : vector<1x8x8xf32> to vector<1x8xf32>
    %55 = vector.shape_cast %54 : vector<1x8xf32> to vector<1x8x1xf32>
    %56 = vector.broadcast %55 : vector<1x8x1xf32> to vector<1x8x8xf32>
    %57 = arith.subf %53, %56 : vector<1x8x8xf32>
    %58 = math.exp %57 : vector<1x8x8xf32>
    %cst_23 = arith.constant dense<0.000000e+00> : vector<1x8xf32>
    %59 = vector.multi_reduction <add>, %58, %cst_23 [2] : vector<1x8x8xf32> to vector<1x8xf32>
    %60 = vector.shape_cast %59 : vector<1x8xf32> to vector<1x8x1xf32>
    %61 = tpu.reciprocal %60 {approx = true} : vector<1x8x1xf32> -> vector<1x8x1xf32>
    %62 = vector.broadcast %61 : vector<1x8x1xf32> to vector<1x8x8xf32>
    %63 = arith.mulf %58, %62 : vector<1x8x8xf32>
    %64 = arith.truncf %63 : vector<1x8x8xf32> to vector<1x8x8xbf16>
    "tpu.trace_start"() <{level = 10 : i32, message = "bqk,bkd->bqd"}> : () -> ()
    %cst_24 = arith.constant dense<0.000000e+00> : vector<1x8x16xf32>
    %65 = tpu.matmul %64, %52, %cst_24 {dimension_numbers = #tpu.dot_dimension_numbers<[2], [1], [1], [2], [0, 0, 0, 1, 1, 2], [0], [0]>} : vector<1x8x8xbf16>, vector<1x8x16xbf16>, vector<1x8x16xf32> -> vector<1x8x16xf32>
    "tpu.trace_stop"() : () -> ()
    %66 = vector.shape_cast %65 : vector<1x8x16xf32> to vector<8x16xf32>
    %67 = arith.truncf %66 : vector<8x16xf32> to vector<8x16xbf16>
    %c0_25 = arith.constant 0 : index
    %c0_26 = arith.constant 0 : index
    %68 = vector.load %arg6[%c0_25, %c0_26] : memref<32x32xbf16, #tpu.memory_space<vmem>>, vector<16x32xbf16>
    %cst_27 = arith.constant dense<0.000000e+00> : vector<8x32xf32>
    %69 = tpu.matmul %67, %68, %cst_27 {dimension_numbers = #tpu.dot_dimension_numbers<[1], [0], [0], [1], [0, 0, 1, 1], [], []>} : vector<8x16xbf16>, vector<16x32xbf16>, vector<8x32xf32> -> vector<8x32xf32>
    %70 = arith.addf %46, %69 : vector<8x32xf32>
    %71 = vector.extract_strided_slice %33 {offsets = [0, 0, 16], sizes = [1, 8, 16], strides = [1, 1, 1]} : vector<1x8x32xf32> to vector<1x8x16xf32>
    %72 = arith.truncf %71 : vector<1x8x16xf32> to vector<1x8x16xbf16>
    %73 = vector.extract_strided_slice %39 {offsets = [0, 0, 16], sizes = [1, 8, 16], strides = [1, 1, 1]} : vector<1x8x32xf32> to vector<1x8x16xf32>
    %74 = arith.truncf %73 : vector<1x8x16xf32> to vector<1x8x16xbf16>
    %75 = vector.extract_strided_slice %45 {offsets = [0, 0, 16], sizes = [1, 8, 16], strides = [1, 1, 1]} : vector<1x8x32xf32> to vector<1x8x16xf32>
    %76 = arith.truncf %75 : vector<1x8x16xf32> to vector<1x8x16xbf16>
    "tpu.trace_start"() <{level = 10 : i32, message = "bqd,bkd->bqk"}> : () -> ()
    %cst_28 = arith.constant dense<0.000000e+00> : vector<1x8x8xf32>
    %77 = tpu.matmul %72, %74, %cst_28 {dimension_numbers = #tpu.dot_dimension_numbers<[2], [2], [1], [1], [0, 0, 0, 1, 1, 1], [0], [0]>} : vector<1x8x16xbf16>, vector<1x8x16xbf16>, vector<1x8x8xf32> -> vector<1x8x8xf32>
    "tpu.trace_stop"() : () -> ()
    %cst_29 = arith.constant dense<0xFF800000> : vector<1x8xf32>
    %78 = vector.multi_reduction <maximumf>, %77, %cst_29 [2] : vector<1x8x8xf32> to vector<1x8xf32>
    %79 = vector.shape_cast %78 : vector<1x8xf32> to vector<1x8x1xf32>
    %80 = vector.broadcast %79 : vector<1x8x1xf32> to vector<1x8x8xf32>
    %81 = arith.subf %77, %80 : vector<1x8x8xf32>
    %82 = math.exp %81 : vector<1x8x8xf32>
    %cst_30 = arith.constant dense<0.000000e+00> : vector<1x8xf32>
    %83 = vector.multi_reduction <add>, %82, %cst_30 [2] : vector<1x8x8xf32> to vector<1x8xf32>
    %84 = vector.shape_cast %83 : vector<1x8xf32> to vector<1x8x1xf32>
    %85 = tpu.reciprocal %84 {approx = true} : vector<1x8x1xf32> -> vector<1x8x1xf32>
    %86 = vector.broadcast %85 : vector<1x8x1xf32> to vector<1x8x8xf32>
    %87 = arith.mulf %82, %86 : vector<1x8x8xf32>
    %88 = arith.truncf %87 : vector<1x8x8xf32> to vector<1x8x8xbf16>
    "tpu.trace_start"() <{level = 10 : i32, message = "bqk,bkd->bqd"}> : () -> ()
    %cst_31 = arith.constant dense<0.000000e+00> : vector<1x8x16xf32>
    %89 = tpu.matmul %88, %76, %cst_31 {dimension_numbers = #tpu.dot_dimension_numbers<[2], [1], [1], [2], [0, 0, 0, 1, 1, 2], [0], [0]>} : vector<1x8x8xbf16>, vector<1x8x16xbf16>, vector<1x8x16xf32> -> vector<1x8x16xf32>
    "tpu.trace_stop"() : () -> ()
    %90 = vector.shape_cast %89 : vector<1x8x16xf32> to vector<8x16xf32>
    %91 = arith.truncf %90 : vector<8x16xf32> to vector<8x16xbf16>
    %c16 = arith.constant 16 : index
    %c0_32 = arith.constant 0 : index
    %92 = vector.load %arg6[%c16, %c0_32] : memref<32x32xbf16, #tpu.memory_space<vmem>>, vector<16x32xbf16>
    %cst_33 = arith.constant dense<0.000000e+00> : vector<8x32xf32>
    %93 = tpu.matmul %91, %92, %cst_33 {dimension_numbers = #tpu.dot_dimension_numbers<[1], [0], [0], [1], [0, 0, 1, 1], [], []>} : vector<8x16xbf16>, vector<16x32xbf16>, vector<8x32xf32> -> vector<8x32xf32>
    %94 = arith.addf %70, %93 : vector<8x32xf32>
    %95 = arith.addf %1, %94 : vector<8x32xf32>
    %c0_34 = arith.constant 0 : index
    %c0_35 = arith.constant 0 : index
    %96 = vector.load %arg7[%c0_34, %c0_35] : memref<1x32xf32, #tpu.memory_space<vmem>>, vector<1x32xf32>
    %97 = vector.broadcast %96 : vector<1x32xf32> to vector<8x32xf32>
    %98 = arith.addf %95, %97 : vector<8x32xf32>
    %c0_36 = arith.constant 0 : index
    %c0_37 = arith.constant 0 : index
    %99 = vector.load %arg8[%c0_36, %c0_37] : memref<1x32xf32, #tpu.memory_space<vmem>>, vector<1x32xf32>
    %c0_38 = arith.constant 0 : index
    %c0_39 = arith.constant 0 : index
    %100 = vector.load %arg9[%c0_38, %c0_39] : memref<1x32xf32, #tpu.memory_space<vmem>>, vector<1x32xf32>
    %cst_40 = arith.constant dense<0.000000e+00> : vector<8xf32>
    %101 = vector.multi_reduction <add>, %98, %cst_40 [1] : vector<8x32xf32> to vector<8xf32>
    %102 = vector.shape_cast %101 : vector<8xf32> to vector<8x1xf32>
    %cst_41 = arith.constant 3.200000e+01 : f32
    %103 = vector.broadcast %cst_41 : f32 to vector<8x1xf32>
    %104 = arith.divf %102, %103 : vector<8x1xf32>
    %105 = vector.broadcast %104 : vector<8x1xf32> to vector<8x32xf32>
    %106 = arith.subf %98, %105 : vector<8x32xf32>
    %107 = arith.mulf %106, %106 : vector<8x32xf32>
    %cst_42 = arith.constant dense<0.000000e+00> : vector<8xf32>
    %108 = vector.multi_reduction <add>, %107, %cst_42 [1] : vector<8x32xf32> to vector<8xf32>
    %109 = vector.shape_cast %108 : vector<8xf32> to vector<8x1xf32>
    %cst_43 = arith.constant 3.200000e+01 : f32
    %110 = vector.broadcast %cst_43 : f32 to vector<8x1xf32>
    %111 = arith.divf %109, %110 : vector<8x1xf32>
    %cst_44 = arith.constant 9.99999997E-7 : f32
    %112 = vector.broadcast %cst_44 : f32 to vector<8x1xf32>
    %113 = arith.addf %111, %112 : vector<8x1xf32>
    %114 = math.rsqrt %113 : vector<8x1xf32>
    %115 = vector.broadcast %114 : vector<8x1xf32> to vector<8x32xf32>
    %116 = arith.mulf %106, %115 : vector<8x32xf32>
    %117 = vector.broadcast %99 : vector<1x32xf32> to vector<8x32xf32>
    %118 = arith.mulf %116, %117 : vector<8x32xf32>
    %119 = vector.broadcast %100 : vector<1x32xf32> to vector<8x32xf32>
    %120 = arith.addf %118, %119 : vector<8x32xf32>
    %121 = arith.truncf %120 : vector<8x32xf32> to vector<8x32xbf16>
    %c0_45 = arith.constant 0 : index
    %c0_46 = arith.constant 0 : index
    %122 = vector.load %arg11[%c0_45, %c0_46] : memref<1x128xf32, #tpu.memory_space<vmem>>, vector<1x128xf32>
    %c0_47 = arith.constant 0 : index
    %c0_48 = arith.constant 0 : index
    %123 = vector.load %arg13[%c0_47, %c0_48] : memref<1x32xf32, #tpu.memory_space<vmem>>, vector<1x32xf32>
    %cst_49 = arith.constant 0.000000e+00 : f32
    %124 = vector.broadcast %cst_49 : f32 to vector<8x32xf32>
    %c0_50 = arith.constant 0 : index
    %c0_51 = arith.constant 0 : index
    %125 = vector.load %arg10[%c0_50, %c0_51] : memref<32x128xbf16, #tpu.memory_space<vmem>>, vector<32x128xbf16>
    %cst_52 = arith.constant dense<0.000000e+00> : vector<8x128xf32>
    %126 = tpu.matmul %121, %125, %cst_52 {dimension_numbers = #tpu.dot_dimension_numbers<[1], [0], [0], [1], [0, 0, 1, 1], [], []>} : vector<8x32xbf16>, vector<32x128xbf16>, vector<8x128xf32> -> vector<8x128xf32>
    %127 = vector.broadcast %122 : vector<1x128xf32> to vector<8x128xf32>
    %128 = arith.addf %126, %127 : vector<8x128xf32>
    %cst_53 = arith.constant 5.000000e-01 : f32
    %129 = vector.broadcast %cst_53 : f32 to vector<8x128xf32>
    %130 = arith.mulf %129, %128 : vector<8x128xf32>
    %cst_54 = arith.constant 4.471500e-02 : f32
    %131 = vector.broadcast %cst_54 : f32 to vector<8x128xf32>
    %132 = arith.mulf %131, %128 : vector<8x128xf32>
    %133 = arith.mulf %132, %128 : vector<8x128xf32>
    %134 = arith.mulf %133, %128 : vector<8x128xf32>
    %135 = arith.addf %128, %134 : vector<8x128xf32>
    %cst_55 = arith.constant 0.797884583 : f32
    %136 = vector.broadcast %cst_55 : f32 to vector<8x128xf32>
    %137 = arith.mulf %136, %135 : vector<8x128xf32>
    %138 = math.tanh %137 : vector<8x128xf32>
    %cst_56 = arith.constant 1.000000e+00 : f32
    %139 = vector.broadcast %cst_56 : f32 to vector<8x128xf32>
    %140 = arith.addf %139, %138 : vector<8x128xf32>
    %141 = arith.mulf %130, %140 : vector<8x128xf32>
    %142 = arith.truncf %141 : vector<8x128xf32> to vector<8x128xbf16>
    %c0_57 = arith.constant 0 : index
    %c0_58 = arith.constant 0 : index
    %143 = vector.load %arg12[%c0_57, %c0_58] : memref<128x32xbf16, #tpu.memory_space<vmem>>, vector<128x32xbf16>
    %cst_59 = arith.constant dense<0.000000e+00> : vector<8x32xf32>
    %144 = tpu.matmul %142, %143, %cst_59 {dimension_numbers = #tpu.dot_dimension_numbers<[1], [0], [0], [1], [0, 0, 1, 1], [], []>} : vector<8x128xbf16>, vector<128x32xbf16>, vector<8x32xf32> -> vector<8x32xf32>
    %145 = arith.addf %124, %144 : vector<8x32xf32>
    %146 = vector.broadcast %123 : vector<1x32xf32> to vector<8x32xf32>
    %147 = arith.addf %145, %146 : vector<8x32xf32>
    %148 = arith.addf %98, %147 : vector<8x32xf32>
    %c0_60 = arith.constant 0 : index
    %c0_61 = arith.constant 0 : index
    %149 = vector.load %arg14[%c0_60, %c0_61] : memref<1x32xf32, #tpu.memory_space<vmem>>, vector<1x32xf32>
    %c0_62 = arith.constant 0 : index
    %c0_63 = arith.constant 0 : index
    %150 = vector.load %arg15[%c0_62, %c0_63] : memref<1x32xf32, #tpu.memory_space<vmem>>, vector<1x32xf32>
    %cst_64 = arith.constant dense<0.000000e+00> : vector<8xf32>
    %151 = vector.multi_reduction <add>, %148, %cst_64 [1] : vector<8x32xf32> to vector<8xf32>
    %152 = vector.shape_cast %151 : vector<8xf32> to vector<8x1xf32>
    %cst_65 = arith.constant 3.200000e+01 : f32
    %153 = vector.broadcast %cst_65 : f32 to vector<8x1xf32>
    %154 = arith.divf %152, %153 : vector<8x1xf32>
    %155 = vector.broadcast %154 : vector<8x1xf32> to vector<8x32xf32>
    %156 = arith.subf %148, %155 : vector<8x32xf32>
    %157 = arith.mulf %156, %156 : vector<8x32xf32>
    %cst_66 = arith.constant dense<0.000000e+00> : vector<8xf32>
    %158 = vector.multi_reduction <add>, %157, %cst_66 [1] : vector<8x32xf32> to vector<8xf32>
    %159 = vector.shape_cast %158 : vector<8xf32> to vector<8x1xf32>
    %cst_67 = arith.constant 3.200000e+01 : f32
    %160 = vector.broadcast %cst_67 : f32 to vector<8x1xf32>
    %161 = arith.divf %159, %160 : vector<8x1xf32>
    %cst_68 = arith.constant 9.99999997E-7 : f32
    %162 = vector.broadcast %cst_68 : f32 to vector<8x1xf32>
    %163 = arith.addf %161, %162 : vector<8x1xf32>
    %164 = math.rsqrt %163 : vector<8x1xf32>
    %165 = vector.broadcast %164 : vector<8x1xf32> to vector<8x32xf32>
    %166 = arith.mulf %156, %165 : vector<8x32xf32>
    %167 = vector.broadcast %149 : vector<1x32xf32> to vector<8x32xf32>
    %168 = arith.mulf %166, %167 : vector<8x32xf32>
    %169 = vector.broadcast %150 : vector<1x32xf32> to vector<8x32xf32>
    %170 = arith.addf %168, %169 : vector<8x32xf32>
    %171 = arith.truncf %170 : vector<8x32xf32> to vector<8x32xbf16>
    %c0_69 = arith.constant 0 : index
    %c0_70 = arith.constant 0 : index
    %172 = vector.load %arg17[%c0_69, %c0_70] : memref<1x128xf32, #tpu.memory_space<vmem>>, vector<1x128xf32>
    %c0_71 = arith.constant 0 : index
    %c0_72 = arith.constant 0 : index
    %173 = vector.load %arg19[%c0_71, %c0_72] : memref<1x32xf32, #tpu.memory_space<vmem>>, vector<1x32xf32>
    %cst_73 = arith.constant 0.000000e+00 : f32
    %174 = vector.broadcast %cst_73 : f32 to vector<8x32xf32>
    %c0_74 = arith.constant 0 : index
    %c0_75 = arith.constant 0 : index
    %175 = vector.load %arg16[%c0_74, %c0_75] : memref<32x128xbf16, #tpu.memory_space<vmem>>, vector<32x128xbf16>
    %cst_76 = arith.constant dense<0.000000e+00> : vector<8x128xf32>
    %176 = tpu.matmul %171, %175, %cst_76 {dimension_numbers = #tpu.dot_dimension_numbers<[1], [0], [0], [1], [0, 0, 1, 1], [], []>} : vector<8x32xbf16>, vector<32x128xbf16>, vector<8x128xf32> -> vector<8x128xf32>
    %177 = vector.broadcast %172 : vector<1x128xf32> to vector<8x128xf32>
    %178 = arith.addf %176, %177 : vector<8x128xf32>
    %cst_77 = arith.constant 5.000000e-01 : f32
    %179 = vector.broadcast %cst_77 : f32 to vector<8x128xf32>
    %180 = arith.mulf %179, %178 : vector<8x128xf32>
    %cst_78 = arith.constant 4.471500e-02 : f32
    %181 = vector.broadcast %cst_78 : f32 to vector<8x128xf32>
    %182 = arith.mulf %181, %178 : vector<8x128xf32>
    %183 = arith.mulf %182, %178 : vector<8x128xf32>
    %184 = arith.mulf %183, %178 : vector<8x128xf32>
    %185 = arith.addf %178, %184 : vector<8x128xf32>
    %cst_79 = arith.constant 0.797884583 : f32
    %186 = vector.broadcast %cst_79 : f32 to vector<8x128xf32>
    %187 = arith.mulf %186, %185 : vector<8x128xf32>
    %188 = math.tanh %187 : vector<8x128xf32>
    %cst_80 = arith.constant 1.000000e+00 : f32
    %189 = vector.broadcast %cst_80 : f32 to vector<8x128xf32>
    %190 = arith.addf %189, %188 : vector<8x128xf32>
    %191 = arith.mulf %180, %190 : vector<8x128xf32>
    %192 = arith.truncf %191 : vector<8x128xf32> to vector<8x128xbf16>
    %c0_81 = arith.constant 0 : index
    %c0_82 = arith.constant 0 : index
    %193 = vector.load %arg18[%c0_81, %c0_82] : memref<128x32xbf16, #tpu.memory_space<vmem>>, vector<128x32xbf16>
    %cst_83 = arith.constant dense<0.000000e+00> : vector<8x32xf32>
    %194 = tpu.matmul %192, %193, %cst_83 {dimension_numbers = #tpu.dot_dimension_numbers<[1], [0], [0], [1], [0, 0, 1, 1], [], []>} : vector<8x128xbf16>, vector<128x32xbf16>, vector<8x32xf32> -> vector<8x32xf32>
    %195 = arith.addf %174, %194 : vector<8x32xf32>
    %196 = vector.broadcast %173 : vector<1x32xf32> to vector<8x32xf32>
    %197 = arith.addf %195, %196 : vector<8x32xf32>
    %198 = math.tanh %197 : vector<8x32xf32>
    %199 = vector.shape_cast %198 : vector<8x32xf32> to vector<1x8x32xf32>
    %c0_84 = arith.constant 0 : index
    %c0_85 = arith.constant 0 : index
    %c0_86 = arith.constant 0 : index
    %200 = vector.load %arg26[%c0_84, %c0_85, %c0_86] : memref<1x8x32xf32, #tpu.memory_space<vmem>>, vector<1x8x32xf32>
    tpu.vector_store %arg26[%c0_84, %c0_85, %c0_86], %199 {strides = array<i32>} : memref<1x8x32xf32, #tpu.memory_space<vmem>>, vector<1x8x32xf32>,
    %201 = vector.shape_cast %170 : vector<8x32xf32> to vector<1x8x32xf32>
    %202 = vector.extract_strided_slice %201 {offsets = [0, 0, 0], sizes = [1, 1, 32], strides = [1, 1, 1]} : vector<1x8x32xf32> to vector<1x1x32xf32>
    %203 = vector.shape_cast %202 : vector<1x1x32xf32> to vector<1x32xf32>
    %204 = arith.truncf %203 : vector<1x32xf32> to vector<1x32xbf16>
    %c0_87 = arith.constant 0 : index
    %c0_88 = arith.constant 0 : index
    %205 = vector.load %arg21[%c0_87, %c0_88] : memref<1x128xf32, #tpu.memory_space<vmem>>, vector<1x128xf32>
    %c0_89 = arith.constant 0 : index
    %c0_90 = arith.constant 0 : index
    %206 = vector.load %arg23[%c0_89, %c0_90] : memref<1x32xf32, #tpu.memory_space<vmem>>, vector<1x32xf32>
    %cst_91 = arith.constant 0.000000e+00 : f32
    %207 = vector.broadcast %cst_91 : f32 to vector<1x32xf32>
    %c0_92 = arith.constant 0 : index
    %c0_93 = arith.constant 0 : index
    %208 = vector.load %arg20[%c0_92, %c0_93] : memref<32x128xbf16, #tpu.memory_space<vmem>>, vector<32x128xbf16>
    %cst_94 = arith.constant dense<0.000000e+00> : vector<1x128xf32>
    %209 = tpu.matmul %204, %208, %cst_94 {dimension_numbers = #tpu.dot_dimension_numbers<[1], [0], [0], [1], [0, 0, 1, 1], [], []>} : vector<1x32xbf16>, vector<32x128xbf16>, vector<1x128xf32> -> vector<1x128xf32>
    %210 = arith.addf %209, %205 : vector<1x128xf32>
    %cst_95 = arith.constant 5.000000e-01 : f32
    %211 = vector.broadcast %cst_95 : f32 to vector<1x128xf32>
    %212 = arith.mulf %211, %210 : vector<1x128xf32>
    %cst_96 = arith.constant 4.471500e-02 : f32
    %213 = vector.broadcast %cst_96 : f32 to vector<1x128xf32>
    %214 = arith.mulf %213, %210 : vector<1x128xf32>
    %215 = arith.mulf %214, %210 : vector<1x128xf32>
    %216 = arith.mulf %215, %210 : vector<1x128xf32>
    %217 = arith.addf %210, %216 : vector<1x128xf32>
    %cst_97 = arith.constant 0.797884583 : f32
    %218 = vector.broadcast %cst_97 : f32 to vector<1x128xf32>
    %219 = arith.mulf %218, %217 : vector<1x128xf32>
    %220 = math.tanh %219 : vector<1x128xf32>
    %cst_98 = arith.constant 1.000000e+00 : f32
    %221 = vector.broadcast %cst_98 : f32 to vector<1x128xf32>
    %222 = arith.addf %221, %220 : vector<1x128xf32>
    %223 = arith.mulf %212, %222 : vector<1x128xf32>
    %224 = arith.truncf %223 : vector<1x128xf32> to vector<1x128xbf16>
    %c0_99 = arith.constant 0 : index
    %c0_100 = arith.constant 0 : index
    %225 = vector.load %arg22[%c0_99, %c0_100] : memref<128x32xbf16, #tpu.memory_space<vmem>>, vector<128x32xbf16>
    %cst_101 = arith.constant dense<0.000000e+00> : vector<1x32xf32>
    %226 = tpu.matmul %224, %225, %cst_101 {dimension_numbers = #tpu.dot_dimension_numbers<[1], [0], [0], [1], [0, 0, 1, 1], [], []>} : vector<1x128xbf16>, vector<128x32xbf16>, vector<1x32xf32> -> vector<1x32xf32>
    %227 = arith.addf %207, %226 : vector<1x32xf32>
    %228 = arith.addf %227, %206 : vector<1x32xf32>
    %229 = arith.addf %228, %203 : vector<1x32xf32>
    %230 = arith.truncf %229 : vector<1x32xf32> to vector<1x32xbf16>
    %c0_102 = arith.constant 0 : index
    %c0_103 = arith.constant 0 : index
    %231 = vector.load %arg24[%c0_102, %c0_103] : memref<32x128xbf16, #tpu.memory_space<vmem>>, vector<32x128xbf16>
    %cst_104 = arith.constant dense<0.000000e+00> : vector<1x128xf32>
    %232 = tpu.matmul %230, %231, %cst_104 {dimension_numbers = #tpu.dot_dimension_numbers<[1], [0], [0], [1], [0, 0, 1, 1], [], []>} : vector<1x32xbf16>, vector<32x128xbf16>, vector<1x128xf32> -> vector<1x128xf32>
    %c0_105 = arith.constant 0 : index
    %c0_106 = arith.constant 0 : index
    %233 = vector.load %arg25[%c0_105, %c0_106] : memref<1x128xf32, #tpu.memory_space<vmem>>, vector<1x128xf32>
    %234 = arith.addf %232, %233 : vector<1x128xf32>
    %235 = vector.shape_cast %234 : vector<1x128xf32> to vector<1x1x128xf32>
    %c0_107 = arith.constant 0 : index
    %c0_108 = arith.constant 0 : index
    %c0_109 = arith.constant 0 : index
    %236 = vector.load %arg27[%c0_107, %c0_108, %c0_109] : memref<1x1x128xf32, #tpu.memory_space<vmem>>, vector<1x1x128xf32>
    tpu.vector_store %arg27[%c0_107, %c0_108, %c0_109], %235 {strides = array<i32>} : memref<1x1x128xf32, #tpu.memory_space<vmem>>, vector<1x1x128xf32>,
    return
  }
  func.func @transform_0(%arg0: i32) -> (i32, i32, i32) {
    %c0_i32 = arith.constant 0 : i32
    %c0_i32_0 = arith.constant 0 : i32
    %c0_i32_1 = arith.constant 0 : i32
    return %arg0, %c0_i32, %c0_i32_0 : i32, i32, i32
  }
  func.func @transform_1(%arg0: i32) -> (i32, i32) {
    %c0_i32 = arith.constant 0 : i32
    %c0_i32_0 = arith.constant 0 : i32
    %c0_i32_1 = arith.constant 0 : i32
    return %c0_i32, %c0_i32_0 : i32, i32
  }
  func.func @transform_2(%arg0: i32) -> (i32, i32) {
    %c0_i32 = arith.constant 0 : i32
    %c0_i32_0 = arith.constant 0 : i32
    %c0_i32_1 = arith.constant 0 : i32
    return %c0_i32, %c0_i32_0 : i32, i32
  }
  func.func @transform_3(%arg0: i32) -> (i32, i32) {
    %c0_i32 = arith.constant 0 : i32
    %c0_i32_0 = arith.constant 0 : i32
    %c0_i32_1 = arith.constant 0 : i32
    return %c0_i32, %c0_i32_0 : i32, i32
  }
  func.func @transform_4(%arg0: i32) -> (i32, i32) {
    %c0_i32 = arith.constant 0 : i32
    %c0_i32_0 = arith.constant 0 : i32
    %c0_i32_1 = arith.constant 0 : i32
    return %c0_i32, %c0_i32_0 : i32, i32
  }
  func.func @transform_5(%arg0: i32) -> (i32, i32) {
    %c0_i32 = arith.constant 0 : i32
    %c0_i32_0 = arith.constant 0 : i32
    %c0_i32_1 = arith.constant 0 : i32
    return %c0_i32, %c0_i32_0 : i32, i32
  }
  func.func @transform_6(%arg0: i32) -> (i32, i32) {
    %c0_i32 = arith.constant 0 : i32
    %c0_i32_0 = arith.constant 0 : i32
    %c0_i32_1 = arith.constant 0 : i32
    return %c0_i32, %c0_i32_0 : i32, i32
  }
  func.func @transform_7(%arg0: i32) -> (i32, i32) {
    %c0_i32 = arith.constant 0 : i32
    %c0_i32_0 = arith.constant 0 : i32
    %c0_i32_1 = arith.constant 0 : i32
    return %c0_i32, %c0_i32_0 : i32, i32
  }
  func.func @transform_8(%arg0: i32) -> (i32, i32) {
    %c0_i32 = arith.constant 0 : i32
    %c0_i32_0 = arith.constant 0 : i32
    %c0_i32_1 = arith.constant 0 : i32
    return %c0_i32, %c0_i32_0 : i32, i32
  }
  func.func @transform_9(%arg0: i32) -> (i32, i32) {
    %c0_i32 = arith.constant 0 : i32
    %c0_i32_0 = arith.constant 0 : i32
    %c0_i32_1 = arith.constant 0 : i32
    return %c0_i32, %c0_i32_0 : i32, i32
  }
  func.func @transform_10(%arg0: i32) -> (i32, i32) {
    %c0_i32 = arith.constant 0 : i32
    %c0_i32_0 = arith.constant 0 : i32
    %c0_i32_1 = arith.constant 0 : i32
    return %c0_i32, %c0_i32_0 : i32, i32
  }
  func.func @transform_11(%arg0: i32) -> (i32, i32) {
    %c0_i32 = arith.constant 0 : i32
    %c0_i32_0 = arith.constant 0 : i32
    %c0_i32_1 = arith.constant 0 : i32
    return %c0_i32, %c0_i32_0 : i32, i32
  }
  func.func @transform_12(%arg0: i32) -> (i32, i32) {
    %c0_i32 = arith.constant 0 : i32
    %c0_i32_0 = arith.constant 0 : i32
    %c0_i32_1 = arith.constant 0 : i32
    return %c0_i32, %c0_i32_0 : i32, i32
  }
  func.func @transform_13(%arg0: i32) -> (i32, i32) {
    %c0_i32 = arith.constant 0 : i32
    %c0_i32_0 = arith.constant 0 : i32
    %c0_i32_1 = arith.constant 0 : i32
    return %c0_i32, %c0_i32_0 : i32, i32
  }
  func.func @transform_14(%arg0: i32) -> (i32, i32) {
    %c0_i32 = arith.constant 0 : i32
    %c0_i32_0 = arith.constant 0 : i32
    %c0_i32_1 = arith.constant 0 : i32
    return %c0_i32, %c0_i32_0 : i32, i32
  }
  func.func @transform_15(%arg0: i32) -> (i32, i32) {
    %c0_i32 = arith.constant 0 : i32
    %c0_i32_0 = arith.constant 0 : i32
    %c0_i32_1 = arith.constant 0 : i32
    return %c0_i32, %c0_i32_0 : i32, i32
  }
  func.func @transform_16(%arg0: i32) -> (i32, i32) {
    %c0_i32 = arith.constant 0 : i32
    %c0_i32_0 = arith.constant 0 : i32
    %c0_i32_1 = arith.constant 0 : i32
    return %c0_i32, %c0_i32_0 : i32, i32
  }
  func.func @transform_17(%arg0: i32) -> (i32, i32) {
    %c0_i32 = arith.constant 0 : i32
    %c0_i32_0 = arith.constant 0 : i32
    %c0_i32_1 = arith.constant 0 : i32
    return %c0_i32, %c0_i32_0 : i32, i32
  }
  func.func @transform_18(%arg0: i32) -> (i32, i32) {
    %c0_i32 = arith.constant 0 : i32
    %c0_i32_0 = arith.constant 0 : i32
    %c0_i32_1 = arith.constant 0 : i32
    return %c0_i32, %c0_i32_0 : i32, i32
  }
  func.func @transform_19(%arg0: i32) -> (i32, i32) {
    %c0_i32 = arith.constant 0 : i32
    %c0_i32_0 = arith.constant 0 : i32
    %c0_i32_1 = arith.constant 0 : i32
    return %c0_i32, %c0_i32_0 : i32, i32
  }
  func.func @transform_20(%arg0: i32) -> (i32, i32) {
    %c0_i32 = arith.constant 0 : i32
    %c0_i32_0 = arith.constant 0 : i32
    %c0_i32_1 = arith.constant 0 : i32
    return %c0_i32, %c0_i32_0 : i32, i32
  }
  func.func @transform_21(%arg0: i32) -> (i32, i32) {
    %c0_i32 = arith.constant 0 : i32
    %c0_i32_0 = arith.constant 0 : i32
    %c0_i32_1 = arith.constant 0 : i32
    return %c0_i32, %c0_i32_0 : i32, i32
  }
  func.func @transform_22(%arg0: i32) -> (i32, i32) {
    %c0_i32 = arith.constant 0 : i32
    %c0_i32_0 = arith.constant 0 : i32
    %c0_i32_1 = arith.constant 0 : i32
    return %c0_i32, %c0_i32_0 : i32, i32
  }
  func.func @transform_23(%arg0: i32) -> (i32, i32) {
    %c0_i32 = arith.constant 0 : i32
    %c0_i32_0 = arith.constant 0 : i32
    %c0_i32_1 = arith.constant 0 : i32
    return %c0_i32, %c0_i32_0 : i32, i32
  }
  func.func @transform_24(%arg0: i32) -> (i32, i32) {
    %c0_i32 = arith.constant 0 : i32
    %c0_i32_0 = arith.constant 0 : i32
    %c0_i32_1 = arith.constant 0 : i32
    return %c0_i32, %c0_i32_0 : i32, i32
  }
  func.func @transform_25(%arg0: i32) -> (i32, i32, i32) {
    %c0_i32 = arith.constant 0 : i32
    %c0_i32_0 = arith.constant 0 : i32
    %c0_i32_1 = arith.constant 0 : i32
    return %arg0, %c0_i32, %c0_i32_0 : i32, i32, i32
  }
  func.func @transform_26(%arg0: i32) -> (i32, i32, i32) {
    %c0_i32 = arith.constant 0 : i32
    %c0_i32_0 = arith.constant 0 : i32
    %c0_i32_1 = arith.constant 0 : i32
    return %arg0, %c0_i32, %c0_i32_0 : i32, i32, i32
  }
}

module attributes {stable_mosaic.version = 11 : i64} {
  func.func @fused_kernel(%arg0: i32, %arg1: memref<1x8x32xf32, #tpu.memory_space<vmem>>, %arg2: memref<1x32xf32, #tpu.memory_space<vmem>>, %arg3: memref<1x32xf32, #tpu.memory_space<vmem>>, %arg4: memref<32x96xbf16, #tpu.memory_space<vmem>>, %arg5: memref<1x96xf32, #tpu.memory_space<vmem>>, %arg6: memref<32x32xbf16, #tpu.memory_space<vmem>>, %arg7: memref<1x32xf32, #tpu.memory_space<vmem>>, %arg8: memref<1x32xf32, #tpu.memory_space<vmem>>, %arg9: memref<1x32xf32, #tpu.memory_space<vmem>>, %arg10: memref<32x128xbf16, #tpu.memory_space<vmem>>, %arg11: memref<1x128xf32, #tpu.memory_space<vmem>>, %arg12: memref<128x32xbf16, #tpu.memory_space<vmem>>, %arg13: memref<1x32xf32, #tpu.memory_space<vmem>>, %arg14: memref<1x32xf32, #tpu.memory_space<vmem>>, %arg15: memref<1x32xf32, #tpu.memory_space<vmem>>, %arg16: memref<32x128xbf16, #tpu.memory_space<vmem>>, %arg17: memref<1x128xf32, #tpu.memory_space<vmem>>, %arg18: memref<128x32xbf16, #tpu.memory_space<vmem>>, %arg19: memref<1x32xf32, #tpu.memory_space<vmem>>, %arg20: memref<32x128xbf16, #tpu.memory_space<vmem>>, %arg21: memref<1x128xf32, #tpu.memory_space<vmem>>, %arg22: memref<128x32xbf16, #tpu.memory_space<vmem>>, %arg23: memref<1x32xf32, #tpu.memory_space<vmem>>, %arg24: memref<32x128xbf16, #tpu.memory_space<vmem>>, %arg25: memref<1x128xf32, #tpu.memory_space<vmem>>, %arg26: memref<1x8x32xf32, #tpu.memory_space<vmem>>, %arg27: memref<1x1x128xf32, #tpu.memory_space<vmem>>) attributes {dimension_semantics = [#tpu.dimension_semantics<parallel>], iteration_bounds = array<i64: 2>, scalar_prefetch = 0 : i64, scratch_operands = 0 : i64, tpu.core_type = #tpu.core_type<tc>, window_params = [{transform_indices = @transform_0, window_bounds = array<i64: 1, 8, 32>}, {pipeline_mode = #tpu.pipeline_mode<synchronous>, transform_indices = @transform_1, window_bounds = array<i64: 1, 32>}, {pipeline_mode = #tpu.pipeline_mode<synchronous>, transform_indices = @transform_2, window_bounds = array<i64: 1, 32>}, {pipeline_mode = #tpu.pipeline_mode<synchronous>, transform_indices = @transform_3, window_bounds = array<i64: 32, 96>}, {pipeline_mode = #tpu.pipeline_mode<synchronous>, transform_indices = @transform_4, window_bounds = array<i64: 1, 96>}, {pipeline_mode = #tpu.pipeline_mode<synchronous>, transform_indices = @transform_5, window_bounds = array<i64: 32, 32>}, {pipeline_mode = #tpu.pipeline_mode<synchronous>, transform_indices = @transform_6, window_bounds = array<i64: 1, 32>}, {pipeline_mode = #tpu.pipeline_mode<synchronous>, transform_indices = @transform_7, window_bounds = array<i64: 1, 32>}, {pipeline_mode = #tpu.pipeline_mode<synchronous>, transform_indices = @transform_8, window_bounds = array<i64: 1, 32>}, {pipeline_mode = #tpu.pipeline_mode<synchronous>, transform_indices = @transform_9, window_bounds = array<i64: 32, 128>}, {pipeline_mode = #tpu.pipeline_mode<synchronous>, transform_indices = @transform_10, window_bounds = array<i64: 1, 128>}, {pipeline_mode = #tpu.pipeline_mode<synchronous>, transform_indices = @transform_11, window_bounds = array<i64: 128, 32>}, {pipeline_mode = #tpu.pipeline_mode<synchronous>, transform_indices = @transform_12, window_bounds = array<i64: 1, 32>}, {pipeline_mode = #tpu.pipeline_mode<synchronous>, transform_indices = @transform_13, window_bounds = array<i64: 1, 32>}, {pipeline_mode = #tpu.pipeline_mode<synchronous>, transform_indices = @transform_14, window_bounds = array<i64: 1, 32>}, {pipeline_mode = #tpu.pipeline_mode<synchronous>, transform_indices = @transform_15, window_bounds = array<i64: 32, 128>}, {pipeline_mode = #tpu.pipeline_mode<synchronous>, transform_indices = @transform_16, window_bounds = array<i64: 1, 128>}, {pipeline_mode = #tpu.pipeline_mode<synchronous>, transform_indices = @transform_17, window_bounds = array<i64: 128, 32>}, {pipeline_mode = #tpu.pipeline_mode<synchronous>, transform_indices = @transform_18, window_bounds = array<i64: 1, 32>}, {pipeline_mode = #tpu.pipeline_mode<synchronous>, transform_indices = @transform_19, window_bounds = array<i64: 32, 128>}, {pipeline_mode = #tpu.pipeline_mode<synchronous>, transform_indices = @transform_20, window_bounds = array<i64: 1, 128>}, {pipeline_mode = #tpu.pipeline_mode<synchronous>, transform_indices = @transform_21, window_bounds = array<i64: 128, 32>}, {pipeline_mode = #tpu.pipeline_mode<synchronous>, transform_indices = @transform_22, window_bounds = array<i64: 1, 32>}, {pipeline_mode = #tpu.pipeline_mode<synchronous>, transform_indices = @transform_23, window_bounds = array<i64: 32, 128>}, {pipeline_mode = #tpu.pipeline_mode<synchronous>, transform_indices = @transform_24, window_bounds = array<i64: 1, 128>}, {transform_indices = @transform_25, window_bounds = array<i64: 1, 8, 32>}, {transform_indices = @transform_26, window_bounds = array<i64: 1, 1, 128>}]} {
    %c0 = arith.constant 0 : index
    %c0_0 = arith.constant 0 : index
    %c0_1 = arith.constant 0 : index
    %0 = vector.load %arg1[%c0, %c0_0, %c0_1] : memref<1x8x32xf32, #tpu.memory_space<vmem>>, vector<1x8x32xf32>
    %1 = vector.shape_cast %0 : vector<1x8x32xf32> to vector<8x32xf32>
    %c0_2 = arith.constant 0 : index
    %c0_3 = arith.constant 0 : index
    %2 = vector.load %arg2[%c0_2, %c0_3] : memref<1x32xf32, #tpu.memory_space<vmem>>, vector<1x32xf32>
    %c0_4 = arith.constant 0 : index
    %c0_5 = arith.constant 0 : index
    %3 = vector.load %arg3[%c0_4, %c0_5] : memref<1x32xf32, #tpu.memory_space<vmem>>, vector<1x32xf32>
    %cst = arith.constant dense<0.000000e+00> : vector<8xf32>
    %4 = vector.multi_reduction <add>, %1, %cst [1] : vector<8x32xf32> to vector<8xf32>
    %5 = vector.shape_cast %4 : vector<8xf32> to vector<8x1xf32>
    %cst_6 = arith.constant 3.200000e+01 : f32
    %6 = vector.broadcast %cst_6 : f32 to vector<8x1xf32>
    %7 = arith.divf %5, %6 : vector<8x1xf32>
    %8 = vector.broadcast %7 : vector<8x1xf32> to vector<8x32xf32>
    %9 = arith.subf %1, %8 : vector<8x32xf32>
    %10 = arith.mulf %9, %9 : vector<8x32xf32>
    %cst_7 = arith.constant dense<0.000000e+00> : vector<8xf32>
    %11 = vector.multi_reduction <add>, %10, %cst_7 [1] : vector<8x32xf32> to vector<8xf32>
    %12 = vector.shape_cast %11 : vector<8xf32> to vector<8x1xf32>
    %cst_8 = arith.constant 3.200000e+01 : f32
    %13 = vector.broadcast %cst_8 : f32 to vector<8x1xf32>
    %14 = arith.divf %12, %13 : vector<8x1xf32>
    %cst_9 = arith.constant 9.99999997E-7 : f32
    %15 = vector.broadcast %cst_9 : f32 to vector<8x1xf32>
    %16 = arith.addf %14, %15 : vector<8x1xf32>
    %17 = math.rsqrt %16 : vector<8x1xf32>
    %18 = vector.broadcast %17 : vector<8x1xf32> to vector<8x32xf32>
    %19 = arith.mulf %9, %18 : vector<8x32xf32>
    %20 = vector.broadcast %2 : vector<1x32xf32> to vector<8x32xf32>
    %21 = arith.mulf %19, %20 : vector<8x32xf32>
    %22 = vector.broadcast %3 : vector<1x32xf32> to vector<8x32xf32>
    %23 = arith.addf %21, %22 : vector<8x32xf32>
    %24 = arith.truncf %23 : vector<8x32xf32> to vector<8x32xbf16>
    %c0_10 = arith.constant 0 : index
    %c0_11 = arith.constant 0 : index
    %25 = vector.load %arg5[%c0_10, %c0_11] : memref<1x96xf32, #tpu.memory_space<vmem>>, vector<1x96xf32>
    %c0_12 = arith.constant 0 : index
    %c0_13 = arith.constant 0 : index
    %26 = vector.load %arg4[%c0_12, %c0_13] : memref<32x96xbf16, #tpu.memory_space<vmem>>, vector<32x32xbf16>
    %cst_14 = arith.constant dense<0.000000e+00> : vector<8x32xf32>
    %27 = tpu.matmul %24, %26, %cst_14 {dimension_numbers = #tpu.dot_dimension_numbers<[1], [0], [0], [1], [0, 0, 1, 1], [], []>} : vector<8x32xbf16>, vector<32x32xbf16>, vector<8x32xf32> -> vector<8x32xf32>
    %28 = vector.extract_strided_slice %25 {offsets = [0, 0], sizes = [1, 32], strides = [1, 1]} : vector<1x96xf32> to vector<1x32xf32>
    %29 = vector.broadcast %28 : vector<1x32xf32> to vector<8x32xf32>
    %30 = arith.addf %27, %29 : vector<8x32xf32>
    %31 = vector.shape_cast %30 : vector<8x32xf32> to vector<1x8x32xf32>
    %cst_15 = arith.constant 2.500000e-01 : f32
    %32 = vector.broadcast %cst_15 : f32 to vector<1x8x32xf32>
    %33 = arith.mulf %31, %32 : vector<1x8x32xf32>
    %c0_16 = arith.constant 0 : index
    %c32 = arith.constant 32 : index
    %34 = vector.load %arg4[%c0_16, %c32] : memref<32x96xbf16, #tpu.memory_space<vmem>>, vector<32x32xbf16>
    %cst_17 = arith.constant dense<0.000000e+00> : vector<8x32xf32>
    %35 = tpu.matmul %24, %34, %cst_17 {dimension_numbers = #tpu.dot_dimension_numbers<[1], [0], [0], [1], [0, 0, 1, 1], [], []>} : vector<8x32xbf16>, vector<32x32xbf16>, vector<8x32xf32> -> vector<8x32xf32>
    %36 = vector.extract_strided_slice %25 {offsets = [0, 32], sizes = [1, 32], strides = [1, 1]} : vector<1x96xf32> to vector<1x32xf32>
    %37 = vector.broadcast %36 : vector<1x32xf32> to vector<8x32xf32>
    %38 = arith.addf %35, %37 : vector<8x32xf32>
    %39 = vector.shape_cast %38 : vector<8x32xf32> to vector<1x8x32xf32>
    %c0_18 = arith.constant 0 : index
    %c64 = arith.constant 64 : index
    %40 = vector.load %arg4[%c0_18, %c64] : memref<32x96xbf16, #tpu.memory_space<vmem>>, vector<32x32xbf16>
    %cst_19 = arith.constant dense<0.000000e+00> : vector<8x32xf32>
    %41 = tpu.matmul %24, %40, %cst_19 {dimension_numbers = #tpu.dot_dimension_numbers<[1], [0], [0], [1], [0, 0, 1, 1], [], []>} : vector<8x32xbf16>, vector<32x32xbf16>, vector<8x32xf32> -> vector<8x32xf32>
    %42 = vector.extract_strided_slice %25 {offsets = [0, 64], sizes = [1, 32], strides = [1, 1]} : vector<1x96xf32> to vector<1x32xf32>
    %43 = vector.broadcast %42 : vector<1x32xf32> to vector<8x32xf32>
    %44 = arith.addf %41, %43 : vector<8x32xf32>
    %45 = vector.shape_cast %44 : vector<8x32xf32> to vector<1x8x32xf32>
    %cst_20 = arith.constant 0.000000e+00 : f32
    %46 = vector.broadcast %cst_20 : f32 to vector<8x32xf32>
    %47 = vector.extract_strided_slice %33 {offsets = [0, 0, 0], sizes = [1, 8, 16], strides = [1, 1, 1]} : vector<1x8x32xf32> to vector<1x8x16xf32>
    %48 = arith.truncf %47 : vector<1x8x16xf32> to vector<1x8x16xbf16>
    %49 = vector.extract_strided_slice %39 {offsets = [0, 0, 0], sizes = [1, 8, 16], strides = [1, 1, 1]} : vector<1x8x32xf32> to vector<1x8x16xf32>
    %50 = arith.truncf %49 : vector<1x8x16xf32> to vector<1x8x16xbf16>
    %51 = vector.extract_strided_slice %45 {offsets = [0, 0, 0], sizes = [1, 8, 16], strides = [1, 1, 1]} : vector<1x8x32xf32> to vector<1x8x16xf32>
    %52 = arith.truncf %51 : vector<1x8x16xf32> to vector<1x8x16xbf16>
    "tpu.trace_start"() <{level = 10 : i32, message = "bqd,bkd->bqk"}> : () -> ()
    %cst_21 = arith.constant dense<0.000000e+00> : vector<1x8x8xf32>
    %53 = tpu.matmul %48, %50, %cst_21 {dimension_numbers = #tpu.dot_dimension_numbers<[2], [2], [1], [1], [0, 0, 0, 1, 1, 1], [0], [0]>} : vector<1x8x16xbf16>, vector<1x8x16xbf16>, vector<1x8x8xf32> -> vector<1x8x8xf32>
    "tpu.trace_stop"() : () -> ()
    %cst_22 = arith.constant dense<0xFF800000> : vector<1x8xf32>
    %54 = vector.multi_reduction <maximumf>, %53, %cst_22 [2] : vector<1x8x8xf32> to vector<1x8xf32>
    %55 = vector.shape_cast %54 : vector<1x8xf32> to vector<1x8x1xf32>
    %56 = vector.broadcast %55 : vector<1x8x1xf32> to vector<1x8x8xf32>
    %57 = arith.subf %53, %56 : vector<1x8x8xf32>
    %58 = math.exp %57 : vector<1x8x8xf32>
    %cst_23 = arith.constant dense<0.000000e+00> : vector<1x8xf32>
    %59 = vector.multi_reduction <add>, %58, %cst_23 [2] : vector<1x8x8xf32> to vector<1x8xf32>
    %60 = vector.shape_cast %59 : vector<1x8xf32> to vector<1x8x1xf32>
    %61 = tpu.reciprocal %60 {approx = true} : vector<1x8x1xf32> -> vector<1x8x1xf32>
    %62 = vector.broadcast %61 : vector<1x8x1xf32> to vector<1x8x8xf32>
    %63 = arith.mulf %58, %62 : vector<1x8x8xf32>
    %64 = arith.truncf %63 : vector<1x8x8xf32> to vector<1x8x8xbf16>
    "tpu.trace_start"() <{level = 10 : i32, message = "bqk,bkd->bqd"}> : () -> ()
    %cst_24 = arith.constant dense<0.000000e+00> : vector<1x8x16xf32>
    %65 = tpu.matmul %64, %52, %cst_24 {dimension_numbers = #tpu.dot_dimension_numbers<[2], [1], [1], [2], [0, 0, 0, 1, 1, 2], [0], [0]>} : vector<1x8x8xbf16>, vector<1x8x16xbf16>, vector<1x8x16xf32> -> vector<1x8x16xf32>
    "tpu.trace_stop"() : () -> ()
    %66 = vector.shape_cast %65 : vector<1x8x16xf32> to vector<8x16xf32>
    %67 = arith.truncf %66 : vector<8x16xf32> to vector<8x16xbf16>
    %c0_25 = arith.constant 0 : index
    %c0_26 = arith.constant 0 : index
    %68 = vector.load %arg6[%c0_25, %c0_26] : memref<32x32xbf16, #tpu.memory_space<vmem>>, vector<16x32xbf16>
    %cst_27 = arith.constant dense<0.000000e+00> : vector<8x32xf32>
    %69 = tpu.matmul %67, %68, %cst_27 {dimension_numbers = #tpu.dot_dimension_numbers<[1], [0], [0], [1], [0, 0, 1, 1], [], []>} : vector<8x16xbf16>, vector<16x32xbf16>, vector<8x32xf32> -> vector<8x32xf32>
    %70 = arith.addf %46, %69 : vector<8x32xf32>
    %71 = vector.extract_strided_slice %33 {offsets = [0, 0, 16], sizes = [1, 8, 16], strides = [1, 1, 1]} : vector<1x8x32xf32> to vector<1x8x16xf32>
    %72 = arith.truncf %71 : vector<1x8x16xf32> to vector<1x8x16xbf16>
    %73 = vector.extract_strided_slice %39 {offsets = [0, 0, 16], sizes = [1, 8, 16], strides = [1, 1, 1]} : vector<1x8x32xf32> to vector<1x8x16xf32>
    %74 = arith.truncf %73 : vector<1x8x16xf32> to vector<1x8x16xbf16>
    %75 = vector.extract_strided_slice %45 {offsets = [0, 0, 16], sizes = [1, 8, 16], strides = [1, 1, 1]} : vector<1x8x32xf32> to vector<1x8x16xf32>
    %76 = arith.truncf %75 : vector<1x8x16xf32> to vector<1x8x16xbf16>
    "tpu.trace_start"() <{level = 10 : i32, message = "bqd,bkd->bqk"}> : () -> ()
    %cst_28 = arith.constant dense<0.000000e+00> : vector<1x8x8xf32>
    %77 = tpu.matmul %72, %74, %cst_28 {dimension_numbers = #tpu.dot_dimension_numbers<[2], [2], [1], [1], [0, 0, 0, 1, 1, 1], [0], [0]>} : vector<1x8x16xbf16>, vector<1x8x16xbf16>, vector<1x8x8xf32> -> vector<1x8x8xf32>
    "tpu.trace_stop"() : () -> ()
    %cst_29 = arith.constant dense<0xFF800000> : vector<1x8xf32>
    %78 = vector.multi_reduction <maximumf>, %77, %cst_29 [2] : vector<1x8x8xf32> to vector<1x8xf32>
    %79 = vector.shape_cast %78 : vector<1x8xf32> to vector<1x8x1xf32>
    %80 = vector.broadcast %79 : vector<1x8x1xf32> to vector<1x8x8xf32>
    %81 = arith.subf %77, %80 : vector<1x8x8xf32>
    %82 = math.exp %81 : vector<1x8x8xf32>
    %cst_30 = arith.constant dense<0.000000e+00> : vector<1x8xf32>
    %83 = vector.multi_reduction <add>, %82, %cst_30 [2] : vector<1x8x8xf32> to vector<1x8xf32>
    %84 = vector.shape_cast %83 : vector<1x8xf32> to vector<1x8x1xf32>
    %85 = tpu.reciprocal %84 {approx = true} : vector<1x8x1xf32> -> vector<1x8x1xf32>
    %86 = vector.broadcast %85 : vector<1x8x1xf32> to vector<1x8x8xf32>
    %87 = arith.mulf %82, %86 : vector<1x8x8xf32>
    %88 = arith.truncf %87 : vector<1x8x8xf32> to vector<1x8x8xbf16>
    "tpu.trace_start"() <{level = 10 : i32, message = "bqk,bkd->bqd"}> : () -> ()
    %cst_31 = arith.constant dense<0.000000e+00> : vector<1x8x16xf32>
    %89 = tpu.matmul %88, %76, %cst_31 {dimension_numbers = #tpu.dot_dimension_numbers<[2], [1], [1], [2], [0, 0, 0, 1, 1, 2], [0], [0]>} : vector<1x8x8xbf16>, vector<1x8x16xbf16>, vector<1x8x16xf32> -> vector<1x8x16xf32>
    "tpu.trace_stop"() : () -> ()
    %90 = vector.shape_cast %89 : vector<1x8x16xf32> to vector<8x16xf32>
    %91 = arith.truncf %90 : vector<8x16xf32> to vector<8x16xbf16>
    %c16 = arith.constant 16 : index
    %c0_32 = arith.constant 0 : index
    %92 = vector.load %arg6[%c16, %c0_32] : memref<32x32xbf16, #tpu.memory_space<vmem>>, vector<16x32xbf16>
    %cst_33 = arith.constant dense<0.000000e+00> : vector<8x32xf32>
    %93 = tpu.matmul %91, %92, %cst_33 {dimension_numbers = #tpu.dot_dimension_numbers<[1], [0], [0], [1], [0, 0, 1, 1], [], []>} : vector<8x16xbf16>, vector<16x32xbf16>, vector<8x32xf32> -> vector<8x32xf32>
    %94 = arith.addf %70, %93 : vector<8x32xf32>
    %95 = arith.addf %1, %94 : vector<8x32xf32>
    %c0_34 = arith.constant 0 : index
    %c0_35 = arith.constant 0 : index
    %96 = vector.load %arg7[%c0_34, %c0_35] : memref<1x32xf32, #tpu.memory_space<vmem>>, vector<1x32xf32>
    %97 = vector.broadcast %96 : vector<1x32xf32> to vector<8x32xf32>
    %98 = arith.addf %95, %97 : vector<8x32xf32>
    %c0_36 = arith.constant 0 : index
    %c0_37 = arith.constant 0 : index
    %99 = vector.load %arg8[%c0_36, %c0_37] : memref<1x32xf32, #tpu.memory_space<vmem>>, vector<1x32xf32>
    %c0_38 = arith.constant 0 : index
    %c0_39 = arith.constant 0 : index
    %100 = vector.load %arg9[%c0_38, %c0_39] : memref<1x32xf32, #tpu.memory_space<vmem>>, vector<1x32xf32>
    %cst_40 = arith.constant dense<0.000000e+00> : vector<8xf32>
    %101 = vector.multi_reduction <add>, %98, %cst_40 [1] : vector<8x32xf32> to vector<8xf32>
    %102 = vector.shape_cast %101 : vector<8xf32> to vector<8x1xf32>
    %cst_41 = arith.constant 3.200000e+01 : f32
    %103 = vector.broadcast %cst_41 : f32 to vector<8x1xf32>
    %104 = arith.divf %102, %103 : vector<8x1xf32>
    %105 = vector.broadcast %104 : vector<8x1xf32> to vector<8x32xf32>
    %106 = arith.subf %98, %105 : vector<8x32xf32>
    %107 = arith.mulf %106, %106 : vector<8x32xf32>
    %cst_42 = arith.constant dense<0.000000e+00> : vector<8xf32>
    %108 = vector.multi_reduction <add>, %107, %cst_42 [1] : vector<8x32xf32> to vector<8xf32>
    %109 = vector.shape_cast %108 : vector<8xf32> to vector<8x1xf32>
    %cst_43 = arith.constant 3.200000e+01 : f32
    %110 = vector.broadcast %cst_43 : f32 to vector<8x1xf32>
    %111 = arith.divf %109, %110 : vector<8x1xf32>
    %cst_44 = arith.constant 9.99999997E-7 : f32
    %112 = vector.broadcast %cst_44 : f32 to vector<8x1xf32>
    %113 = arith.addf %111, %112 : vector<8x1xf32>
    %114 = math.rsqrt %113 : vector<8x1xf32>
    %115 = vector.broadcast %114 : vector<8x1xf32> to vector<8x32xf32>
    %116 = arith.mulf %106, %115 : vector<8x32xf32>
    %117 = vector.broadcast %99 : vector<1x32xf32> to vector<8x32xf32>
    %118 = arith.mulf %116, %117 : vector<8x32xf32>
    %119 = vector.broadcast %100 : vector<1x32xf32> to vector<8x32xf32>
    %120 = arith.addf %118, %119 : vector<8x32xf32>
    %121 = arith.truncf %120 : vector<8x32xf32> to vector<8x32xbf16>
    %c0_45 = arith.constant 0 : index
    %c0_46 = arith.constant 0 : index
    %122 = vector.load %arg11[%c0_45, %c0_46] : memref<1x128xf32, #tpu.memory_space<vmem>>, vector<1x128xf32>
    %c0_47 = arith.constant 0 : index
    %c0_48 = arith.constant 0 : index
    %123 = vector.load %arg13[%c0_47, %c0_48] : memref<1x32xf32, #tpu.memory_space<vmem>>, vector<1x32xf32>
    %cst_49 = arith.constant 0.000000e+00 : f32
    %124 = vector.broadcast %cst_49 : f32 to vector<8x32xf32>
    %c0_50 = arith.constant 0 : index
    %c0_51 = arith.constant 0 : index
    %125 = vector.load %arg10[%c0_50, %c0_51] : memref<32x128xbf16, #tpu.memory_space<vmem>>, vector<32x128xbf16>
    %cst_52 = arith.constant dense<0.000000e+00> : vector<8x128xf32>
    %126 = tpu.matmul %121, %125, %cst_52 {dimension_numbers = #tpu.dot_dimension_numbers<[1], [0], [0], [1], [0, 0, 1, 1], [], []>} : vector<8x32xbf16>, vector<32x128xbf16>, vector<8x128xf32> -> vector<8x128xf32>
    %127 = vector.broadcast %122 : vector<1x128xf32> to vector<8x128xf32>
    %128 = arith.addf %126, %127 : vector<8x128xf32>
    %cst_53 = arith.constant 5.000000e-01 : f32
    %129 = vector.broadcast %cst_53 : f32 to vector<8x128xf32>
    %130 = arith.mulf %129, %128 : vector<8x128xf32>
    %cst_54 = arith.constant 4.471500e-02 : f32
    %131 = vector.broadcast %cst_54 : f32 to vector<8x128xf32>
    %132 = arith.mulf %131, %128 : vector<8x128xf32>
    %133 = arith.mulf %132, %128 : vector<8x128xf32>
    %134 = arith.mulf %133, %128 : vector<8x128xf32>
    %135 = arith.addf %128, %134 : vector<8x128xf32>
    %cst_55 = arith.constant 0.797884583 : f32
    %136 = vector.broadcast %cst_55 : f32 to vector<8x128xf32>
    %137 = arith.mulf %136, %135 : vector<8x128xf32>
    %138 = math.tanh %137 : vector<8x128xf32>
    %cst_56 = arith.constant 1.000000e+00 : f32
    %139 = vector.broadcast %cst_56 : f32 to vector<8x128xf32>
    %140 = arith.addf %139, %138 : vector<8x128xf32>
    %141 = arith.mulf %130, %140 : vector<8x128xf32>
    %142 = arith.truncf %141 : vector<8x128xf32> to vector<8x128xbf16>
    %c0_57 = arith.constant 0 : index
    %c0_58 = arith.constant 0 : index
    %143 = vector.load %arg12[%c0_57, %c0_58] : memref<128x32xbf16, #tpu.memory_space<vmem>>, vector<128x32xbf16>
    %cst_59 = arith.constant dense<0.000000e+00> : vector<8x32xf32>
    %144 = tpu.matmul %142, %143, %cst_59 {dimension_numbers = #tpu.dot_dimension_numbers<[1], [0], [0], [1], [0, 0, 1, 1], [], []>} : vector<8x128xbf16>, vector<128x32xbf16>, vector<8x32xf32> -> vector<8x32xf32>
    %145 = arith.addf %124, %144 : vector<8x32xf32>
    %146 = vector.broadcast %123 : vector<1x32xf32> to vector<8x32xf32>
    %147 = arith.addf %145, %146 : vector<8x32xf32>
    %148 = arith.addf %98, %147 : vector<8x32xf32>
    %c0_60 = arith.constant 0 : index
    %c0_61 = arith.constant 0 : index
    %149 = vector.load %arg14[%c0_60, %c0_61] : memref<1x32xf32, #tpu.memory_space<vmem>>, vector<1x32xf32>
    %c0_62 = arith.constant 0 : index
    %c0_63 = arith.constant 0 : index
    %150 = vector.load %arg15[%c0_62, %c0_63] : memref<1x32xf32, #tpu.memory_space<vmem>>, vector<1x32xf32>
    %cst_64 = arith.constant dense<0.000000e+00> : vector<8xf32>
    %151 = vector.multi_reduction <add>, %148, %cst_64 [1] : vector<8x32xf32> to vector<8xf32>
    %152 = vector.shape_cast %151 : vector<8xf32> to vector<8x1xf32>
    %cst_65 = arith.constant 3.200000e+01 : f32
    %153 = vector.broadcast %cst_65 : f32 to vector<8x1xf32>
    %154 = arith.divf %152, %153 : vector<8x1xf32>
    %155 = vector.broadcast %154 : vector<8x1xf32> to vector<8x32xf32>
    %156 = arith.subf %148, %155 : vector<8x32xf32>
    %157 = arith.mulf %156, %156 : vector<8x32xf32>
    %cst_66 = arith.constant dense<0.000000e+00> : vector<8xf32>
    %158 = vector.multi_reduction <add>, %157, %cst_66 [1] : vector<8x32xf32> to vector<8xf32>
    %159 = vector.shape_cast %158 : vector<8xf32> to vector<8x1xf32>
    %cst_67 = arith.constant 3.200000e+01 : f32
    %160 = vector.broadcast %cst_67 : f32 to vector<8x1xf32>
    %161 = arith.divf %159, %160 : vector<8x1xf32>
    %cst_68 = arith.constant 9.99999997E-7 : f32
    %162 = vector.broadcast %cst_68 : f32 to vector<8x1xf32>
    %163 = arith.addf %161, %162 : vector<8x1xf32>
    %164 = math.rsqrt %163 : vector<8x1xf32>
    %165 = vector.broadcast %164 : vector<8x1xf32> to vector<8x32xf32>
    %166 = arith.mulf %156, %165 : vector<8x32xf32>
    %167 = vector.broadcast %149 : vector<1x32xf32> to vector<8x32xf32>
    %168 = arith.mulf %166, %167 : vector<8x32xf32>
    %169 = vector.broadcast %150 : vector<1x32xf32> to vector<8x32xf32>
    %170 = arith.addf %168, %169 : vector<8x32xf32>
    %171 = arith.truncf %170 : vector<8x32xf32> to vector<8x32xbf16>
    %c0_69 = arith.constant 0 : index
    %c0_70 = arith.constant 0 : index
    %172 = vector.load %arg17[%c0_69, %c0_70] : memref<1x128xf32, #tpu.memory_space<vmem>>, vector<1x128xf32>
    %c0_71 = arith.constant 0 : index
    %c0_72 = arith.constant 0 : index
    %173 = vector.load %arg19[%c0_71, %c0_72] : memref<1x32xf32, #tpu.memory_space<vmem>>, vector<1x32xf32>
    %cst_73 = arith.constant 0.000000e+00 : f32
    %174 = vector.broadcast %cst_73 : f32 to vector<8x32xf32>
    %c0_74 = arith.constant 0 : index
    %c0_75 = arith.constant 0 : index
    %175 = vector.load %arg16[%c0_74, %c0_75] : memref<32x128xbf16, #tpu.memory_space<vmem>>, vector<32x128xbf16>
    %cst_76 = arith.constant dense<0.000000e+00> : vector<8x128xf32>
    %176 = tpu.matmul %171, %175, %cst_76 {dimension_numbers = #tpu.dot_dimension_numbers<[1], [0], [0], [1], [0, 0, 1, 1], [], []>} : vector<8x32xbf16>, vector<32x128xbf16>, vector<8x128xf32> -> vector<8x128xf32>
    %177 = vector.broadcast %172 : vector<1x128xf32> to vector<8x128xf32>
    %178 = arith.addf %176, %177 : vector<8x128xf32>
    %cst_77 = arith.constant 5.000000e-01 : f32
    %179 = vector.broadcast %cst_77 : f32 to vector<8x128xf32>
    %180 = arith.mulf %179, %178 : vector<8x128xf32>
    %cst_78 = arith.constant 4.471500e-02 : f32
    %181 = vector.broadcast %cst_78 : f32 to vector<8x128xf32>
    %182 = arith.mulf %181, %178 : vector<8x128xf32>
    %183 = arith.mulf %182, %178 : vector<8x128xf32>
    %184 = arith.mulf %183, %178 : vector<8x128xf32>
    %185 = arith.addf %178, %184 : vector<8x128xf32>
    %cst_79 = arith.constant 0.797884583 : f32
    %186 = vector.broadcast %cst_79 : f32 to vector<8x128xf32>
    %187 = arith.mulf %186, %185 : vector<8x128xf32>
    %188 = math.tanh %187 : vector<8x128xf32>
    %cst_80 = arith.constant 1.000000e+00 : f32
    %189 = vector.broadcast %cst_80 : f32 to vector<8x128xf32>
    %190 = arith.addf %189, %188 : vector<8x128xf32>
    %191 = arith.mulf %180, %190 : vector<8x128xf32>
    %192 = arith.truncf %191 : vector<8x128xf32> to vector<8x128xbf16>
    %c0_81 = arith.constant 0 : index
    %c0_82 = arith.constant 0 : index
    %193 = vector.load %arg18[%c0_81, %c0_82] : memref<128x32xbf16, #tpu.memory_space<vmem>>, vector<128x32xbf16>
    %cst_83 = arith.constant dense<0.000000e+00> : vector<8x32xf32>
    %194 = tpu.matmul %192, %193, %cst_83 {dimension_numbers = #tpu.dot_dimension_numbers<[1], [0], [0], [1], [0, 0, 1, 1], [], []>} : vector<8x128xbf16>, vector<128x32xbf16>, vector<8x32xf32> -> vector<8x32xf32>
    %195 = arith.addf %174, %194 : vector<8x32xf32>
    %196 = vector.broadcast %173 : vector<1x32xf32> to vector<8x32xf32>
    %197 = arith.addf %195, %196 : vector<8x32xf32>
    %198 = math.tanh %197 : vector<8x32xf32>
    %199 = vector.shape_cast %198 : vector<8x32xf32> to vector<1x8x32xf32>
    %c0_84 = arith.constant 0 : index
    %c0_85 = arith.constant 0 : index
    %c0_86 = arith.constant 0 : index
    %200 = vector.load %arg26[%c0_84, %c0_85, %c0_86] : memref<1x8x32xf32, #tpu.memory_space<vmem>>, vector<1x8x32xf32>
    tpu.vector_store %arg26[%c0_84, %c0_85, %c0_86], %199 {strides = array<i32>} : memref<1x8x32xf32, #tpu.memory_space<vmem>>, vector<1x8x32xf32>,
    %201 = vector.shape_cast %170 : vector<8x32xf32> to vector<1x8x32xf32>
    %202 = vector.extract_strided_slice %201 {offsets = [0, 0, 0], sizes = [1, 1, 32], strides = [1, 1, 1]} : vector<1x8x32xf32> to vector<1x1x32xf32>
    %203 = vector.shape_cast %202 : vector<1x1x32xf32> to vector<1x32xf32>
    %204 = arith.truncf %203 : vector<1x32xf32> to vector<1x32xbf16>
    %c0_87 = arith.constant 0 : index
    %c0_88 = arith.constant 0 : index
    %205 = vector.load %arg21[%c0_87, %c0_88] : memref<1x128xf32, #tpu.memory_space<vmem>>, vector<1x128xf32>
    %c0_89 = arith.constant 0 : index
    %c0_90 = arith.constant 0 : index
    %206 = vector.load %arg23[%c0_89, %c0_90] : memref<1x32xf32, #tpu.memory_space<vmem>>, vector<1x32xf32>
    %cst_91 = arith.constant 0.000000e+00 : f32
    %207 = vector.broadcast %cst_91 : f32 to vector<1x32xf32>
    %c0_92 = arith.constant 0 : index
    %c0_93 = arith.constant 0 : index
    %208 = vector.load %arg20[%c0_92, %c0_93] : memref<32x128xbf16, #tpu.memory_space<vmem>>, vector<32x128xbf16>
    %cst_94 = arith.constant dense<0.000000e+00> : vector<1x128xf32>
    %209 = tpu.matmul %204, %208, %cst_94 {dimension_numbers = #tpu.dot_dimension_numbers<[1], [0], [0], [1], [0, 0, 1, 1], [], []>} : vector<1x32xbf16>, vector<32x128xbf16>, vector<1x128xf32> -> vector<1x128xf32>
    %210 = arith.addf %209, %205 : vector<1x128xf32>
    %cst_95 = arith.constant 5.000000e-01 : f32
    %211 = vector.broadcast %cst_95 : f32 to vector<1x128xf32>
    %212 = arith.mulf %211, %210 : vector<1x128xf32>
    %cst_96 = arith.constant 4.471500e-02 : f32
    %213 = vector.broadcast %cst_96 : f32 to vector<1x128xf32>
    %214 = arith.mulf %213, %210 : vector<1x128xf32>
    %215 = arith.mulf %214, %210 : vector<1x128xf32>
    %216 = arith.mulf %215, %210 : vector<1x128xf32>
    %217 = arith.addf %210, %216 : vector<1x128xf32>
    %cst_97 = arith.constant 0.797884583 : f32
    %218 = vector.broadcast %cst_97 : f32 to vector<1x128xf32>
    %219 = arith.mulf %218, %217 : vector<1x128xf32>
    %220 = math.tanh %219 : vector<1x128xf32>
    %cst_98 = arith.constant 1.000000e+00 : f32
    %221 = vector.broadcast %cst_98 : f32 to vector<1x128xf32>
    %222 = arith.addf %221, %220 : vector<1x128xf32>
    %223 = arith.mulf %212, %222 : vector<1x128xf32>
    %224 = arith.truncf %223 : vector<1x128xf32> to vector<1x128xbf16>
    %c0_99 = arith.constant 0 : index
    %c0_100 = arith.constant 0 : index
    %225 = vector.load %arg22[%c0_99, %c0_100] : memref<128x32xbf16, #tpu.memory_space<vmem>>, vector<128x32xbf16>
    %cst_101 = arith.constant dense<0.000000e+00> : vector<1x32xf32>
    %226 = tpu.matmul %224, %225, %cst_101 {dimension_numbers = #tpu.dot_dimension_numbers<[1], [0], [0], [1], [0, 0, 1, 1], [], []>} : vector<1x128xbf16>, vector<128x32xbf16>, vector<1x32xf32> -> vector<1x32xf32>
    %227 = arith.addf %207, %226 : vector<1x32xf32>
    %228 = arith.addf %227, %206 : vector<1x32xf32>
    %229 = arith.addf %228, %203 : vector<1x32xf32>
    %230 = arith.truncf %229 : vector<1x32xf32> to vector<1x32xbf16>
    %c0_102 = arith.constant 0 : index
    %c0_103 = arith.constant 0 : index
    %231 = vector.load %arg24[%c0_102, %c0_103] : memref<32x128xbf16, #tpu.memory_space<vmem>>, vector<32x128xbf16>
    %cst_104 = arith.constant dense<0.000000e+00> : vector<1x128xf32>
    %232 = tpu.matmul %230, %231, %cst_104 {dimension_numbers = #tpu.dot_dimension_numbers<[1], [0], [0], [1], [0, 0, 1, 1], [], []>} : vector<1x32xbf16>, vector<32x128xbf16>, vector<1x128xf32> -> vector<1x128xf32>
    %c0_105 = arith.constant 0 : index
    %c0_106 = arith.constant 0 : index
    %233 = vector.load %arg25[%c0_105, %c0_106] : memref<1x128xf32, #tpu.memory_space<vmem>>, vector<1x128xf32>
    %234 = arith.addf %232, %233 : vector<1x128xf32>
    %235 = vector.shape_cast %234 : vector<1x128xf32> to vector<1x1x128xf32>
    %c0_107 = arith.constant 0 : index
    %c0_108 = arith.constant 0 : index
    %c0_109 = arith.constant 0 : index
    %236 = vector.load %arg27[%c0_107, %c0_108, %c0_109] : memref<1x1x128xf32, #tpu.memory_space<vmem>>, vector<1x1x128xf32>
    tpu.vector_store %arg27[%c0_107, %c0_108, %c0_109], %235 {strides = array<i32>} : memref<1x1x128xf32, #tpu.memory_space<vmem>>, vector<1x1x128xf32>,
    return
  }
  func.func @transform_0(%arg0: i32) -> (i32, i32, i32) {
    %c0_i32 = arith.constant 0 : i32
    %c0_i32_0 = arith.constant 0 : i32
    %c0_i32_1 = arith.constant 0 : i32
    return %arg0, %c0_i32, %c0_i32_0 : i32, i32, i32
  }
  func.func @transform_1(%arg0: i32) -> (i32, i32) {
    %c0_i32 = arith.constant 0 : i32
    %c0_i32_0 = arith.constant 0 : i32
    %c0_i32_1 = arith.constant 0 : i32
    return %c0_i32, %c0_i32_0 : i32, i32
  }
  func.func @transform_2(%arg0: i32) -> (i32, i32) {
    %c0_i32 = arith.constant 0 : i32
    %c0_i32_0 = arith.constant 0 : i32
    %c0_i32_1 = arith.constant 0 : i32
    return %c0_i32, %c0_i32_0 : i32, i32
  }
  func.func @transform_3(%arg0: i32) -> (i32, i32) {
    %c0_i32 = arith.constant 0 : i32
    %c0_i32_0 = arith.constant 0 : i32
    %c0_i32_1 = arith.constant 0 : i32
    return %c0_i32, %c0_i32_0 : i32, i32
  }
  func.func @transform_4(%arg0: i32) -> (i32, i32) {
    %c0_i32 = arith.constant 0 : i32
    %c0_i32_0 = arith.constant 0 : i32
    %c0_i32_1 = arith.constant 0 : i32
    return %c0_i32, %c0_i32_0 : i32, i32
  }
  func.func @transform_5(%arg0: i32) -> (i32, i32) {
    %c0_i32 = arith.constant 0 : i32
    %c0_i32_0 = arith.constant 0 : i32
    %c0_i32_1 = arith.constant 0 : i32
    return %c0_i32, %c0_i32_0 : i32, i32
  }
  func.func @transform_6(%arg0: i32) -> (i32, i32) {
    %c0_i32 = arith.constant 0 : i32
    %c0_i32_0 = arith.constant 0 : i32
    %c0_i32_1 = arith.constant 0 : i32
    return %c0_i32, %c0_i32_0 : i32, i32
  }
  func.func @transform_7(%arg0: i32) -> (i32, i32) {
    %c0_i32 = arith.constant 0 : i32
    %c0_i32_0 = arith.constant 0 : i32
    %c0_i32_1 = arith.constant 0 : i32
    return %c0_i32, %c0_i32_0 : i32, i32
  }
  func.func @transform_8(%arg0: i32) -> (i32, i32) {
    %c0_i32 = arith.constant 0 : i32
    %c0_i32_0 = arith.constant 0 : i32
    %c0_i32_1 = arith.constant 0 : i32
    return %c0_i32, %c0_i32_0 : i32, i32
  }
  func.func @transform_9(%arg0: i32) -> (i32, i32) {
    %c0_i32 = arith.constant 0 : i32
    %c0_i32_0 = arith.constant 0 : i32
    %c0_i32_1 = arith.constant 0 : i32
    return %c0_i32, %c0_i32_0 : i32, i32
  }
  func.func @transform_10(%arg0: i32) -> (i32, i32) {
    %c0_i32 = arith.constant 0 : i32
    %c0_i32_0 = arith.constant 0 : i32
    %c0_i32_1 = arith.constant 0 : i32
    return %c0_i32, %c0_i32_0 : i32, i32
  }
  func.func @transform_11(%arg0: i32) -> (i32, i32) {
    %c0_i32 = arith.constant 0 : i32
    %c0_i32_0 = arith.constant 0 : i32
    %c0_i32_1 = arith.constant 0 : i32
    return %c0_i32, %c0_i32_0 : i32, i32
  }
  func.func @transform_12(%arg0: i32) -> (i32, i32) {
    %c0_i32 = arith.constant 0 : i32
    %c0_i32_0 = arith.constant 0 : i32
    %c0_i32_1 = arith.constant 0 : i32
    return %c0_i32, %c0_i32_0 : i32, i32
  }
  func.func @transform_13(%arg0: i32) -> (i32, i32) {
    %c0_i32 = arith.constant 0 : i32
    %c0_i32_0 = arith.constant 0 : i32
    %c0_i32_1 = arith.constant 0 : i32
    return %c0_i32, %c0_i32_0 : i32, i32
  }
  func.func @transform_14(%arg0: i32) -> (i32, i32) {
    %c0_i32 = arith.constant 0 : i32
    %c0_i32_0 = arith.constant 0 : i32
    %c0_i32_1 = arith.constant 0 : i32
    return %c0_i32, %c0_i32_0 : i32, i32
  }
  func.func @transform_15(%arg0: i32) -> (i32, i32) {
    %c0_i32 = arith.constant 0 : i32
    %c0_i32_0 = arith.constant 0 : i32
    %c0_i32_1 = arith.constant 0 : i32
    return %c0_i32, %c0_i32_0 : i32, i32
  }
  func.func @transform_16(%arg0: i32) -> (i32, i32) {
    %c0_i32 = arith.constant 0 : i32
    %c0_i32_0 = arith.constant 0 : i32
    %c0_i32_1 = arith.constant 0 : i32
    return %c0_i32, %c0_i32_0 : i32, i32
  }
  func.func @transform_17(%arg0: i32) -> (i32, i32) {
    %c0_i32 = arith.constant 0 : i32
    %c0_i32_0 = arith.constant 0 : i32
    %c0_i32_1 = arith.constant 0 : i32
    return %c0_i32, %c0_i32_0 : i32, i32
  }
  func.func @transform_18(%arg0: i32) -> (i32, i32) {
    %c0_i32 = arith.constant 0 : i32
    %c0_i32_0 = arith.constant 0 : i32
    %c0_i32_1 = arith.constant 0 : i32
    return %c0_i32, %c0_i32_0 : i32, i32
  }
  func.func @transform_19(%arg0: i32) -> (i32, i32) {
    %c0_i32 = arith.constant 0 : i32
    %c0_i32_0 = arith.constant 0 : i32
    %c0_i32_1 = arith.constant 0 : i32
    return %c0_i32, %c0_i32_0 : i32, i32
  }
  func.func @transform_20(%arg0: i32) -> (i32, i32) {
    %c0_i32 = arith.constant 0 : i32
    %c0_i32_0 = arith.constant 0 : i32
    %c0_i32_1 = arith.constant 0 : i32
    return %c0_i32, %c0_i32_0 : i32, i32
  }
  func.func @transform_21(%arg0: i32) -> (i32, i32) {
    %c0_i32 = arith.constant 0 : i32
    %c0_i32_0 = arith.constant 0 : i32
    %c0_i32_1 = arith.constant 0 : i32
    return %c0_i32, %c0_i32_0 : i32, i32
  }
  func.func @transform_22(%arg0: i32) -> (i32, i32) {
    %c0_i32 = arith.constant 0 : i32
    %c0_i32_0 = arith.constant 0 : i32
    %c0_i32_1 = arith.constant 0 : i32
    return %c0_i32, %c0_i32_0 : i32, i32
  }
  func.func @transform_23(%arg0: i32) -> (i32, i32) {
    %c0_i32 = arith.constant 0 : i32
    %c0_i32_0 = arith.constant 0 : i32
    %c0_i32_1 = arith.constant 0 : i32
    return %c0_i32, %c0_i32_0 : i32, i32
  }
  func.func @transform_24(%arg0: i32) -> (i32, i32) {
    %c0_i32 = arith.constant 0 : i32
    %c0_i32_0 = arith.constant 0 : i32
    %c0_i32_1 = arith.constant 0 : i32
    return %c0_i32, %c0_i32_0 : i32, i32
  }
  func.func @transform_25(%arg0: i32) -> (i32, i32, i32) {
    %c0_i32 = arith.constant 0 : i32
    %c0_i32_0 = arith.constant 0 : i32
    %c0_i32_1 = arith.constant 0 : i32
    return %arg0, %c0_i32, %c0_i32_0 : i32, i32, i32
  }
  func.func @transform_26(%arg0: i32) -> (i32, i32, i32) {
    %c0_i32 = arith.constant 0 : i32
    %c0_i32_0 = arith.constant 0 : i32
    %c0_i32_1 = arith.constant 0 : i32
    return %arg0, %c0_i32, %c0_i32_0 : i32, i32, i32
  }
}

</mosaic_0001>

<llo_original>
// kernel: tpu_custom_call.1
$region0: #{tpu_custom_call.1}
  #allocation0 [shape = 'u32[]', space=smem, size = 0x4, offset = 0x4, fixed_abs, tag = 'smem constant byte address 0x4 - core index']
  #allocation1 [shape = 'u32[144,128]{1,0:T(1,128)}', space=vmem, size = 0x12000, scoped, tag = 'internal scratch']
  %s0 = inlined_call_operand.vmem [shape: f32[2,8,32], index: 0, kind: input, shape index: {}]
  %s1 = inlined_call_operand.vmem [shape: f32[1,32], index: 1, kind: input, shape index: {}]
  %s2 = inlined_call_operand.vmem [shape: f32[1,32], index: 2, kind: input, shape index: {}]
  %s3 = inlined_call_operand.vmem [shape: bf16[32,96], index: 3, kind: input, shape index: {}]
  %s4 = inlined_call_operand.vmem [shape: f32[1,96], index: 4, kind: input, shape index: {}]
  %s5 = inlined_call_operand.vmem [shape: bf16[32,32], index: 5, kind: input, shape index: {}]
  %s6 = inlined_call_operand.vmem [shape: f32[1,32], index: 6, kind: input, shape index: {}]
  %s7 = inlined_call_operand.vmem [shape: f32[1,32], index: 7, kind: input, shape index: {}]
  %s8 = inlined_call_operand.vmem [shape: f32[1,32], index: 8, kind: input, shape index: {}]
  %s9 = inlined_call_operand.vmem [shape: bf16[32,128], index: 9, kind: input, shape index: {}]
  %s10 = inlined_call_operand.vmem [shape: f32[1,128], index: 10, kind: input, shape index: {}]
  %s11 = inlined_call_operand.vmem [shape: bf16[128,32], index: 11, kind: input, shape index: {}]
  %s12 = inlined_call_operand.vmem [shape: f32[1,32], index: 12, kind: input, shape index: {}]
  %s13 = inlined_call_operand.vmem [shape: f32[1,32], index: 13, kind: input, shape index: {}]
  %s14 = inlined_call_operand.vmem [shape: f32[1,32], index: 14, kind: input, shape index: {}]
  %s15 = inlined_call_operand.vmem [shape: bf16[32,128], index: 15, kind: input, shape index: {}]
  %s16 = inlined_call_operand.vmem [shape: f32[1,128], index: 16, kind: input, shape index: {}]
  %s17 = inlined_call_operand.vmem [shape: bf16[128,32], index: 17, kind: input, shape index: {}]
  %s18 = inlined_call_operand.vmem [shape: f32[1,32], index: 18, kind: input, shape index: {}]
  %s19 = inlined_call_operand.vmem [shape: bf16[32,128], index: 19, kind: input, shape index: {}]
  %s20 = inlined_call_operand.vmem [shape: f32[1,128], index: 20, kind: input, shape index: {}]
  %s21 = inlined_call_operand.vmem [shape: bf16[128,32], index: 21, kind: input, shape index: {}]
  %s22 = inlined_call_operand.vmem [shape: f32[1,32], index: 22, kind: input, shape index: {}]
  %s23 = inlined_call_operand.vmem [shape: bf16[32,128], index: 23, kind: input, shape index: {}]
  %s24 = inlined_call_operand.vmem [shape: f32[1,128], index: 24, kind: input, shape index: {}]
  %s25 = inlined_call_operand.hbm [shape: f32[2,8,32], index: 25, kind: output, shape index: {0}]
  %s26 = inlined_call_operand.hbm [shape: f32[2,1,128], index: 26, kind: output, shape index: {1}]
  %27 = xla_tuple %s25, %s26
  %s28 = sld [smem:[#allocation0]]
  $region141: #{tpu_custom_call.1} parent=0
    _
  %s30 = ssub.s32 1, %s28
  %s31 = scalar_select 0, %s30, %s28
  $region1: #{tpu_custom_call.1} parent=0
    #allocation2 [shape = 'u8[8192]{0}', space=vmem, size = 0x2000, scoped, tag = 'output window, operand 0']
    #allocation3 [shape = 's32[2]{0}', space=sflag, size = 0x8, scoped, tag = 'scoped memory for tpu_custom_call.1']
    #allocation4 [shape = 'u8[1024]{0}', space=vmem, size = 0x400, scoped, tag = 'output window, operand 1']
    #allocation5 [shape = 's32[2]{0}', space=sflag, size = 0x8, scoped, tag = 'scoped memory for tpu_custom_call.1']
    %32 = vsyncpa [#allocation3], 0
    %s33 = scalar_lea.sflag [#allocation3], 1
    %34 = vsyncpa %s33, 0
    %35 = vsyncpa [#allocation5], 0
    %s36 = scalar_lea.sflag [#allocation5], 1
    %37 = vsyncpa %s36, 0
    loop: start=0, step=1, limit=4
    $region2: #{tpu_custom_call.1} parent=1 // loop_pre_header
      _
    $region3: #{tpu_custom_call.1} parent=1 // loop_header
      %s39 = sphi 0, %s43
      %p40 = scmp.ge.s32.totalorder %s39, 4
      %s49 = sphi 0, %s51
      %s52 = sphi 0, %s49
      %s53 = sphi 0, %s52
      %s69 = sphi 0, %s53
      %s73 = sphi 0, %s73
      %s75 = sphi 0, %s73
      %s76 = sphi 0, %s75
      %s90 = sphi 0, %s76
      %s94 = sphi 0, %s94
      %s96 = sphi 0, %s94
      %s97 = sphi 0, %s96
      %s111 = sphi 0, %s97
      %s115 = sphi 0, %s115
      %s117 = sphi 0, %s115
      %s118 = sphi 0, %s117
      %s132 = sphi 0, %s118
      %s136 = sphi 0, %s136
      %s138 = sphi 0, %s136
      %s139 = sphi 0, %s138
      %s153 = sphi 0, %s139
      %s157 = sphi 0, %s157
      %s159 = sphi 0, %s157
      %s160 = sphi 0, %s159
      %s174 = sphi 0, %s160
      %s178 = sphi 0, %s178
      %s180 = sphi 0, %s178
      %s181 = sphi 0, %s180
      %s195 = sphi 0, %s181
      %s199 = sphi 0, %s199
      %s201 = sphi 0, %s199
      %s202 = sphi 0, %s201
      %s216 = sphi 0, %s202
      %s220 = sphi 0, %s220
      %s222 = sphi 0, %s220
      %s223 = sphi 0, %s222
      %s237 = sphi 0, %s223
      %s241 = sphi 0, %s241
      %s243 = sphi 0, %s241
      %s244 = sphi 0, %s243
      %s258 = sphi 0, %s244
      %s262 = sphi 0, %s262
      %s264 = sphi 0, %s262
      %s265 = sphi 0, %s264
      %s279 = sphi 0, %s265
      %s283 = sphi 0, %s283
      %s285 = sphi 0, %s283
      %s286 = sphi 0, %s285
      %s300 = sphi 0, %s286
      %s304 = sphi 0, %s304
      %s306 = sphi 0, %s304
      %s307 = sphi 0, %s306
      %s321 = sphi 0, %s307
      %s325 = sphi 0, %s325
      %s327 = sphi 0, %s325
      %s328 = sphi 0, %s327
      %s342 = sphi 0, %s328
      %s346 = sphi 0, %s346
      %s348 = sphi 0, %s346
      %s349 = sphi 0, %s348
      %s363 = sphi 0, %s349
      %s367 = sphi 0, %s367
      %s369 = sphi 0, %s367
      %s370 = sphi 0, %s369
      %s384 = sphi 0, %s370
      %s388 = sphi 0, %s388
      %s390 = sphi 0, %s388
      %s391 = sphi 0, %s390
      %s405 = sphi 0, %s391
      %s409 = sphi 0, %s409
      %s411 = sphi 0, %s409
      %s412 = sphi 0, %s411
      %s426 = sphi 0, %s412
      %s430 = sphi 0, %s430
      %s432 = sphi 0, %s430
      %s433 = sphi 0, %s432
      %s447 = sphi 0, %s433
      %s451 = sphi 0, %s451
      %s453 = sphi 0, %s451
      %s454 = sphi 0, %s453
      %s468 = sphi 0, %s454
      %s472 = sphi 0, %s472
      %s474 = sphi 0, %s472
      %s475 = sphi 0, %s474
      %s489 = sphi 0, %s475
      %s493 = sphi 0, %s493
      %s495 = sphi 0, %s493
      %s496 = sphi 0, %s495
      %s510 = sphi 0, %s496
      %s514 = sphi 0, %s514
      %s516 = sphi 0, %s514
      %s517 = sphi 0, %s516
      %s531 = sphi 0, %s517
      %s535 = sphi 0, %s535
      %s537 = sphi 0, %s535
      %s538 = sphi 0, %s537
      %s552 = sphi 0, %s538
      %s556 = sphi 0, %s556
      %s558 = sphi 0, %s556
      %s559 = sphi 0, %s558
      %s573 = sphi 0, %s559
      %s579 = sphi 0, %s581
      %s582 = sphi 0, %s579
      %s583 = sphi 0, %s582
      %s599 = sphi 0, %s583
      %s605 = sphi 0, %s607
      %s608 = sphi 0, %s605
      %s609 = sphi 0, %s608
      %s625 = sphi 0, %s609
    $region4: #{tpu_custom_call.1} parent=1 // loop_header_branch
      %42 = sbr.rel (%p40) target = $region8
    $region5: #{tpu_custom_call.1} parent=1 // loop_body
      %s44 = ssub.s32 %s39, 1
      %s45 = ssub.s32 %s39, 2
      %s46 = sadd.s32 %s39, 1
      %s47 = ssub.s32 %s39, %s46
      %p48 = scmp.eq.s32.totalorder %s47, 0
      %s50 = sadd.s32 %s49, 1
      %s51 = scalar_select %p48, %s49, %s50
      %p54 = pneg %p48
      %p55 = scmp.eq.s32.totalorder %s39, 1
      %p56 = por %p54, %p55
      %p57 = scmp.ne.s32.totalorder %s49, %s52
      %p58 = scmp.eq.s32.totalorder %s39, 0
      %p59 = por %p57, %p58
      %p60 = scmp.ne.s32.totalorder %s49, %s52
      %p61 = scmp.eq.s32.totalorder %s44, 1
      %p62 = por %p60, %p61
      %p63 = scmp.ne.s32.totalorder %s52, %s53
      %p64 = scmp.eq.s32.totalorder %s44, 0
      %p65 = por %p63, %p64
      %p66 = scmp.ne.s32.totalorder %s52, %s53
      %p67 = scmp.eq.s32.totalorder %s45, 1
      %p68 = por %p66, %p67
      %p70 = scmp.ne.s32.totalorder %s53, %s69
      %p71 = scmp.eq.s32.totalorder %s45, 0
      %p72 = por %p70, %p71
      %s74 = sadd.s32 %s73, 1
      %p77 = scmp.eq.s32.totalorder %s39, 1
      %p78 = scmp.ne.s32.totalorder %s73, %s75
      %p79 = scmp.eq.s32.totalorder %s39, 0
      %p80 = por %p78, %p79
      %p81 = scmp.ne.s32.totalorder %s73, %s75
      %p82 = scmp.eq.s32.totalorder %s44, 1
      %p83 = por %p81, %p82
      %p84 = scmp.ne.s32.totalorder %s75, %s76
      %p85 = scmp.eq.s32.totalorder %s44, 0
      %p86 = por %p84, %p85
      %p87 = scmp.ne.s32.totalorder %s75, %s76
      %p88 = scmp.eq.s32.totalorder %s45, 1
      %p89 = por %p87, %p88
      %p91 = scmp.ne.s32.totalorder %s76, %s90
      %p92 = scmp.eq.s32.totalorder %s45, 0
      %p93 = por %p91, %p92
      %s95 = sadd.s32 %s94, 1
      %p98 = scmp.eq.s32.totalorder %s39, 1
      %p99 = scmp.ne.s32.totalorder %s94, %s96
      %p100 = scmp.eq.s32.totalorder %s39, 0
      %p101 = por %p99, %p100
      %p102 = scmp.ne.s32.totalorder %s94, %s96
      %p103 = scmp.eq.s32.totalorder %s44, 1
      %p104 = por %p102, %p103
      %p105 = scmp.ne.s32.totalorder %s96, %s97
      %p106 = scmp.eq.s32.totalorder %s44, 0
      %p107 = por %p105, %p106
      %p108 = scmp.ne.s32.totalorder %s96, %s97
      %p109 = scmp.eq.s32.totalorder %s45, 1
      %p110 = por %p108, %p109
      %p112 = scmp.ne.s32.totalorder %s97, %s111
      %p113 = scmp.eq.s32.totalorder %s45, 0
      %p114 = por %p112, %p113
      %s116 = sadd.s32 %s115, 1
      %p119 = scmp.eq.s32.totalorder %s39, 1
      %p120 = scmp.ne.s32.totalorder %s115, %s117
      %p121 = scmp.eq.s32.totalorder %s39, 0
      %p122 = por %p120, %p121
      %p123 = scmp.ne.s32.totalorder %s115, %s117
      %p124 = scmp.eq.s32.totalorder %s44, 1
      %p125 = por %p123, %p124
      %p126 = scmp.ne.s32.totalorder %s117, %s118
      %p127 = scmp.eq.s32.totalorder %s44, 0
      %p128 = por %p126, %p127
      %p129 = scmp.ne.s32.totalorder %s117, %s118
      %p130 = scmp.eq.s32.totalorder %s45, 1
      %p131 = por %p129, %p130
      %p133 = scmp.ne.s32.totalorder %s118, %s132
      %p134 = scmp.eq.s32.totalorder %s45, 0
      %p135 = por %p133, %p134
      %s137 = sadd.s32 %s136, 1
      %p140 = scmp.eq.s32.totalorder %s39, 1
      %p141 = scmp.ne.s32.totalorder %s136, %s138
      %p142 = scmp.eq.s32.totalorder %s39, 0
      %p143 = por %p141, %p142
      %p144 = scmp.ne.s32.totalorder %s136, %s138
      %p145 = scmp.eq.s32.totalorder %s44, 1
      %p146 = por %p144, %p145
      %p147 = scmp.ne.s32.totalorder %s138, %s139
      %p148 = scmp.eq.s32.totalorder %s44, 0
      %p149 = por %p147, %p148
      %p150 = scmp.ne.s32.totalorder %s138, %s139
      %p151 = scmp.eq.s32.totalorder %s45, 1
      %p152 = por %p150, %p151
      %p154 = scmp.ne.s32.totalorder %s139, %s153
      %p155 = scmp.eq.s32.totalorder %s45, 0
      %p156 = por %p154, %p155
      %s158 = sadd.s32 %s157, 1
      %p161 = scmp.eq.s32.totalorder %s39, 1
      %p162 = scmp.ne.s32.totalorder %s157, %s159
      %p163 = scmp.eq.s32.totalorder %s39, 0
      %p164 = por %p162, %p163
      %p165 = scmp.ne.s32.totalorder %s157, %s159
      %p166 = scmp.eq.s32.totalorder %s44, 1
      %p167 = por %p165, %p166
      %p168 = scmp.ne.s32.totalorder %s159, %s160
      %p169 = scmp.eq.s32.totalorder %s44, 0
      %p170 = por %p168, %p169
      %p171 = scmp.ne.s32.totalorder %s159, %s160
      %p172 = scmp.eq.s32.totalorder %s45, 1
      %p173 = por %p171, %p172
      %p175 = scmp.ne.s32.totalorder %s160, %s174
      %p176 = scmp.eq.s32.totalorder %s45, 0
      %p177 = por %p175, %p176
      %s179 = sadd.s32 %s178, 1
      %p182 = scmp.eq.s32.totalorder %s39, 1
      %p183 = scmp.ne.s32.totalorder %s178, %s180
      %p184 = scmp.eq.s32.totalorder %s39, 0
      %p185 = por %p183, %p184
      %p186 = scmp.ne.s32.totalorder %s178, %s180
      %p187 = scmp.eq.s32.totalorder %s44, 1
      %p188 = por %p186, %p187
      %p189 = scmp.ne.s32.totalorder %s180, %s181
      %p190 = scmp.eq.s32.totalorder %s44, 0
      %p191 = por %p189, %p190
      %p192 = scmp.ne.s32.totalorder %s180, %s181
      %p193 = scmp.eq.s32.totalorder %s45, 1
      %p194 = por %p192, %p193
      %p196 = scmp.ne.s32.totalorder %s181, %s195
      %p197 = scmp.eq.s32.totalorder %s45, 0
      %p198 = por %p196, %p197
      %s200 = sadd.s32 %s199, 1
      %p203 = scmp.eq.s32.totalorder %s39, 1
      %p204 = scmp.ne.s32.totalorder %s199, %s201
      %p205 = scmp.eq.s32.totalorder %s39, 0
      %p206 = por %p204, %p205
      %p207 = scmp.ne.s32.totalorder %s199, %s201
      %p208 = scmp.eq.s32.totalorder %s44, 1
      %p209 = por %p207, %p208
      %p210 = scmp.ne.s32.totalorder %s201, %s202
      %p211 = scmp.eq.s32.totalorder %s44, 0
      %p212 = por %p210, %p211
      %p213 = scmp.ne.s32.totalorder %s201, %s202
      %p214 = scmp.eq.s32.totalorder %s45, 1
      %p215 = por %p213, %p214
      %p217 = scmp.ne.s32.totalorder %s202, %s216
      %p218 = scmp.eq.s32.totalorder %s45, 0
      %p219 = por %p217, %p218
      %s221 = sadd.s32 %s220, 1
      %p224 = scmp.eq.s32.totalorder %s39, 1
      %p225 = scmp.ne.s32.totalorder %s220, %s222
      %p226 = scmp.eq.s32.totalorder %s39, 0
      %p227 = por %p225, %p226
      %p228 = scmp.ne.s32.totalorder %s220, %s222
      %p229 = scmp.eq.s32.totalorder %s44, 1
      %p230 = por %p228, %p229
      %p231 = scmp.ne.s32.totalorder %s222, %s223
      %p232 = scmp.eq.s32.totalorder %s44, 0
      %p233 = por %p231, %p232
      %p234 = scmp.ne.s32.totalorder %s222, %s223
      %p235 = scmp.eq.s32.totalorder %s45, 1
      %p236 = por %p234, %p235
      %p238 = scmp.ne.s32.totalorder %s223, %s237
      %p239 = scmp.eq.s32.totalorder %s45, 0
      %p240 = por %p238, %p239
      %s242 = sadd.s32 %s241, 1
      %p245 = scmp.eq.s32.totalorder %s39, 1
      %p246 = scmp.ne.s32.totalorder %s241, %s243
      %p247 = scmp.eq.s32.totalorder %s39, 0
      %p248 = por %p246, %p247
      %p249 = scmp.ne.s32.totalorder %s241, %s243
      %p250 = scmp.eq.s32.totalorder %s44, 1
      %p251 = por %p249, %p250
      %p252 = scmp.ne.s32.totalorder %s243, %s244
      %p253 = scmp.eq.s32.totalorder %s44, 0
      %p254 = por %p252, %p253
      %p255 = scmp.ne.s32.totalorder %s243, %s244
      %p256 = scmp.eq.s32.totalorder %s45, 1
      %p257 = por %p255, %p256
      %p259 = scmp.ne.s32.totalorder %s244, %s258
      %p260 = scmp.eq.s32.totalorder %s45, 0
      %p261 = por %p259, %p260
      %s263 = sadd.s32 %s262, 1
      %p266 = scmp.eq.s32.totalorder %s39, 1
      %p267 = scmp.ne.s32.totalorder %s262, %s264
      %p268 = scmp.eq.s32.totalorder %s39, 0
      %p269 = por %p267, %p268
      %p270 = scmp.ne.s32.totalorder %s262, %s264
      %p271 = scmp.eq.s32.totalorder %s44, 1
      %p272 = por %p270, %p271
      %p273 = scmp.ne.s32.totalorder %s264, %s265
      %p274 = scmp.eq.s32.totalorder %s44, 0
      %p275 = por %p273, %p274
      %p276 = scmp.ne.s32.totalorder %s264, %s265
      %p277 = scmp.eq.s32.totalorder %s45, 1
      %p278 = por %p276, %p277
      %p280 = scmp.ne.s32.totalorder %s265, %s279
      %p281 = scmp.eq.s32.totalorder %s45, 0
      %p282 = por %p280, %p281
      %s284 = sadd.s32 %s283, 1
      %p287 = scmp.eq.s32.totalorder %s39, 1
      %p288 = scmp.ne.s32.totalorder %s283, %s285
      %p289 = scmp.eq.s32.totalorder %s39, 0
      %p290 = por %p288, %p289
      %p291 = scmp.ne.s32.totalorder %s283, %s285
      %p292 = scmp.eq.s32.totalorder %s44, 1
      %p293 = por %p291, %p292
      %p294 = scmp.ne.s32.totalorder %s285, %s286
      %p295 = scmp.eq.s32.totalorder %s44, 0
      %p296 = por %p294, %p295
      %p297 = scmp.ne.s32.totalorder %s285, %s286
      %p298 = scmp.eq.s32.totalorder %s45, 1
      %p299 = por %p297, %p298
      %p301 = scmp.ne.s32.totalorder %s286, %s300
      %p302 = scmp.eq.s32.totalorder %s45, 0
      %p303 = por %p301, %p302
      %s305 = sadd.s32 %s304, 1
      %p308 = scmp.eq.s32.totalorder %s39, 1
      %p309 = scmp.ne.s32.totalorder %s304, %s306
      %p310 = scmp.eq.s32.totalorder %s39, 0
      %p311 = por %p309, %p310
      %p312 = scmp.ne.s32.totalorder %s304, %s306
      %p313 = scmp.eq.s32.totalorder %s44, 1
      %p314 = por %p312, %p313
      %p315 = scmp.ne.s32.totalorder %s306, %s307
      %p316 = scmp.eq.s32.totalorder %s44, 0
      %p317 = por %p315, %p316
      %p318 = scmp.ne.s32.totalorder %s306, %s307
      %p319 = scmp.eq.s32.totalorder %s45, 1
      %p320 = por %p318, %p319
      %p322 = scmp.ne.s32.totalorder %s307, %s321
      %p323 = scmp.eq.s32.totalorder %s45, 0
      %p324 = por %p322, %p323
      %s326 = sadd.s32 %s325, 1
      %p329 = scmp.eq.s32.totalorder %s39, 1
      %p330 = scmp.ne.s32.totalorder %s325, %s327
      %p331 = scmp.eq.s32.totalorder %s39, 0
      %p332 = por %p330, %p331
      %p333 = scmp.ne.s32.totalorder %s325, %s327
      %p334 = scmp.eq.s32.totalorder %s44, 1
      %p335 = por %p333, %p334
      %p336 = scmp.ne.s32.totalorder %s327, %s328
      %p337 = scmp.eq.s32.totalorder %s44, 0
      %p338 = por %p336, %p337
      %p339 = scmp.ne.s32.totalorder %s327, %s328
      %p340 = scmp.eq.s32.totalorder %s45, 1
      %p341 = por %p339, %p340
      %p343 = scmp.ne.s32.totalorder %s328, %s342
      %p344 = scmp.eq.s32.totalorder %s45, 0
      %p345 = por %p343, %p344
      %s347 = sadd.s32 %s346, 1
      %p350 = scmp.eq.s32.totalorder %s39, 1
      %p351 = scmp.ne.s32.totalorder %s346, %s348
      %p352 = scmp.eq.s32.totalorder %s39, 0
      %p353 = por %p351, %p352
      %p354 = scmp.ne.s32.totalorder %s346, %s348
      %p355 = scmp.eq.s32.totalorder %s44, 1
      %p356 = por %p354, %p355
      %p357 = scmp.ne.s32.totalorder %s348, %s349
      %p358 = scmp.eq.s32.totalorder %s44, 0
      %p359 = por %p357, %p358
      %p360 = scmp.ne.s32.totalorder %s348, %s349
      %p361 = scmp.eq.s32.totalorder %s45, 1
      %p362 = por %p360, %p361
      %p364 = scmp.ne.s32.totalorder %s349, %s363
      %p365 = scmp.eq.s32.totalorder %s45, 0
      %p366 = por %p364, %p365
      %s368 = sadd.s32 %s367, 1
      %p371 = scmp.eq.s32.totalorder %s39, 1
      %p372 = scmp.ne.s32.totalorder %s367, %s369
      %p373 = scmp.eq.s32.totalorder %s39, 0
      %p374 = por %p372, %p373
      %p375 = scmp.ne.s32.totalorder %s367, %s369
      %p376 = scmp.eq.s32.totalorder %s44, 1
      %p377 = por %p375, %p376
      %p378 = scmp.ne.s32.totalorder %s369, %s370
      %p379 = scmp.eq.s32.totalorder %s44, 0
      %p380 = por %p378, %p379
      %p381 = scmp.ne.s32.totalorder %s369, %s370
      %p382 = scmp.eq.s32.totalorder %s45, 1
      %p383 = por %p381, %p382
      %p385 = scmp.ne.s32.totalorder %s370, %s384
      %p386 = scmp.eq.s32.totalorder %s45, 0
      %p387 = por %p385, %p386
      %s389 = sadd.s32 %s388, 1
      %p392 = scmp.eq.s32.totalorder %s39, 1
      %p393 = scmp.ne.s32.totalorder %s388, %s390
      %p394 = scmp.eq.s32.totalorder %s39, 0
      %p395 = por %p393, %p394
      %p396 = scmp.ne.s32.totalorder %s388, %s390
      %p397 = scmp.eq.s32.totalorder %s44, 1
      %p398 = por %p396, %p397
      %p399 = scmp.ne.s32.totalorder %s390, %s391
      %p400 = scmp.eq.s32.totalorder %s44, 0
      %p401 = por %p399, %p400
      %p402 = scmp.ne.s32.totalorder %s390, %s391
      %p403 = scmp.eq.s32.totalorder %s45, 1
      %p404 = por %p402, %p403
      %p406 = scmp.ne.s32.totalorder %s391, %s405
      %p407 = scmp.eq.s32.totalorder %s45, 0
      %p408 = por %p406, %p407
      %s410 = sadd.s32 %s409, 1
      %p413 = scmp.eq.s32.totalorder %s39, 1
      %p414 = scmp.ne.s32.totalorder %s409, %s411
      %p415 = scmp.eq.s32.totalorder %s39, 0
      %p416 = por %p414, %p415
      %p417 = scmp.ne.s32.totalorder %s409, %s411
      %p418 = scmp.eq.s32.totalorder %s44, 1
      %p419 = por %p417, %p418
      %p420 = scmp.ne.s32.totalorder %s411, %s412
      %p421 = scmp.eq.s32.totalorder %s44, 0
      %p422 = por %p420, %p421
      %p423 = scmp.ne.s32.totalorder %s411, %s412
      %p424 = scmp.eq.s32.totalorder %s45, 1
      %p425 = por %p423, %p424
      %p427 = scmp.ne.s32.totalorder %s412, %s426
      %p428 = scmp.eq.s32.totalorder %s45, 0
      %p429 = por %p427, %p428
      %s431 = sadd.s32 %s430, 1
      %p434 = scmp.eq.s32.totalorder %s39, 1
      %p435 = scmp.ne.s32.totalorder %s430, %s432
      %p436 = scmp.eq.s32.totalorder %s39, 0
      %p437 = por %p435, %p436
      %p438 = scmp.ne.s32.totalorder %s430, %s432
      %p439 = scmp.eq.s32.totalorder %s44, 1
      %p440 = por %p438, %p439
      %p441 = scmp.ne.s32.totalorder %s432, %s433
      %p442 = scmp.eq.s32.totalorder %s44, 0
      %p443 = por %p441, %p442
      %p444 = scmp.ne.s32.totalorder %s432, %s433
      %p445 = scmp.eq.s32.totalorder %s45, 1
      %p446 = por %p444, %p445
      %p448 = scmp.ne.s32.totalorder %s433, %s447
      %p449 = scmp.eq.s32.totalorder %s45, 0
      %p450 = por %p448, %p449
      %s452 = sadd.s32 %s451, 1
      %p455 = scmp.eq.s32.totalorder %s39, 1
      %p456 = scmp.ne.s32.totalorder %s451, %s453
      %p457 = scmp.eq.s32.totalorder %s39, 0
      %p458 = por %p456, %p457
      %p459 = scmp.ne.s32.totalorder %s451, %s453
      %p460 = scmp.eq.s32.totalorder %s44, 1
      %p461 = por %p459, %p460
      %p462 = scmp.ne.s32.totalorder %s453, %s454
      %p463 = scmp.eq.s32.totalorder %s44, 0
      %p464 = por %p462, %p463
      %p465 = scmp.ne.s32.totalorder %s453, %s454
      %p466 = scmp.eq.s32.totalorder %s45, 1
      %p467 = por %p465, %p466
      %p469 = scmp.ne.s32.totalorder %s454, %s468
      %p470 = scmp.eq.s32.totalorder %s45, 0
      %p471 = por %p469, %p470
      %s473 = sadd.s32 %s472, 1
      %p476 = scmp.eq.s32.totalorder %s39, 1
      %p477 = scmp.ne.s32.totalorder %s472, %s474
      %p478 = scmp.eq.s32.totalorder %s39, 0
      %p479 = por %p477, %p478
      %p480 = scmp.ne.s32.totalorder %s472, %s474
      %p481 = scmp.eq.s32.totalorder %s44, 1
      %p482 = por %p480, %p481
      %p483 = scmp.ne.s32.totalorder %s474, %s475
      %p484 = scmp.eq.s32.totalorder %s44, 0
      %p485 = por %p483, %p484
      %p486 = scmp.ne.s32.totalorder %s474, %s475
      %p487 = scmp.eq.s32.totalorder %s45, 1
      %p488 = por %p486, %p487
      %p490 = scmp.ne.s32.totalorder %s475, %s489
      %p491 = scmp.eq.s32.totalorder %s45, 0
      %p492 = por %p490, %p491
      %s494 = sadd.s32 %s493, 1
      %p497 = scmp.eq.s32.totalorder %s39, 1
      %p498 = scmp.ne.s32.totalorder %s493, %s495
      %p499 = scmp.eq.s32.totalorder %s39, 0
      %p500 = por %p498, %p499
      %p501 = scmp.ne.s32.totalorder %s493, %s495
      %p502 = scmp.eq.s32.totalorder %s44, 1
      %p503 = por %p501, %p502
      %p504 = scmp.ne.s32.totalorder %s495, %s496
      %p505 = scmp.eq.s32.totalorder %s44, 0
      %p506 = por %p504, %p505
      %p507 = scmp.ne.s32.totalorder %s495, %s496
      %p508 = scmp.eq.s32.totalorder %s45, 1
      %p509 = por %p507, %p508
      %p511 = scmp.ne.s32.totalorder %s496, %s510
      %p512 = scmp.eq.s32.totalorder %s45, 0
      %p513 = por %p511, %p512
      %s515 = sadd.s32 %s514, 1
      %p518 = scmp.eq.s32.totalorder %s39, 1
      %p519 = scmp.ne.s32.totalorder %s514, %s516
      %p520 = scmp.eq.s32.totalorder %s39, 0
      %p521 = por %p519, %p520
      %p522 = scmp.ne.s32.totalorder %s514, %s516
      %p523 = scmp.eq.s32.totalorder %s44, 1
      %p524 = por %p522, %p523
      %p525 = scmp.ne.s32.totalorder %s516, %s517
      %p526 = scmp.eq.s32.totalorder %s44, 0
      %p527 = por %p525, %p526
      %p528 = scmp.ne.s32.totalorder %s516, %s517
      %p529 = scmp.eq.s32.totalorder %s45, 1
      %p530 = por %p528, %p529
      %p532 = scmp.ne.s32.totalorder %s517, %s531
      %p533 = scmp.eq.s32.totalorder %s45, 0
      %p534 = por %p532, %p533
      %s536 = sadd.s32 %s535, 1
      %p539 = scmp.eq.s32.totalorder %s39, 1
      %p540 = scmp.ne.s32.totalorder %s535, %s537
      %p541 = scmp.eq.s32.totalorder %s39, 0
      %p542 = por %p540, %p541
      %p543 = scmp.ne.s32.totalorder %s535, %s537
      %p544 = scmp.eq.s32.totalorder %s44, 1
      %p545 = por %p543, %p544
      %p546 = scmp.ne.s32.totalorder %s537, %s538
      %p547 = scmp.eq.s32.totalorder %s44, 0
      %p548 = por %p546, %p547
      %p549 = scmp.ne.s32.totalorder %s537, %s538
      %p550 = scmp.eq.s32.totalorder %s45, 1
      %p551 = por %p549, %p550
      %p553 = scmp.ne.s32.totalorder %s538, %s552
      %p554 = scmp.eq.s32.totalorder %s45, 0
      %p555 = por %p553, %p554
      %s557 = sadd.s32 %s556, 1
      %p560 = scmp.eq.s32.totalorder %s39, 1
      %p561 = scmp.ne.s32.totalorder %s556, %s558
      %p562 = scmp.eq.s32.totalorder %s39, 0
      %p563 = por %p561, %p562
      %p564 = scmp.ne.s32.totalorder %s556, %s558
      %p565 = scmp.eq.s32.totalorder %s44, 1
      %p566 = por %p564, %p565
      %p567 = scmp.ne.s32.totalorder %s558, %s559
      %p568 = scmp.eq.s32.totalorder %s44, 0
      %p569 = por %p567, %p568
      %p570 = scmp.ne.s32.totalorder %s558, %s559
      %p571 = scmp.eq.s32.totalorder %s45, 1
      %p572 = por %p570, %p571
      %p574 = scmp.ne.s32.totalorder %s559, %s573
      %p575 = scmp.eq.s32.totalorder %s45, 0
      %p576 = por %p574, %p575
      %s577 = ssub.s32 %s39, %s46
      %p578 = scmp.eq.s32.totalorder %s577, 0
      %s580 = sadd.s32 %s579, 1
      %s581 = scalar_select %p578, %s579, %s580
      %p584 = pneg %p578
      %p585 = scmp.eq.s32.totalorder %s39, 1
      %p586 = por %p584, %p585
      %p587 = scmp.ne.s32.totalorder %s579, %s582
      %p588 = scmp.eq.s32.totalorder %s39, 0
      %p589 = por %p587, %p588
      %p590 = scmp.ne.s32.totalorder %s579, %s582
      %p591 = scmp.eq.s32.totalorder %s44, 1
      %p592 = por %p590, %p591
      %p593 = scmp.ne.s32.totalorder %s582, %s583
      %p594 = scmp.eq.s32.totalorder %s44, 0
      %p595 = por %p593, %p594
      %p596 = scmp.ne.s32.totalorder %s582, %s583
      %p597 = scmp.eq.s32.totalorder %s45, 1
      %p598 = por %p596, %p597
      %p600 = scmp.ne.s32.totalorder %s583, %s599
      %p601 = scmp.eq.s32.totalorder %s45, 0
      %p602 = por %p600, %p601
      %s603 = ssub.s32 %s39, %s46
      %p604 = scmp.eq.s32.totalorder %s603, 0
      %s606 = sadd.s32 %s605, 1
      %s607 = scalar_select %p604, %s605, %s606
      %p610 = pneg %p604
      %p611 = scmp.eq.s32.totalorder %s39, 1
      %p612 = por %p610, %p611
      %p613 = scmp.ne.s32.totalorder %s605, %s608
      %p614 = scmp.eq.s32.totalorder %s39, 0
      %p615 = por %p613, %p614
      %p616 = scmp.ne.s32.totalorder %s605, %s608
      %p617 = scmp.eq.s32.totalorder %s44, 1
      %p618 = por %p616, %p617
      %p619 = scmp.ne.s32.totalorder %s608, %s609
      %p620 = scmp.eq.s32.totalorder %s44, 0
      %p621 = por %p619, %p620
      %p622 = scmp.ne.s32.totalorder %s608, %s609
      %p623 = scmp.eq.s32.totalorder %s45, 1
      %p624 = por %p622, %p623
      %p626 = scmp.ne.s32.totalorder %s609, %s625
      %p627 = scmp.eq.s32.totalorder %s45, 0
      %p628 = por %p626, %p627
      %p629 = scmp.le.s32.totalorder 1, %s39
      %p630 = scmp.lt.s32.totalorder %s39, 3
      %p631 = pnand %p629, %p630
      %p632 = pneg %p631
      // Predicated region
      $region9: #{tpu_custom_call.1} parent=5 // pred_check
        _
      $region10: #{tpu_custom_call.1} parent=5 // pred_check_branch
        %634 = sbr.rel (%p631) target = $region12
      $region11: #{tpu_custom_call.1} parent=5 // pred_region
        %s635 = ssub.s32 %s39, 1
        // Predicated region
        $region13: #{tpu_custom_call.1} parent=11 // pred_check
          %p636 = pneg %p86
        $region14: #{tpu_custom_call.1} parent=11 // pred_check_branch
          %638 = sbr.rel (%p636) target = $region16
        $region15: #{tpu_custom_call.1} parent=11 // pred_region
          _
        $region16: #{tpu_custom_call.1} parent=11 // pred_fallthru
          _
        // Predicated region
        $region17: #{tpu_custom_call.1} parent=11 // pred_check
          %p639 = pneg %p107
        $region18: #{tpu_custom_call.1} parent=11 // pred_check_branch
          %641 = sbr.rel (%p639) target = $region20
        $region19: #{tpu_custom_call.1} parent=11 // pred_region
          _
        $region20: #{tpu_custom_call.1} parent=11 // pred_fallthru
          _
        // Predicated region
        $region21: #{tpu_custom_call.1} parent=11 // pred_check
          %p642 = pneg %p128
        $region22: #{tpu_custom_call.1} parent=11 // pred_check_branch
          %644 = sbr.rel (%p642) target = $region24
        $region23: #{tpu_custom_call.1} parent=11 // pred_region
          _
        $region24: #{tpu_custom_call.1} parent=11 // pred_fallthru
          _
        // Predicated region
        $region25: #{tpu_custom_call.1} parent=11 // pred_check
          %p645 = pneg %p149
        $region26: #{tpu_custom_call.1} parent=11 // pred_check_branch
          %647 = sbr.rel (%p645) target = $region28
        $region27: #{tpu_custom_call.1} parent=11 // pred_region
          _
        $region28: #{tpu_custom_call.1} parent=11 // pred_fallthru
          _
        // Predicated region
        $region29: #{tpu_custom_call.1} parent=11 // pred_check
          %p648 = pneg %p170
        $region30: #{tpu_custom_call.1} parent=11 // pred_check_branch
          %650 = sbr.rel (%p648) target = $region32
        $region31: #{tpu_custom_call.1} parent=11 // pred_region
          _
        $region32: #{tpu_custom_call.1} parent=11 // pred_fallthru
          _
        // Predicated region
        $region33: #{tpu_custom_call.1} parent=11 // pred_check
          %p651 = pneg %p191
        $region34: #{tpu_custom_call.1} parent=11 // pred_check_branch
          %653 = sbr.rel (%p651) target = $region36
        $region35: #{tpu_custom_call.1} parent=11 // pred_region
          _
        $region36: #{tpu_custom_call.1} parent=11 // pred_fallthru
          _
        // Predicated region
        $region37: #{tpu_custom_call.1} parent=11 // pred_check
          %p654 = pneg %p212
        $region38: #{tpu_custom_call.1} parent=11 // pred_check_branch
          %656 = sbr.rel (%p654) target = $region40
        $region39: #{tpu_custom_call.1} parent=11 // pred_region
          _
        $region40: #{tpu_custom_call.1} parent=11 // pred_fallthru
          _
        // Predicated region
        $region41: #{tpu_custom_call.1} parent=11 // pred_check
          %p657 = pneg %p233
        $region42: #{tpu_custom_call.1} parent=11 // pred_check_branch
          %659 = sbr.rel (%p657) target = $region44
        $region43: #{tpu_custom_call.1} parent=11 // pred_region
          _
        $region44: #{tpu_custom_call.1} parent=11 // pred_fallthru
          _
        // Predicated region
        $region45: #{tpu_custom_call.1} parent=11 // pred_check
          %p660 = pneg %p254
        $region46: #{tpu_custom_call.1} parent=11 // pred_check_branch
          %662 = sbr.rel (%p660) target = $region48
        $region47: #{tpu_custom_call.1} parent=11 // pred_region
          _
        $region48: #{tpu_custom_call.1} parent=11 // pred_fallthru
          _
        // Predicated region
        $region49: #{tpu_custom_call.1} parent=11 // pred_check
          %p663 = pneg %p275
        $region50: #{tpu_custom_call.1} parent=11 // pred_check_branch
          %665 = sbr.rel (%p663) target = $region52
        $region51: #{tpu_custom_call.1} parent=11 // pred_region
          _
        $region52: #{tpu_custom_call.1} parent=11 // pred_fallthru
          _
        // Predicated region
        $region53: #{tpu_custom_call.1} parent=11 // pred_check
          %p666 = pneg %p296
        $region54: #{tpu_custom_call.1} parent=11 // pred_check_branch
          %668 = sbr.rel (%p666) target = $region56
        $region55: #{tpu_custom_call.1} parent=11 // pred_region
          _
        $region56: #{tpu_custom_call.1} parent=11 // pred_fallthru
          _
        // Predicated region
        $region57: #{tpu_custom_call.1} parent=11 // pred_check
          %p669 = pneg %p317
        $region58: #{tpu_custom_call.1} parent=11 // pred_check_branch
          %671 = sbr.rel (%p669) target = $region60
        $region59: #{tpu_custom_call.1} parent=11 // pred_region
          _
        $region60: #{tpu_custom_call.1} parent=11 // pred_fallthru
          _
        // Predicated region
        $region61: #{tpu_custom_call.1} parent=11 // pred_check
          %p672 = pneg %p338
        $region62: #{tpu_custom_call.1} parent=11 // pred_check_branch
          %674 = sbr.rel (%p672) target = $region64
        $region63: #{tpu_custom_call.1} parent=11 // pred_region
          _
        $region64: #{tpu_custom_call.1} parent=11 // pred_fallthru
          _
        // Predicated region
        $region65: #{tpu_custom_call.1} parent=11 // pred_check
          %p675 = pneg %p359
        $region66: #{tpu_custom_call.1} parent=11 // pred_check_branch
          %677 = sbr.rel (%p675) target = $region68
        $region67: #{tpu_custom_call.1} parent=11 // pred_region
          _
        $region68: #{tpu_custom_call.1} parent=11 // pred_fallthru
          _
        // Predicated region
        $region69: #{tpu_custom_call.1} parent=11 // pred_check
          %p678 = pneg %p380
        $region70: #{tpu_custom_call.1} parent=11 // pred_check_branch
          %680 = sbr.rel (%p678) target = $region72
        $region71: #{tpu_custom_call.1} parent=11 // pred_region
          _
        $region72: #{tpu_custom_call.1} parent=11 // pred_fallthru
          _
        // Predicated region
        $region73: #{tpu_custom_call.1} parent=11 // pred_check
          %p681 = pneg %p401
        $region74: #{tpu_custom_call.1} parent=11 // pred_check_branch
          %683 = sbr.rel (%p681) target = $region76
        $region75: #{tpu_custom_call.1} parent=11 // pred_region
          _
        $region76: #{tpu_custom_call.1} parent=11 // pred_fallthru
          _
        // Predicated region
        $region77: #{tpu_custom_call.1} parent=11 // pred_check
          %p684 = pneg %p422
        $region78: #{tpu_custom_call.1} parent=11 // pred_check_branch
          %686 = sbr.rel (%p684) target = $region80
        $region79: #{tpu_custom_call.1} parent=11 // pred_region
          _
        $region80: #{tpu_custom_call.1} parent=11 // pred_fallthru
          _
        // Predicated region
        $region81: #{tpu_custom_call.1} parent=11 // pred_check
          %p687 = pneg %p443
        $region82: #{tpu_custom_call.1} parent=11 // pred_check_branch
          %689 = sbr.rel (%p687) target = $region84
        $region83: #{tpu_custom_call.1} parent=11 // pred_region
          _
        $region84: #{tpu_custom_call.1} parent=11 // pred_fallthru
          _
        // Predicated region
        $region85: #{tpu_custom_call.1} parent=11 // pred_check
          %p690 = pneg %p464
        $region86: #{tpu_custom_call.1} parent=11 // pred_check_branch
          %692 = sbr.rel (%p690) target = $region88
        $region87: #{tpu_custom_call.1} parent=11 // pred_region
          _
        $region88: #{tpu_custom_call.1} parent=11 // pred_fallthru
          _
        // Predicated region
        $region89: #{tpu_custom_call.1} parent=11 // pred_check
          %p693 = pneg %p485
        $region90: #{tpu_custom_call.1} parent=11 // pred_check_branch
          %695 = sbr.rel (%p693) target = $region92
        $region91: #{tpu_custom_call.1} parent=11 // pred_region
          _
        $region92: #{tpu_custom_call.1} parent=11 // pred_fallthru
          _
        // Predicated region
        $region93: #{tpu_custom_call.1} parent=11 // pred_check
          %p696 = pneg %p506
        $region94: #{tpu_custom_call.1} parent=11 // pred_check_branch
          %698 = sbr.rel (%p696) target = $region96
        $region95: #{tpu_custom_call.1} parent=11 // pred_region
          _
        $region96: #{tpu_custom_call.1} parent=11 // pred_fallthru
          _
        // Predicated region
        $region97: #{tpu_custom_call.1} parent=11 // pred_check
          %p699 = pneg %p527
        $region98: #{tpu_custom_call.1} parent=11 // pred_check_branch
          %701 = sbr.rel (%p699) target = $region100
        $region99: #{tpu_custom_call.1} parent=11 // pred_region
          _
        $region100: #{tpu_custom_call.1} parent=11 // pred_fallthru
          _
        // Predicated region
        $region101: #{tpu_custom_call.1} parent=11 // pred_check
          %p702 = pneg %p548
        $region102: #{tpu_custom_call.1} parent=11 // pred_check_branch
          %704 = sbr.rel (%p702) target = $region104
        $region103: #{tpu_custom_call.1} parent=11 // pred_region
          _
        $region104: #{tpu_custom_call.1} parent=11 // pred_fallthru
          _
        // Predicated region
        $region105: #{tpu_custom_call.1} parent=11 // pred_check
          %p705 = pneg %p569
        $region106: #{tpu_custom_call.1} parent=11 // pred_check_branch
          %707 = sbr.rel (%p705) target = $region108
        $region107: #{tpu_custom_call.1} parent=11 // pred_region
          _
        $region108: #{tpu_custom_call.1} parent=11 // pred_fallthru
          _
      $region12: #{tpu_custom_call.1} parent=5 // pred_fallthru
        _
      %p708 = scmp.lt.s32.totalorder %s39, 2
      // Predicated region
      $region109: #{tpu_custom_call.1} parent=5 // pred_check
        %p709 = pneg %p708
      $region110: #{tpu_custom_call.1} parent=5 // pred_check_branch
        %711 = sbr.rel (%p709) target = $region112
      $region111: #{tpu_custom_call.1} parent=5 // pred_region
        // Predicated region
        $region113: #{tpu_custom_call.1} parent=111 // pred_check
          %p712 = pneg %p59
        $region114: #{tpu_custom_call.1} parent=111 // pred_check_branch
          %714 = sbr.rel (%p712) target = $region116
        $region115: #{tpu_custom_call.1} parent=111 // pred_region
          %p715 = scmp.lt.s32.totalorder %s39, 1
          %s716 = scalar_select %p715, %s39, 1
          %s717 = smul.addr %s716, 8
          %s718 = scalar_lea.vmem %s0, %s717
        $region116: #{tpu_custom_call.1} parent=111 // pred_fallthru
          _
      $region112: #{tpu_custom_call.1} parent=5 // pred_fallthru
        _
      %p719 = scmp.le.s32.totalorder 1, %s39
      %p720 = scmp.lt.s32.totalorder %s39, 3
      %p721 = pnand %p719, %p720
      %p722 = pneg %p721
      // Predicated region
      $region117: #{tpu_custom_call.1} parent=5 // pred_check
        _
      $region118: #{tpu_custom_call.1} parent=5 // pred_check_branch
        %724 = sbr.rel (%p721) target = $region120
      $region119: #{tpu_custom_call.1} parent=5 // pred_region
        %s725 = ssub.s32 %s39, 1
        %p726 = scmp.lt.s32.totalorder %s44, 1
        %s727 = scalar_select %p726, %s44, 1
        %s728 = smul.addr %s727, 8
        %s729 = scalar_lea.vmem %s0, %s728
        %p730 = pneg %p65
        %p731 = pneg %p62
        %p732 = pneg %p86
        %p733 = pneg %p83
        %p734 = pneg %p107
        %p735 = pneg %p104
        %p736 = pneg %p128
        %p737 = pneg %p125
        %p738 = pneg %p149
        %p739 = pneg %p146
        %p740 = pneg %p170
        %p741 = pneg %p167
        %p742 = pneg %p191
        %p743 = pneg %p188
        %p744 = pneg %p212
        %p745 = pneg %p209
        %p746 = pneg %p233
        %p747 = pneg %p230
        %p748 = pneg %p254
        %p749 = pneg %p251
        %p750 = pneg %p275
        %p751 = pneg %p272
        %p752 = pneg %p296
        %p753 = pneg %p293
        %p754 = pneg %p317
        %p755 = pneg %p314
        %p756 = pneg %p338
        %p757 = pneg %p335
        %p758 = pneg %p359
        %p759 = pneg %p356
        %p760 = pneg %p380
        %p761 = pneg %p377
        %p762 = pneg %p401
        %p763 = pneg %p398
        %p764 = pneg %p422
        %p765 = pneg %p419
        %p766 = pneg %p443
        %p767 = pneg %p440
        %p768 = pneg %p464
        %p769 = pneg %p461
        %p770 = pneg %p485
        %p771 = pneg %p482
        %p772 = pneg %p506
        %p773 = pneg %p503
        %p774 = pneg %p527
        %p775 = pneg %p524
        %p776 = pneg %p548
        %p777 = pneg %p545
        %p778 = pneg %p569
        %p779 = pneg %p566
        %p780 = pneg %p595
        %p781 = pneg %p592
        %s782 = sand.u32 %s582, 1
        %s783 = scalar_lea.sflag [#allocation3], %s782
        %s784 = sand.u32 %s582, 1
        %s785 = smul.addr %s784, 8
        %s786 = scalar_lea.vmem [#allocation2], %s785
        %p787 = pneg %p621
        %p788 = pneg %p618
        %s789 = sand.u32 %s608, 1
        %s790 = scalar_lea.sflag [#allocation5], %s789
        %s791 = sand.u32 %s608, 1
        %s792 = scalar_lea.vmem [#allocation4], %s791
        %p793 = scmp.lt.s32.totalorder %s44, 1
        %s794 = scalar_select %p793, %s44, 1
        %s795 = smul.addr %s794, 8
        %s796 = scalar_lea.vmem %s0, %s795
        %v798 = vld [vmem:[%s796] sm:$0xff]
        %v799 = vld [vmem:[%s1] sm:$0x1]
        %v800 = vld [vmem:[%s2] sm:$0x1]
        %vm801 = vcmask 261120
        %v802 = vsel %vm801, %v798, 0.0
        %803 = vadd.xlane.f32.xlu0 %v802
        %v804 = vpop.xlane.xlu0 %803
        %v805 = vrcp.pop 32.0
        %v806 = vmul.f32 %v804, %v805
        %v807 = vsub.f32 %v798, %v806
        %v808 = vmul.f32 %v807, %v807
        %v809 = vsel %vm801, %v808, 0.0
        %810 = vadd.xlane.f32.xlu0 %v809
        %v811 = vpop.xlane.xlu0 %810
        %v812 = vmul.f32 %v811, %v805
        %v813 = vadd.f32 %v812, 1e-06
        %v814 = vrsqrt.pop %v813
        %v815 = vmul.f32 %v807, %v814
        %v817 = vlaneseq
        %v818 = vshrl.u32 %v817, 7
        %v819 = vsub.s32 0, %v818
        %v820 = vrot.slane %v799, %v819
        %v822 = vmul.f32 %v815, %v820
        %v824 = vlaneseq
        %v825 = vshrl.u32 %v824, 7
        %v826 = vsub.s32 0, %v825
        %v827 = vrot.slane %v800, %v826
        %v829 = vadd.f32 %v822, %v827
        %v830 = vpack.c.bf16 %v829, %v829
        %v831 = vld [vmem:[%s4] sm:$0x1]
        %v832 = vld [vmem:[%s3] sm:$0xf]
        %v833 = vld [vmem:[%s3 + $0x4] sm:$0xf]
        %v834 = vld [vmem:[%s3 + $0x8] sm:$0xf]
        %v835 = vld [vmem:[%s3 + $0xc] sm:$0xf]
        %v837 = vlaneseq
        %v838 = vshrl.u32 %v837, 7
        %v839 = vsub.s32 0, %v838
        %v840 = vrot.slane %v831, %v839
        %v846 = vunpack.c.l.b16 %v832
        %v847 = vunpack.c.l.b16 %v833
        %v848 = vunpack.c.l.b16 %v834
        %v849 = vunpack.c.l.b16 %v835
        %v850 = vpack.c.b16 %v847, %v846
        %v851 = vpack.c.b16 %v849, %v848
        %v855 = vsel %vm801, %v830, 0
        %857 = vmatprep.subr.bf16.mxu0 0
        %858 = vmatpush1.bf16.msra.mxu0 %v850
        %859 = vmatprep.subr.bf16.mxu0 0
        %860 = vmatpush1.bf16.msra.mxu0 %v851
        %861 = vmatprep.subr.bf16.mxu0 0
        %862 = vmatpush1.bf16.msra.mxu0 0
        %863 = vmatprep.subr.bf16.mxu0 0
        %864 = vmatpush1.bf16.msra.mxu0 0
        %865 = vmatprep.subr.bf16.mxu0 0
        %866 = vmatpush1.bf16.msra.mxu0 0
        %867 = vmatprep.subr.bf16.mxu0 0
        %868 = vmatpush1.bf16.msra.mxu0 0
        %869 = vmatprep.subr.bf16.mxu0 0
        %870 = vmatpush1.bf16.msra.mxu0 0
        %871 = vmatprep.subr.bf16.mxu0 0
        %872 = vmatpush1.bf16.msra.mxu0 0
        %873 = vmatprep.subr.bf16.mxu0 0
        %874 = vmatpush1.bf16.msra.mxu0 0
        %875 = vmatprep.subr.bf16.mxu0 0
        %876 = vmatpush1.bf16.msra.mxu0 0
        %877 = vmatprep.subr.bf16.mxu0 0
        %878 = vmatpush1.bf16.msra.mxu0 0
        %879 = vmatprep.subr.bf16.mxu0 0
        %880 = vmatpush1.bf16.msra.mxu0 0
        %881 = vmatprep.subr.bf16.mxu0 0
        %882 = vmatpush1.bf16.msra.mxu0 0
        %883 = vmatprep.subr.bf16.mxu0 0
        %884 = vmatpush1.bf16.msra.mxu0 0
        %885 = vmatprep.subr.bf16.mxu0 0
        %886 = vmatpush1.bf16.msra.mxu0 0
        %887 = vmatprep.subr.bf16.mxu0 0
        %888 = vmatpush1.bf16.msra.mxu0 0
        %889 = vmatprep.mubr.bf16.mxu0 0
        %890 = vmatmul.mubr.bf16.gmra.mrb[0].mxu0 %v855
        %v891 = vpop.f32.mrb[0].mxu0
        %v892 = vadd.f32 %v840, %v891
        %v893 = vpop.f32.mrb[0].mxu0
        %v894 = vpop.f32.mrb[0].mxu0
        %v895 = vpop.f32.mrb[0].mxu0
        %896 = vdwg.mxu0
        %v897 = vmul.f32 %v892, 0.25
        %898 = vrot.lane.b32.xlu0 %v850, 96
        %v899 = vpop.permute.xlu0 %898
        %900 = vrot.lane.b32.xlu0 %v851, 96
        %v901 = vpop.permute.xlu0 %900
        %904 = vrot.lane.b32.xlu0 %v840, 96
        %v905 = vpop.permute.xlu0 %904
        %907 = vmatprep.subr.bf16.mxu0 0
        %908 = vmatpush1.bf16.msra.mxu0 %v899
        %909 = vmatprep.subr.bf16.mxu0 0
        %910 = vmatpush1.bf16.msra.mxu0 %v901
        %911 = vmatprep.subr.bf16.mxu0 0
        %912 = vmatpush1.bf16.msra.mxu0 0
        %913 = vmatprep.subr.bf16.mxu0 0
        %914 = vmatpush1.bf16.msra.mxu0 0
        %915 = vmatprep.subr.bf16.mxu0 0
        %916 = vmatpush1.bf16.msra.mxu0 0
        %917 = vmatprep.subr.bf16.mxu0 0
        %918 = vmatpush1.bf16.msra.mxu0 0
        %919 = vmatprep.subr.bf16.mxu0 0
        %920 = vmatpush1.bf16.msra.mxu0 0
        %921 = vmatprep.subr.bf16.mxu0 0
        %922 = vmatpush1.bf16.msra.mxu0 0
        %923 = vmatprep.subr.bf16.mxu0 0
        %924 = vmatpush1.bf16.msra.mxu0 0
        %925 = vmatprep.subr.bf16.mxu0 0
        %926 = vmatpush1.bf16.msra.mxu0 0
        %927 = vmatprep.subr.bf16.mxu0 0
        %928 = vmatpush1.bf16.msra.mxu0 0
        %929 = vmatprep.subr.bf16.mxu0 0
        %930 = vmatpush1.bf16.msra.mxu0 0
        %931 = vmatprep.subr.bf16.mxu0 0
        %932 = vmatpush1.bf16.msra.mxu0 0
        %933 = vmatprep.subr.bf16.mxu0 0
        %934 = vmatpush1.bf16.msra.mxu0 0
        %935 = vmatprep.subr.bf16.mxu0 0
        %936 = vmatpush1.bf16.msra.mxu0 0
        %937 = vmatprep.subr.bf16.mxu0 0
        %938 = vmatpush1.bf16.msra.mxu0 0
        %939 = vmatprep.mubr.bf16.mxu0 0
        %940 = vmatmul.mubr.bf16.gmra.mrb[0].mxu0 %v855
        %v941 = vpop.f32.mrb[0].mxu0
        %v942 = vadd.f32 %v905, %v941
        %v943 = vpop.f32.mrb[0].mxu0
        %v944 = vpop.f32.mrb[0].mxu0
        %v945 = vpop.f32.mrb[0].mxu0
        %946 = vdwg.mxu0
        %947 = vrot.lane.b32.xlu0 %v850, 64
        %v948 = vpop.permute.xlu0 %947
        %949 = vrot.lane.b32.xlu0 %v851, 64
        %v950 = vpop.permute.xlu0 %949
        %953 = vrot.lane.b32.xlu0 %v840, 64
        %v954 = vpop.permute.xlu0 %953
        %956 = vmatprep.subr.bf16.mxu0 0
        %957 = vmatpush1.bf16.msra.mxu0 %v948
        %958 = vmatprep.subr.bf16.mxu0 0
        %959 = vmatpush1.bf16.msra.mxu0 %v950
        %960 = vmatprep.subr.bf16.mxu0 0
        %961 = vmatpush1.bf16.msra.mxu0 0
        %962 = vmatprep.subr.bf16.mxu0 0
        %963 = vmatpush1.bf16.msra.mxu0 0
        %964 = vmatprep.subr.bf16.mxu0 0
        %965 = vmatpush1.bf16.msra.mxu0 0
        %966 = vmatprep.subr.bf16.mxu0 0
        %967 = vmatpush1.bf16.msra.mxu0 0
        %968 = vmatprep.subr.bf16.mxu0 0
        %969 = vmatpush1.bf16.msra.mxu0 0
        %970 = vmatprep.subr.bf16.mxu0 0
        %971 = vmatpush1.bf16.msra.mxu0 0
        %972 = vmatprep.subr.bf16.mxu0 0
        %973 = vmatpush1.bf16.msra.mxu0 0
        %974 = vmatprep.subr.bf16.mxu0 0
        %975 = vmatpush1.bf16.msra.mxu0 0
        %976 = vmatprep.subr.bf16.mxu0 0
        %977 = vmatpush1.bf16.msra.mxu0 0
        %978 = vmatprep.subr.bf16.mxu0 0
        %979 = vmatpush1.bf16.msra.mxu0 0
        %980 = vmatprep.subr.bf16.mxu0 0
        %981 = vmatpush1.bf16.msra.mxu0 0
        %982 = vmatprep.subr.bf16.mxu0 0
        %983 = vmatpush1.bf16.msra.mxu0 0
        %984 = vmatprep.subr.bf16.mxu0 0
        %985 = vmatpush1.bf16.msra.mxu0 0
        %986 = vmatprep.subr.bf16.mxu0 0
        %987 = vmatpush1.bf16.msra.mxu0 0
        %988 = vmatprep.mubr.bf16.mxu0 0
        %989 = vmatmul.mubr.bf16.gmra.mrb[0].mxu0 %v855
        %v990 = vpop.f32.mrb[0].mxu0
        %v991 = vadd.f32 %v954, %v990
        %v992 = vpop.f32.mrb[0].mxu0
        %v993 = vpop.f32.mrb[0].mxu0
        %v994 = vpop.f32.mrb[0].mxu0
        %995 = vdwg.mxu0
        %v996 = vpack.c.bf16 %v897, %v897
        %v997 = vpack.c.bf16 %v942, %v942
        %v998 = vpack.c.bf16 %v991, %v991
        %vm999 = vcmask 130048
        %v1001 = vsel %vm999, %v996, 0
        %v1004 = vsel %vm999, %v997, 0
        %1006 = vmatprep.subr.bf16.mxu0 0
        %1007 = vmatpush1.bf16.xpose.msra.mxu0 %v1004
        %1008 = vmatprep.subr.bf16.mxu0 0
        %1009 = vmatpush1.bf16.xpose.msra.mxu0 0
        %1010 = vmatprep.subr.bf16.mxu0 0
        %1011 = vmatpush1.bf16.xpose.msra.mxu0 0
        %1012 = vmatprep.subr.bf16.mxu0 0
        %1013 = vmatpush1.bf16.xpose.msra.mxu0 0
        %1014 = vmatprep.subr.bf16.mxu0 0
        %1015 = vmatpush1.bf16.xpose.msra.mxu0 0
        %1016 = vmatprep.subr.bf16.mxu0 0
        %1017 = vmatpush1.bf16.xpose.msra.mxu0 0
        %1018 = vmatprep.subr.bf16.mxu0 0
        %1019 = vmatpush1.bf16.xpose.msra.mxu0 0
        %1020 = vmatprep.subr.bf16.mxu0 0
        %1021 = vmatpush1.bf16.xpose.msra.mxu0 0
        %1022 = vmatprep.subr.bf16.mxu0 0
        %1023 = vmatpush1.bf16.xpose.msra.mxu0 0
        %1024 = vmatprep.subr.bf16.mxu0 0
        %1025 = vmatpush1.bf16.xpose.msra.mxu0 0
        %1026 = vmatprep.subr.bf16.mxu0 0
        %1027 = vmatpush1.bf16.xpose.msra.mxu0 0
        %1028 = vmatprep.subr.bf16.mxu0 0
        %1029 = vmatpush1.bf16.xpose.msra.mxu0 0
        %1030 = vmatprep.subr.bf16.mxu0 0
        %1031 = vmatpush1.bf16.xpose.msra.mxu0 0
        %1032 = vmatprep.subr.bf16.mxu0 0
        %1033 = vmatpush1.bf16.xpose.msra.mxu0 0
        %1034 = vmatprep.subr.bf16.mxu0 0
        %1035 = vmatpush1.bf16.xpose.msra.mxu0 0
        %1036 = vmatprep.subr.bf16.mxu0 0
        %1037 = vmatpush1.bf16.xpose.msra.mxu0 0
        %1038 = vmatprep.mubr.bf16.mxu0 0
        %1039 = vmatmul.mubr.bf16.gmra.mrb[0].mxu0 %v1001
        %v1040 = vpop.f32.mrb[0].mxu0
        %v1041 = vadd.f32 0.0, %v1040
        %v1042 = vpop.f32.mrb[0].mxu0
        %v1043 = vpop.f32.mrb[0].mxu0
        %v1044 = vpop.f32.mrb[0].mxu0
        %1045 = vdwg.mxu0
        %vm1046 = vcmask 64512
        %v1047 = vsel %vm1046, %v1041, -inf
        %1048 = vmax.xlane.f32.xlu0 %v1047
        %v1049 = vpop.xlane.xlu0 %1048
        %v1050 = vsub.f32 %v1041, %v1049
        %v1051 = vmul.f32 %v1050, 1.442695
        %v1052 = vpow.pop %v1051
        %v1053 = vsel %vm1046, %v1052, 0.0
        %1054 = vadd.xlane.f32.xlu0 %v1053
        %v1055 = vpop.xlane.xlu0 %1054
        %v1056 = vrcp.pop %v1055
        %v1057 = vmul.f32 %v1052, %v1056
        %v1058 = vpack.c.bf16 %v1057, %v1057
        %v1060 = vsel %vm1046, %v1058, 0
        %vm1062 = vcmask 1043456
        %v1064 = vsel %vm1062, %v998, 0
        %1066 = vmatprep.subr.bf16.mxu0 0
        %1067 = vmatpush1.bf16.msra.mxu0 %v1064
        %1068 = vmatprep.subr.bf16.mxu0 0
        %1069 = vmatpush1.bf16.msra.mxu0 0
        %1070 = vmatprep.subr.bf16.mxu0 0
        %1071 = vmatpush1.bf16.msra.mxu0 0
        %1072 = vmatprep.subr.bf16.mxu0 0
        %1073 = vmatpush1.bf16.msra.mxu0 0
        %1074 = vmatprep.subr.bf16.mxu0 0
        %1075 = vmatpush1.bf16.msra.mxu0 0
        %1076 = vmatprep.subr.bf16.mxu0 0
        %1077 = vmatpush1.bf16.msra.mxu0 0
        %1078 = vmatprep.subr.bf16.mxu0 0
        %1079 = vmatpush1.bf16.msra.mxu0 0
        %1080 = vmatprep.subr.bf16.mxu0 0
        %1081 = vmatpush1.bf16.msra.mxu0 0
        %1082 = vmatprep.subr.bf16.mxu0 0
        %1083 = vmatpush1.bf16.msra.mxu0 0
        %1084 = vmatprep.subr.bf16.mxu0 0
        %1085 = vmatpush1.bf16.msra.mxu0 0
        %1086 = vmatprep.subr.bf16.mxu0 0
        %1087 = vmatpush1.bf16.msra.mxu0 0
        %1088 = vmatprep.subr.bf16.mxu0 0
        %1089 = vmatpush1.bf16.msra.mxu0 0
        %1090 = vmatprep.subr.bf16.mxu0 0
        %1091 = vmatpush1.bf16.msra.mxu0 0
        %1092 = vmatprep.subr.bf16.mxu0 0
        %1093 = vmatpush1.bf16.msra.mxu0 0
        %1094 = vmatprep.subr.bf16.mxu0 0
        %1095 = vmatpush1.bf16.msra.mxu0 0
        %1096 = vmatprep.subr.bf16.mxu0 0
        %1097 = vmatpush1.bf16.msra.mxu0 0
        %1098 = vmatprep.mubr.bf16.mxu0 0
        %1099 = vmatmul.mubr.bf16.gmra.mrb[0].mxu0 %v1060
        %v1100 = vpop.f32.mrb[0].mxu0
        %v1101 = vadd.f32 0.0, %v1100
        %v1102 = vpop.f32.mrb[0].mxu0
        %v1103 = vpop.f32.mrb[0].mxu0
        %v1104 = vpop.f32.mrb[0].mxu0
        %1105 = vdwg.mxu0
        %v1106 = vpack.c.bf16 %v1101, %v1101
        %v1107 = vld [vmem:[%s5] sm:$0xf]
        %v1108 = vld [vmem:[%s5 + $0x4] sm:$0xf]
        %1110 = vrot.lane.b32.xlu0 %v996, 112
        %v1111 = vpop.permute.xlu0 %1110
        %1113 = vrot.lane.b32.xlu0 %v997, 112
        %v1114 = vpop.permute.xlu0 %1113
        %v1116 = vsel %vm999, %v1111, 0
        %v1119 = vsel %vm999, %v1114, 0
        %1121 = vmatprep.subr.bf16.mxu0 0
        %1122 = vmatpush1.bf16.xpose.msra.mxu0 %v1119
        %1123 = vmatprep.subr.bf16.mxu0 0
        %1124 = vmatpush1.bf16.xpose.msra.mxu0 0
        %1125 = vmatprep.subr.bf16.mxu0 0
        %1126 = vmatpush1.bf16.xpose.msra.mxu0 0
        %1127 = vmatprep.subr.bf16.mxu0 0
        %1128 = vmatpush1.bf16.xpose.msra.mxu0 0
        %1129 = vmatprep.subr.bf16.mxu0 0
        %1130 = vmatpush1.bf16.xpose.msra.mxu0 0
        %1131 = vmatprep.subr.bf16.mxu0 0
        %1132 = vmatpush1.bf16.xpose.msra.mxu0 0
        %1133 = vmatprep.subr.bf16.mxu0 0
        %1134 = vmatpush1.bf16.xpose.msra.mxu0 0
        %1135 = vmatprep.subr.bf16.mxu0 0
        %1136 = vmatpush1.bf16.xpose.msra.mxu0 0
        %1137 = vmatprep.subr.bf16.mxu0 0
        %1138 = vmatpush1.bf16.xpose.msra.mxu0 0
        %1139 = vmatprep.subr.bf16.mxu0 0
        %1140 = vmatpush1.bf16.xpose.msra.mxu0 0
        %1141 = vmatprep.subr.bf16.mxu0 0
        %1142 = vmatpush1.bf16.xpose.msra.mxu0 0
        %1143 = vmatprep.subr.bf16.mxu0 0
        %1144 = vmatpush1.bf16.xpose.msra.mxu0 0
        %1145 = vmatprep.subr.bf16.mxu0 0
        %1146 = vmatpush1.bf16.xpose.msra.mxu0 0
        %1147 = vmatprep.subr.bf16.mxu0 0
        %1148 = vmatpush1.bf16.xpose.msra.mxu0 0
        %1149 = vmatprep.subr.bf16.mxu0 0
        %1150 = vmatpush1.bf16.xpose.msra.mxu0 0
        %1151 = vmatprep.subr.bf16.mxu0 0
        %1152 = vmatpush1.bf16.xpose.msra.mxu0 0
        %1153 = vmatprep.mubr.bf16.mxu0 0
        %1154 = vmatmul.mubr.bf16.gmra.mrb[0].mxu0 %v1116
        %v1155 = vpop.f32.mrb[0].mxu0
        %v1156 = vadd.f32 0.0, %v1155
        %v1157 = vpop.f32.mrb[0].mxu0
        %v1158 = vpop.f32.mrb[0].mxu0
        %v1159 = vpop.f32.mrb[0].mxu0
        %1160 = vdwg.mxu0
        %v1161 = vsel %vm1046, %v1156, -inf
        %1162 = vmax.xlane.f32.xlu0 %v1161
        %v1163 = vpop.xlane.xlu0 %1162
        %v1164 = vsub.f32 %v1156, %v1163
        %v1165 = vmul.f32 %v1164, 1.442695
        %v1166 = vpow.pop %v1165
        %v1167 = vsel %vm1046, %v1166, 0.0
        %1168 = vadd.xlane.f32.xlu0 %v1167
        %v1169 = vpop.xlane.xlu0 %1168
        %v1170 = vrcp.pop %v1169
        %v1171 = vmul.f32 %v1166, %v1170
        %v1172 = vpack.c.bf16 %v1171, %v1171
        %1174 = vrot.lane.b32.xlu0 %v998, 112
        %v1175 = vpop.permute.xlu0 %1174
        %v1177 = vsel %vm1046, %v1172, 0
        %v1180 = vsel %vm1062, %v1175, 0
        %1182 = vmatprep.subr.bf16.mxu0 0
        %1183 = vmatpush1.bf16.msra.mxu0 %v1180
        %1184 = vmatprep.subr.bf16.mxu0 0
        %1185 = vmatpush1.bf16.msra.mxu0 0
        %1186 = vmatprep.subr.bf16.mxu0 0
        %1187 = vmatpush1.bf16.msra.mxu0 0
        %1188 = vmatprep.subr.bf16.mxu0 0
        %1189 = vmatpush1.bf16.msra.mxu0 0
        %1190 = vmatprep.subr.bf16.mxu0 0
        %1191 = vmatpush1.bf16.msra.mxu0 0
        %1192 = vmatprep.subr.bf16.mxu0 0
        %1193 = vmatpush1.bf16.msra.mxu0 0
        %1194 = vmatprep.subr.bf16.mxu0 0
        %1195 = vmatpush1.bf16.msra.mxu0 0
        %1196 = vmatprep.subr.bf16.mxu0 0
        %1197 = vmatpush1.bf16.msra.mxu0 0
        %1198 = vmatprep.subr.bf16.mxu0 0
        %1199 = vmatpush1.bf16.msra.mxu0 0
        %1200 = vmatprep.subr.bf16.mxu0 0
        %1201 = vmatpush1.bf16.msra.mxu0 0
        %1202 = vmatprep.subr.bf16.mxu0 0
        %1203 = vmatpush1.bf16.msra.mxu0 0
        %1204 = vmatprep.subr.bf16.mxu0 0
        %1205 = vmatpush1.bf16.msra.mxu0 0
        %1206 = vmatprep.subr.bf16.mxu0 0
        %1207 = vmatpush1.bf16.msra.mxu0 0
        %1208 = vmatprep.subr.bf16.mxu0 0
        %1209 = vmatpush1.bf16.msra.mxu0 0
        %1210 = vmatprep.subr.bf16.mxu0 0
        %1211 = vmatpush1.bf16.msra.mxu0 0
        %1212 = vmatprep.subr.bf16.mxu0 0
        %1213 = vmatpush1.bf16.msra.mxu0 0
        %1214 = vmatprep.mubr.bf16.mxu0 0
        %1215 = vmatmul.mubr.bf16.gmra.mrb[0].mxu0 %v1177
        %v1216 = vpop.f32.mrb[0].mxu0
        %v1217 = vadd.f32 0.0, %v1216
        %v1218 = vpop.f32.mrb[0].mxu0
        %v1219 = vpop.f32.mrb[0].mxu0
        %v1220 = vpop.f32.mrb[0].mxu0
        %1221 = vdwg.mxu0
        %v1222 = vpack.c.bf16 %v1217, %v1217
        %v1223 = vld [vmem:[%s5 + $0x8] sm:$0xf]
        %v1224 = vld [vmem:[%s5 + $0xc] sm:$0xf]
        %v1227 = vunpack.c.l.b16 %v1223
        %v1228 = vunpack.c.l.b16 %v1224
        %v1229 = vpack.c.b16 %v1228, %v1227
        %v1232 = vsel %vm999, %v1222, 0
        %1234 = vmatprep.subr.bf16.mxu0 0
        %1235 = vmatpush1.bf16.msra.mxu0 %v1229
        %1236 = vmatprep.subr.bf16.mxu0 0
        %1237 = vmatpush1.bf16.msra.mxu0 0
        %1238 = vmatprep.subr.bf16.mxu0 0
        %1239 = vmatpush1.bf16.msra.mxu0 0
        %1240 = vmatprep.subr.bf16.mxu0 0
        %1241 = vmatpush1.bf16.msra.mxu0 0
        %1242 = vmatprep.subr.bf16.mxu0 0
        %1243 = vmatpush1.bf16.msra.mxu0 0
        %1244 = vmatprep.subr.bf16.mxu0 0
        %1245 = vmatpush1.bf16.msra.mxu0 0
        %1246 = vmatprep.subr.bf16.mxu0 0
        %1247 = vmatpush1.bf16.msra.mxu0 0
        %1248 = vmatprep.subr.bf16.mxu0 0
        %1249 = vmatpush1.bf16.msra.mxu0 0
        %1250 = vmatprep.subr.bf16.mxu0 0
        %1251 = vmatpush1.bf16.msra.mxu0 0
        %1252 = vmatprep.subr.bf16.mxu0 0
        %1253 = vmatpush1.bf16.msra.mxu0 0
        %1254 = vmatprep.subr.bf16.mxu0 0
        %1255 = vmatpush1.bf16.msra.mxu0 0
        %1256 = vmatprep.subr.bf16.mxu0 0
        %1257 = vmatpush1.bf16.msra.mxu0 0
        %1258 = vmatprep.subr.bf16.mxu0 0
        %1259 = vmatpush1.bf16.msra.mxu0 0
        %1260 = vmatprep.subr.bf16.mxu0 0
        %1261 = vmatpush1.bf16.msra.mxu0 0
        %1262 = vmatprep.subr.bf16.mxu0 0
        %1263 = vmatpush1.bf16.msra.mxu0 0
        %1264 = vmatprep.subr.bf16.mxu0 0
        %1265 = vmatpush1.bf16.msra.mxu0 0
        %1266 = vmatprep.mubr.bf16.mxu0 0
        %1267 = vmatmul.mubr.bf16.gmra.mrb[0].mxu0 %v1232
        %v1268 = vpop.f32.mrb[0].mxu0
        %v1269 = vadd.f32 0.0, %v1268
        %v1270 = vpop.f32.mrb[0].mxu0
        %v1271 = vpop.f32.mrb[0].mxu0
        %v1272 = vpop.f32.mrb[0].mxu0
        %1273 = vdwg.mxu0
        %v1276 = vunpack.c.l.b16 %v1107
        %v1277 = vunpack.c.l.b16 %v1108
        %v1278 = vpack.c.b16 %v1277, %v1276
        %v1281 = vsel %vm999, %v1106, 0
        %1283 = vmatprep.subr.bf16.mxu0 0
        %1284 = vmatpush1.bf16.msra.mxu0 %v1278
        %1285 = vmatprep.subr.bf16.mxu0 0
        %1286 = vmatpush1.bf16.msra.mxu0 0
        %1287 = vmatprep.subr.bf16.mxu0 0
        %1288 = vmatpush1.bf16.msra.mxu0 0
        %1289 = vmatprep.subr.bf16.mxu0 0
        %1290 = vmatpush1.bf16.msra.mxu0 0
        %1291 = vmatprep.subr.bf16.mxu0 0
        %1292 = vmatpush1.bf16.msra.mxu0 0
        %1293 = vmatprep.subr.bf16.mxu0 0
        %1294 = vmatpush1.bf16.msra.mxu0 0
        %1295 = vmatprep.subr.bf16.mxu0 0
        %1296 = vmatpush1.bf16.msra.mxu0 0
        %1297 = vmatprep.subr.bf16.mxu0 0
        %1298 = vmatpush1.bf16.msra.mxu0 0
        %1299 = vmatprep.subr.bf16.mxu0 0
        %1300 = vmatpush1.bf16.msra.mxu0 0
        %1301 = vmatprep.subr.bf16.mxu0 0
        %1302 = vmatpush1.bf16.msra.mxu0 0
        %1303 = vmatprep.subr.bf16.mxu0 0
        %1304 = vmatpush1.bf16.msra.mxu0 0
        %1305 = vmatprep.subr.bf16.mxu0 0
        %1306 = vmatpush1.bf16.msra.mxu0 0
        %1307 = vmatprep.subr.bf16.mxu0 0
        %1308 = vmatpush1.bf16.msra.mxu0 0
        %1309 = vmatprep.subr.bf16.mxu0 0
        %1310 = vmatpush1.bf16.msra.mxu0 0
        %1311 = vmatprep.subr.bf16.mxu0 0
        %1312 = vmatpush1.bf16.msra.mxu0 0
        %1313 = vmatprep.subr.bf16.mxu0 0
        %1314 = vmatpush1.bf16.msra.mxu0 0
        %1315 = vmatprep.mubr.bf16.mxu0 0
        %1316 = vmatmul.mubr.bf16.gmra.mrb[0].mxu0 %v1281
        %v1317 = vpop.f32.mrb[0].mxu0
        %v1318 = vadd.f32 %v1269, %v1317
        %v1319 = vpop.f32.mrb[0].mxu0
        %v1320 = vpop.f32.mrb[0].mxu0
        %v1321 = vpop.f32.mrb[0].mxu0
        %1322 = vdwg.mxu0
        %v1323 = vadd.f32 %v798, %v1318
        %v1324 = vld [vmem:[%s6] sm:$0x1]
        %v1326 = vlaneseq
        %v1327 = vshrl.u32 %v1326, 7
        %v1328 = vsub.s32 0, %v1327
        %v1329 = vrot.slane %v1324, %v1328
        %v1331 = vadd.f32 %v1323, %v1329
        %v1332 = vld [vmem:[%s7] sm:$0x1]
        %v1333 = vld [vmem:[%s8] sm:$0x1]
        %v1334 = vsel %vm801, %v1331, 0.0
        %1335 = vadd.xlane.f32.xlu0 %v1334
        %v1336 = vpop.xlane.xlu0 %1335
        %v1337 = vmul.f32 %v1336, %v805
        %v1338 = vsub.f32 %v1331, %v1337
        %v1339 = vmul.f32 %v1338, %v1338
        %v1340 = vsel %vm801, %v1339, 0.0
        %1341 = vadd.xlane.f32.xlu0 %v1340
        %v1342 = vpop.xlane.xlu0 %1341
        %v1343 = vmul.f32 %v1342, %v805
        %v1344 = vadd.f32 %v1343, 1e-06
        %v1345 = vrsqrt.pop %v1344
        %v1346 = vmul.f32 %v1338, %v1345
        %v1348 = vlaneseq
        %v1349 = vshrl.u32 %v1348, 7
        %v1350 = vsub.s32 0, %v1349
        %v1351 = vrot.slane %v1332, %v1350
        %v1353 = vmul.f32 %v1346, %v1351
        %v1355 = vlaneseq
        %v1356 = vshrl.u32 %v1355, 7
        %v1357 = vsub.s32 0, %v1356
        %v1358 = vrot.slane %v1333, %v1357
        %v1360 = vadd.f32 %v1353, %v1358
        %v1361 = vpack.c.bf16 %v1360, %v1360
        %v1362 = vld [vmem:[%s10] sm:$0x1]
        %v1363 = vld [vmem:[%s12] sm:$0x1]
        %v1364 = vld [vmem:[%s9] sm:$0xf]
        %v1365 = vld [vmem:[%s9 + $0x4] sm:$0xf]
        %v1366 = vld [vmem:[%s9 + $0x8] sm:$0xf]
        %v1367 = vld [vmem:[%s9 + $0xc] sm:$0xf]
        %v1369 = vlaneseq
        %v1370 = vshrl.u32 %v1369, 7
        %v1371 = vsub.s32 0, %v1370
        %v1372 = vrot.slane %v1362, %v1371
        %v1378 = vunpack.c.l.b16 %v1364
        %v1379 = vunpack.c.l.b16 %v1365
        %v1380 = vunpack.c.l.b16 %v1366
        %v1381 = vunpack.c.l.b16 %v1367
        %v1382 = vpack.c.b16 %v1379, %v1378
        %v1383 = vpack.c.b16 %v1381, %v1380
        %v1387 = vsel %vm801, %v1361, 0
        %1389 = vmatprep.subr.bf16.mxu0 0
        %1390 = vmatpush1.bf16.msra.mxu0 %v1382
        %1391 = vmatprep.subr.bf16.mxu0 0
        %1392 = vmatpush1.bf16.msra.mxu0 %v1383
        %1393 = vmatprep.subr.bf16.mxu0 0
        %1394 = vmatpush1.bf16.msra.mxu0 0
        %1395 = vmatprep.subr.bf16.mxu0 0
        %1396 = vmatpush1.bf16.msra.mxu0 0
        %1397 = vmatprep.subr.bf16.mxu0 0
        %1398 = vmatpush1.bf16.msra.mxu0 0
        %1399 = vmatprep.subr.bf16.mxu0 0
        %1400 = vmatpush1.bf16.msra.mxu0 0
        %1401 = vmatprep.subr.bf16.mxu0 0
        %1402 = vmatpush1.bf16.msra.mxu0 0
        %1403 = vmatprep.subr.bf16.mxu0 0
        %1404 = vmatpush1.bf16.msra.mxu0 0
        %1405 = vmatprep.subr.bf16.mxu0 0
        %1406 = vmatpush1.bf16.msra.mxu0 0
        %1407 = vmatprep.subr.bf16.mxu0 0
        %1408 = vmatpush1.bf16.msra.mxu0 0
        %1409 = vmatprep.subr.bf16.mxu0 0
        %1410 = vmatpush1.bf16.msra.mxu0 0
        %1411 = vmatprep.subr.bf16.mxu0 0
        %1412 = vmatpush1.bf16.msra.mxu0 0
        %1413 = vmatprep.subr.bf16.mxu0 0
        %1414 = vmatpush1.bf16.msra.mxu0 0
        %1415 = vmatprep.subr.bf16.mxu0 0
        %1416 = vmatpush1.bf16.msra.mxu0 0
        %1417 = vmatprep.subr.bf16.mxu0 0
        %1418 = vmatpush1.bf16.msra.mxu0 0
        %1419 = vmatprep.subr.bf16.mxu0 0
        %1420 = vmatpush1.bf16.msra.mxu0 0
        %1421 = vmatprep.mubr.bf16.mxu0 0
        %1422 = vmatmul.mubr.bf16.gmra.mrb[0].mxu0 %v1387
        %v1423 = vpop.f32.mrb[0].mxu0
        %v1424 = vadd.f32 %v1372, %v1423
        %v1425 = vpop.f32.mrb[0].mxu0
        %v1426 = vpop.f32.mrb[0].mxu0
        %v1427 = vpop.f32.mrb[0].mxu0
        %1428 = vdwg.mxu0
        %v1429 = vmul.f32 %v1424, 0.5
        %v1430 = vmul.f32 %v1424, 0.044715
        %v1431 = vmul.f32 %v1430, %v1424
        %v1432 = vmul.f32 %v1431, %v1424
        %v1433 = vadd.f32 %v1424, %v1432
        %v1434 = vmul.f32 %v1433, 0.7978846
        %v1435 = vtanh.pop %v1434
        %v1436 = vadd.f32 %v1435, 1.0
        %v1437 = vmul.f32 %v1429, %v1436
        %v1438 = vpack.c.bf16 %v1437, %v1437
        %v1439 = vld [vmem:[%s11] sm:$0xf]
        %v1440 = vld [vmem:[%s11 + $0x4] sm:$0xf]
        %v1441 = vld [vmem:[%s11 + $0x8] sm:$0xf]
        %v1442 = vld [vmem:[%s11 + $0xc] sm:$0xf]
        %v1443 = vld [vmem:[%s11 + $0x10] sm:$0xf]
        %v1444 = vld [vmem:[%s11 + $0x14] sm:$0xf]
        %v1445 = vld [vmem:[%s11 + $0x18] sm:$0xf]
        %v1446 = vld [vmem:[%s11 + $0x1c] sm:$0xf]
        %v1447 = vld [vmem:[%s11 + $0x20] sm:$0xf]
        %v1448 = vld [vmem:[%s11 + $0x24] sm:$0xf]
        %v1449 = vld [vmem:[%s11 + $0x28] sm:$0xf]
        %v1450 = vld [vmem:[%s11 + $0x2c] sm:$0xf]
        %v1451 = vld [vmem:[%s11 + $0x30] sm:$0xf]
        %v1452 = vld [vmem:[%s11 + $0x34] sm:$0xf]
        %v1453 = vld [vmem:[%s11 + $0x38] sm:$0xf]
        %v1454 = vld [vmem:[%s11 + $0x3c] sm:$0xf]
        %v1456 = vlaneseq
        %v1457 = vshrl.u32 %v1456, 7
        %v1458 = vsub.s32 0, %v1457
        %v1459 = vrot.slane %v1363, %v1458
        %v1477 = vunpack.c.l.b16 %v1439
        %v1478 = vunpack.c.l.b16 %v1440
        %v1479 = vunpack.c.l.b16 %v1441
        %v1480 = vunpack.c.l.b16 %v1442
        %v1481 = vunpack.c.l.b16 %v1443
        %v1482 = vunpack.c.l.b16 %v1444
        %v1483 = vunpack.c.l.b16 %v1445
        %v1484 = vunpack.c.l.b16 %v1446
        %v1485 = vunpack.c.l.b16 %v1447
        %v1486 = vunpack.c.l.b16 %v1448
        %v1487 = vunpack.c.l.b16 %v1449
        %v1488 = vunpack.c.l.b16 %v1450
        %v1489 = vunpack.c.l.b16 %v1451
        %v1490 = vunpack.c.l.b16 %v1452
        %v1491 = vunpack.c.l.b16 %v1453
        %v1492 = vunpack.c.l.b16 %v1454
        %v1493 = vpack.c.b16 %v1478, %v1477
        %v1494 = vpack.c.b16 %v1480, %v1479
        %v1495 = vpack.c.b16 %v1482, %v1481
        %v1496 = vpack.c.b16 %v1484, %v1483
        %v1497 = vpack.c.b16 %v1486, %v1485
        %v1498 = vpack.c.b16 %v1488, %v1487
        %v1499 = vpack.c.b16 %v1490, %v1489
        %v1500 = vpack.c.b16 %v1492, %v1491
        %1509 = vmatprep.subr.bf16.mxu0 0
        %1510 = vmatpush1.bf16.msra.mxu0 %v1493
        %1511 = vmatprep.subr.bf16.mxu0 0
        %1512 = vmatpush1.bf16.msra.mxu0 %v1494
        %1513 = vmatprep.subr.bf16.mxu0 0
        %1514 = vmatpush1.bf16.msra.mxu0 %v1495
        %1515 = vmatprep.subr.bf16.mxu0 0
        %1516 = vmatpush1.bf16.msra.mxu0 %v1496
        %1517 = vmatprep.subr.bf16.mxu0 0
        %1518 = vmatpush1.bf16.msra.mxu0 %v1497
        %1519 = vmatprep.subr.bf16.mxu0 0
        %1520 = vmatpush1.bf16.msra.mxu0 %v1498
        %1521 = vmatprep.subr.bf16.mxu0 0
        %1522 = vmatpush1.bf16.msra.mxu0 %v1499
        %1523 = vmatprep.subr.bf16.mxu0 0
        %1524 = vmatpush1.bf16.msra.mxu0 %v1500
        %1525 = vmatprep.subr.bf16.mxu0 0
        %1526 = vmatpush1.bf16.msra.mxu0 0
        %1527 = vmatprep.subr.bf16.mxu0 0
        %1528 = vmatpush1.bf16.msra.mxu0 0
        %1529 = vmatprep.subr.bf16.mxu0 0
        %1530 = vmatpush1.bf16.msra.mxu0 0
        %1531 = vmatprep.subr.bf16.mxu0 0
        %1532 = vmatpush1.bf16.msra.mxu0 0
        %1533 = vmatprep.subr.bf16.mxu0 0
        %1534 = vmatpush1.bf16.msra.mxu0 0
        %1535 = vmatprep.subr.bf16.mxu0 0
        %1536 = vmatpush1.bf16.msra.mxu0 0
        %1537 = vmatprep.subr.bf16.mxu0 0
        %1538 = vmatpush1.bf16.msra.mxu0 0
        %1539 = vmatprep.subr.bf16.mxu0 0
        %1540 = vmatpush1.bf16.msra.mxu0 0
        %1541 = vmatprep.mubr.bf16.mxu0 0
        %1542 = vmatmul.mubr.bf16.gmra.mrb[0].mxu0 %v1438
        %v1543 = vpop.f32.mrb[0].mxu0
        %v1544 = vadd.f32 %v1459, %v1543
        %v1545 = vpop.f32.mrb[0].mxu0
        %v1546 = vpop.f32.mrb[0].mxu0
        %v1547 = vpop.f32.mrb[0].mxu0
        %1548 = vdwg.mxu0
        %v1549 = vadd.f32 %v1331, %v1544
        %v1550 = vld [vmem:[%s13] sm:$0x1]
        %v1551 = vld [vmem:[%s14] sm:$0x1]
        %v1552 = vsel %vm801, %v1549, 0.0
        %1553 = vadd.xlane.f32.xlu0 %v1552
        %v1554 = vpop.xlane.xlu0 %1553
        %v1555 = vmul.f32 %v1554, %v805
        %v1556 = vsub.f32 %v1549, %v1555
        %v1557 = vmul.f32 %v1556, %v1556
        %v1558 = vsel %vm801, %v1557, 0.0
        %1559 = vadd.xlane.f32.xlu0 %v1558
        %v1560 = vpop.xlane.xlu0 %1559
        %v1561 = vmul.f32 %v1560, %v805
        %v1562 = vadd.f32 %v1561, 1e-06
        %v1563 = vrsqrt.pop %v1562
        %v1564 = vmul.f32 %v1556, %v1563
        %v1566 = vlaneseq
        %v1567 = vshrl.u32 %v1566, 7
        %v1568 = vsub.s32 0, %v1567
        %v1569 = vrot.slane %v1550, %v1568
        %v1571 = vmul.f32 %v1564, %v1569
        %v1573 = vlaneseq
        %v1574 = vshrl.u32 %v1573, 7
        %v1575 = vsub.s32 0, %v1574
        %v1576 = vrot.slane %v1551, %v1575
        %v1578 = vadd.f32 %v1571, %v1576
        %v1579 = vpack.c.bf16 %v1578, %v1578
        %v1580 = vld [vmem:[%s16] sm:$0x1]
        %v1581 = vld [vmem:[%s18] sm:$0x1]
        %v1582 = vld [vmem:[%s15] sm:$0xf]
        %v1583 = vld [vmem:[%s15 + $0x4] sm:$0xf]
        %v1584 = vld [vmem:[%s15 + $0x8] sm:$0xf]
        %v1585 = vld [vmem:[%s15 + $0xc] sm:$0xf]
        %v1587 = vlaneseq
        %v1588 = vshrl.u32 %v1587, 7
        %v1589 = vsub.s32 0, %v1588
        %v1590 = vrot.slane %v1580, %v1589
        %v1596 = vunpack.c.l.b16 %v1582
        %v1597 = vunpack.c.l.b16 %v1583
        %v1598 = vunpack.c.l.b16 %v1584
        %v1599 = vunpack.c.l.b16 %v1585
        %v1600 = vpack.c.b16 %v1597, %v1596
        %v1601 = vpack.c.b16 %v1599, %v1598
        %v1605 = vsel %vm801, %v1579, 0
        %1607 = vmatprep.subr.bf16.mxu0 0
        %1608 = vmatpush1.bf16.msra.mxu0 %v1600
        %1609 = vmatprep.subr.bf16.mxu0 0
        %1610 = vmatpush1.bf16.msra.mxu0 %v1601
        %1611 = vmatprep.subr.bf16.mxu0 0
        %1612 = vmatpush1.bf16.msra.mxu0 0
        %1613 = vmatprep.subr.bf16.mxu0 0
        %1614 = vmatpush1.bf16.msra.mxu0 0
        %1615 = vmatprep.subr.bf16.mxu0 0
        %1616 = vmatpush1.bf16.msra.mxu0 0
        %1617 = vmatprep.subr.bf16.mxu0 0
        %1618 = vmatpush1.bf16.msra.mxu0 0
        %1619 = vmatprep.subr.bf16.mxu0 0
        %1620 = vmatpush1.bf16.msra.mxu0 0
        %1621 = vmatprep.subr.bf16.mxu0 0
        %1622 = vmatpush1.bf16.msra.mxu0 0
        %1623 = vmatprep.subr.bf16.mxu0 0
        %1624 = vmatpush1.bf16.msra.mxu0 0
        %1625 = vmatprep.subr.bf16.mxu0 0
        %1626 = vmatpush1.bf16.msra.mxu0 0
        %1627 = vmatprep.subr.bf16.mxu0 0
        %1628 = vmatpush1.bf16.msra.mxu0 0
        %1629 = vmatprep.subr.bf16.mxu0 0
        %1630 = vmatpush1.bf16.msra.mxu0 0
        %1631 = vmatprep.subr.bf16.mxu0 0
        %1632 = vmatpush1.bf16.msra.mxu0 0
        %1633 = vmatprep.subr.bf16.mxu0 0
        %1634 = vmatpush1.bf16.msra.mxu0 0
        %1635 = vmatprep.subr.bf16.mxu0 0
        %1636 = vmatpush1.bf16.msra.mxu0 0
        %1637 = vmatprep.subr.bf16.mxu0 0
        %1638 = vmatpush1.bf16.msra.mxu0 0
        %1639 = vmatprep.mubr.bf16.mxu0 0
        %1640 = vmatmul.mubr.bf16.gmra.mrb[0].mxu0 %v1605
        %v1641 = vpop.f32.mrb[0].mxu0
        %v1642 = vadd.f32 %v1590, %v1641
        %v1643 = vpop.f32.mrb[0].mxu0
        %v1644 = vpop.f32.mrb[0].mxu0
        %v1645 = vpop.f32.mrb[0].mxu0
        %1646 = vdwg.mxu0
        %v1647 = vmul.f32 %v1642, 0.5
        %v1648 = vmul.f32 %v1642, 0.044715
        %v1649 = vmul.f32 %v1648, %v1642
        %v1650 = vmul.f32 %v1649, %v1642
        %v1651 = vadd.f32 %v1642, %v1650
        %v1652 = vmul.f32 %v1651, 0.7978846
        %v1653 = vtanh.pop %v1652
        %v1654 = vadd.f32 %v1653, 1.0
        %v1655 = vmul.f32 %v1647, %v1654
        %v1656 = vpack.c.bf16 %v1655, %v1655
        %v1657 = vld [vmem:[%s17] sm:$0xf]
        %v1658 = vld [vmem:[%s17 + $0x4] sm:$0xf]
        %v1659 = vld [vmem:[%s17 + $0x8] sm:$0xf]
        %v1660 = vld [vmem:[%s17 + $0xc] sm:$0xf]
        %v1661 = vld [vmem:[%s17 + $0x10] sm:$0xf]
        %v1662 = vld [vmem:[%s17 + $0x14] sm:$0xf]
        %v1663 = vld [vmem:[%s17 + $0x18] sm:$0xf]
        %v1664 = vld [vmem:[%s17 + $0x1c] sm:$0xf]
        %v1665 = vld [vmem:[%s17 + $0x20] sm:$0xf]
        %v1666 = vld [vmem:[%s17 + $0x24] sm:$0xf]
        %v1667 = vld [vmem:[%s17 + $0x28] sm:$0xf]
        %v1668 = vld [vmem:[%s17 + $0x2c] sm:$0xf]
        %v1669 = vld [vmem:[%s17 + $0x30] sm:$0xf]
        %v1670 = vld [vmem:[%s17 + $0x34] sm:$0xf]
        %v1671 = vld [vmem:[%s17 + $0x38] sm:$0xf]
        %v1672 = vld [vmem:[%s17 + $0x3c] sm:$0xf]
        %v1674 = vlaneseq
        %v1675 = vshrl.u32 %v1674, 7
        %v1676 = vsub.s32 0, %v1675
        %v1677 = vrot.slane %v1581, %v1676
        %v1695 = vunpack.c.l.b16 %v1657
        %v1696 = vunpack.c.l.b16 %v1658
        %v1697 = vunpack.c.l.b16 %v1659
        %v1698 = vunpack.c.l.b16 %v1660
        %v1699 = vunpack.c.l.b16 %v1661
        %v1700 = vunpack.c.l.b16 %v1662
        %v1701 = vunpack.c.l.b16 %v1663
        %v1702 = vunpack.c.l.b16 %v1664
        %v1703 = vunpack.c.l.b16 %v1665
        %v1704 = vunpack.c.l.b16 %v1666
        %v1705 = vunpack.c.l.b16 %v1667
        %v1706 = vunpack.c.l.b16 %v1668
        %v1707 = vunpack.c.l.b16 %v1669
        %v1708 = vunpack.c.l.b16 %v1670
        %v1709 = vunpack.c.l.b16 %v1671
        %v1710 = vunpack.c.l.b16 %v1672
        %v1711 = vpack.c.b16 %v1696, %v1695
        %v1712 = vpack.c.b16 %v1698, %v1697
        %v1713 = vpack.c.b16 %v1700, %v1699
        %v1714 = vpack.c.b16 %v1702, %v1701
        %v1715 = vpack.c.b16 %v1704, %v1703
        %v1716 = vpack.c.b16 %v1706, %v1705
        %v1717 = vpack.c.b16 %v1708, %v1707
        %v1718 = vpack.c.b16 %v1710, %v1709
        %1727 = vmatprep.subr.bf16.mxu0 0
        %1728 = vmatpush1.bf16.msra.mxu0 %v1711
        %1729 = vmatprep.subr.bf16.mxu0 0
        %1730 = vmatpush1.bf16.msra.mxu0 %v1712
        %1731 = vmatprep.subr.bf16.mxu0 0
        %1732 = vmatpush1.bf16.msra.mxu0 %v1713
        %1733 = vmatprep.subr.bf16.mxu0 0
        %1734 = vmatpush1.bf16.msra.mxu0 %v1714
        %1735 = vmatprep.subr.bf16.mxu0 0
        %1736 = vmatpush1.bf16.msra.mxu0 %v1715
        %1737 = vmatprep.subr.bf16.mxu0 0
        %1738 = vmatpush1.bf16.msra.mxu0 %v1716
        %1739 = vmatprep.subr.bf16.mxu0 0
        %1740 = vmatpush1.bf16.msra.mxu0 %v1717
        %1741 = vmatprep.subr.bf16.mxu0 0
        %1742 = vmatpush1.bf16.msra.mxu0 %v1718
        %1743 = vmatprep.subr.bf16.mxu0 0
        %1744 = vmatpush1.bf16.msra.mxu0 0
        %1745 = vmatprep.subr.bf16.mxu0 0
        %1746 = vmatpush1.bf16.msra.mxu0 0
        %1747 = vmatprep.subr.bf16.mxu0 0
        %1748 = vmatpush1.bf16.msra.mxu0 0
        %1749 = vmatprep.subr.bf16.mxu0 0
        %1750 = vmatpush1.bf16.msra.mxu0 0
        %1751 = vmatprep.subr.bf16.mxu0 0
        %1752 = vmatpush1.bf16.msra.mxu0 0
        %1753 = vmatprep.subr.bf16.mxu0 0
        %1754 = vmatpush1.bf16.msra.mxu0 0
        %1755 = vmatprep.subr.bf16.mxu0 0
        %1756 = vmatpush1.bf16.msra.mxu0 0
        %1757 = vmatprep.subr.bf16.mxu0 0
        %1758 = vmatpush1.bf16.msra.mxu0 0
        %1759 = vmatprep.mubr.bf16.mxu0 0
        %1760 = vmatmul.mubr.bf16.gmra.mrb[0].mxu0 %v1656
        %v1761 = vpop.f32.mrb[0].mxu0
        %v1762 = vadd.f32 %v1677, %v1761
        %v1763 = vpop.f32.mrb[0].mxu0
        %v1764 = vpop.f32.mrb[0].mxu0
        %v1765 = vpop.f32.mrb[0].mxu0
        %1766 = vdwg.mxu0
        %v1767 = vtanh.pop %v1762
        %1768 = vst.msk [vmem:[%s786] sm:$0xff] %vm801, %v1767
        %v1769 = vld [vmem:[%s20] sm:$0x1]
        %v1770 = vld [vmem:[%s22] sm:$0x1]
        %v1771 = vld [vmem:[%s19] sm:$0xf]
        %v1772 = vld [vmem:[%s19 + $0x4] sm:$0xf]
        %v1773 = vld [vmem:[%s19 + $0x8] sm:$0xf]
        %v1774 = vld [vmem:[%s19 + $0xc] sm:$0xf]
        %v1779 = vunpack.c.l.b16 %v1771
        %v1780 = vunpack.c.l.b16 %v1772
        %v1781 = vunpack.c.l.b16 %v1773
        %v1782 = vunpack.c.l.b16 %v1774
        %v1783 = vpack.c.b16 %v1780, %v1779
        %v1784 = vpack.c.b16 %v1782, %v1781
        %1787 = vmatprep.subr.bf16.mxu0 0
        %1788 = vmatpush1.bf16.msra.mxu0 %v1783
        %1789 = vmatprep.subr.bf16.mxu0 0
        %1790 = vmatpush1.bf16.msra.mxu0 %v1784
        %1791 = vmatprep.subr.bf16.mxu0 0
        %1792 = vmatpush1.bf16.msra.mxu0 0
        %1793 = vmatprep.subr.bf16.mxu0 0
        %1794 = vmatpush1.bf16.msra.mxu0 0
        %1795 = vmatprep.subr.bf16.mxu0 0
        %1796 = vmatpush1.bf16.msra.mxu0 0
        %1797 = vmatprep.subr.bf16.mxu0 0
        %1798 = vmatpush1.bf16.msra.mxu0 0
        %1799 = vmatprep.subr.bf16.mxu0 0
        %1800 = vmatpush1.bf16.msra.mxu0 0
        %1801 = vmatprep.subr.bf16.mxu0 0
        %1802 = vmatpush1.bf16.msra.mxu0 0
        %1803 = vmatprep.subr.bf16.mxu0 0
        %1804 = vmatpush1.bf16.msra.mxu0 0
        %1805 = vmatprep.subr.bf16.mxu0 0
        %1806 = vmatpush1.bf16.msra.mxu0 0
        %1807 = vmatprep.subr.bf16.mxu0 0
        %1808 = vmatpush1.bf16.msra.mxu0 0
        %1809 = vmatprep.subr.bf16.mxu0 0
        %1810 = vmatpush1.bf16.msra.mxu0 0
        %1811 = vmatprep.subr.bf16.mxu0 0
        %1812 = vmatpush1.bf16.msra.mxu0 0
        %1813 = vmatprep.subr.bf16.mxu0 0
        %1814 = vmatpush1.bf16.msra.mxu0 0
        %1815 = vmatprep.subr.bf16.mxu0 0
        %1816 = vmatpush1.bf16.msra.mxu0 0
        %1817 = vmatprep.subr.bf16.mxu0 0
        %1818 = vmatpush1.bf16.msra.mxu0 0
        %1819 = vmatprep.mubr.bf16.mxu0 0
        %1820 = vmatmul.mubr.bf16.gmra.mrb[0].mxu0 %v1605
        %v1821 = vpop.f32.mrb[0].mxu0
        %v1822 = vadd.f32 %v1769, %v1821
        %v1823 = vpop.f32.mrb[0].mxu0
        %v1824 = vpop.f32.mrb[0].mxu0
        %v1825 = vpop.f32.mrb[0].mxu0
        %1826 = vdwg.mxu0
        %v1827 = vmul.f32 %v1822, 0.5
        %v1828 = vmul.f32 %v1822, 0.044715
        %v1829 = vmul.f32 %v1828, %v1822
        %v1830 = vmul.f32 %v1829, %v1822
        %v1831 = vadd.f32 %v1822, %v1830
        %v1832 = vmul.f32 %v1831, 0.7978846
        %v1833 = vtanh.pop %v1832
        %v1834 = vadd.f32 %v1833, 1.0
        %v1835 = vmul.f32 %v1827, %v1834
        %v1836 = vpack.c.bf16 %v1835, %v1835
        %v1837 = vld [vmem:[%s21] sm:$0xf]
        %v1838 = vld [vmem:[%s21 + $0x4] sm:$0xf]
        %v1839 = vld [vmem:[%s21 + $0x8] sm:$0xf]
        %v1840 = vld [vmem:[%s21 + $0xc] sm:$0xf]
        %v1841 = vld [vmem:[%s21 + $0x10] sm:$0xf]
        %v1842 = vld [vmem:[%s21 + $0x14] sm:$0xf]
        %v1843 = vld [vmem:[%s21 + $0x18] sm:$0xf]
        %v1844 = vld [vmem:[%s21 + $0x1c] sm:$0xf]
        %v1845 = vld [vmem:[%s21 + $0x20] sm:$0xf]
        %v1846 = vld [vmem:[%s21 + $0x24] sm:$0xf]
        %v1847 = vld [vmem:[%s21 + $0x28] sm:$0xf]
        %v1848 = vld [vmem:[%s21 + $0x2c] sm:$0xf]
        %v1849 = vld [vmem:[%s21 + $0x30] sm:$0xf]
        %v1850 = vld [vmem:[%s21 + $0x34] sm:$0xf]
        %v1851 = vld [vmem:[%s21 + $0x38] sm:$0xf]
        %v1852 = vld [vmem:[%s21 + $0x3c] sm:$0xf]
        %v1869 = vunpack.c.l.b16 %v1837
        %v1870 = vunpack.c.l.b16 %v1838
        %v1871 = vunpack.c.l.b16 %v1839
        %v1872 = vunpack.c.l.b16 %v1840
        %v1873 = vunpack.c.l.b16 %v1841
        %v1874 = vunpack.c.l.b16 %v1842
        %v1875 = vunpack.c.l.b16 %v1843
        %v1876 = vunpack.c.l.b16 %v1844
        %v1877 = vunpack.c.l.b16 %v1845
        %v1878 = vunpack.c.l.b16 %v1846
        %v1879 = vunpack.c.l.b16 %v1847
        %v1880 = vunpack.c.l.b16 %v1848
        %v1881 = vunpack.c.l.b16 %v1849
        %v1882 = vunpack.c.l.b16 %v1850
        %v1883 = vunpack.c.l.b16 %v1851
        %v1884 = vunpack.c.l.b16 %v1852
        %v1885 = vpack.c.b16 %v1870, %v1869
        %v1886 = vpack.c.b16 %v1872, %v1871
        %v1887 = vpack.c.b16 %v1874, %v1873
        %v1888 = vpack.c.b16 %v1876, %v1875
        %v1889 = vpack.c.b16 %v1878, %v1877
        %v1890 = vpack.c.b16 %v1880, %v1879
        %v1891 = vpack.c.b16 %v1882, %v1881
        %v1892 = vpack.c.b16 %v1884, %v1883
        %1901 = vmatprep.subr.bf16.mxu0 0
        %1902 = vmatpush1.bf16.msra.mxu0 %v1885
        %1903 = vmatprep.subr.bf16.mxu0 0
        %1904 = vmatpush1.bf16.msra.mxu0 %v1886
        %1905 = vmatprep.subr.bf16.mxu0 0
        %1906 = vmatpush1.bf16.msra.mxu0 %v1887
        %1907 = vmatprep.subr.bf16.mxu0 0
        %1908 = vmatpush1.bf16.msra.mxu0 %v1888
        %1909 = vmatprep.subr.bf16.mxu0 0
        %1910 = vmatpush1.bf16.msra.mxu0 %v1889
        %1911 = vmatprep.subr.bf16.mxu0 0
        %1912 = vmatpush1.bf16.msra.mxu0 %v1890
        %1913 = vmatprep.subr.bf16.mxu0 0
        %1914 = vmatpush1.bf16.msra.mxu0 %v1891
        %1915 = vmatprep.subr.bf16.mxu0 0
        %1916 = vmatpush1.bf16.msra.mxu0 %v1892
        %1917 = vmatprep.subr.bf16.mxu0 0
        %1918 = vmatpush1.bf16.msra.mxu0 0
        %1919 = vmatprep.subr.bf16.mxu0 0
        %1920 = vmatpush1.bf16.msra.mxu0 0
        %1921 = vmatprep.subr.bf16.mxu0 0
        %1922 = vmatpush1.bf16.msra.mxu0 0
        %1923 = vmatprep.subr.bf16.mxu0 0
        %1924 = vmatpush1.bf16.msra.mxu0 0
        %1925 = vmatprep.subr.bf16.mxu0 0
        %1926 = vmatpush1.bf16.msra.mxu0 0
        %1927 = vmatprep.subr.bf16.mxu0 0
        %1928 = vmatpush1.bf16.msra.mxu0 0
        %1929 = vmatprep.subr.bf16.mxu0 0
        %1930 = vmatpush1.bf16.msra.mxu0 0
        %1931 = vmatprep.subr.bf16.mxu0 0
        %1932 = vmatpush1.bf16.msra.mxu0 0
        %1933 = vmatprep.mubr.bf16.mxu0 0
        %1934 = vmatmul.mubr.bf16.gmra.mrb[0].mxu0 %v1836
        %v1935 = vpop.f32.mrb[0].mxu0
        %v1936 = vadd.f32 %v1770, %v1935
        %v1937 = vpop.f32.mrb[0].mxu0
        %v1938 = vpop.f32.mrb[0].mxu0
        %v1939 = vpop.f32.mrb[0].mxu0
        %1940 = vdwg.mxu0
        %v1941 = vadd.f32 %v1936, %v1578
        %v1942 = vpack.c.bf16 %v1941, %v1941
        %v1943 = vld [vmem:[%s23] sm:$0xf]
        %v1944 = vld [vmem:[%s23 + $0x4] sm:$0xf]
        %v1945 = vld [vmem:[%s23 + $0x8] sm:$0xf]
        %v1946 = vld [vmem:[%s23 + $0xc] sm:$0xf]
        %v1947 = vld [vmem:[%s24] sm:$0x1]
        %v1952 = vunpack.c.l.b16 %v1943
        %v1953 = vunpack.c.l.b16 %v1944
        %v1954 = vunpack.c.l.b16 %v1945
        %v1955 = vunpack.c.l.b16 %v1946
        %v1956 = vpack.c.b16 %v1953, %v1952
        %v1957 = vpack.c.b16 %v1955, %v1954
        %v1961 = vsel %vm801, %v1942, 0
        %1963 = vmatprep.subr.bf16.mxu0 0
        %1964 = vmatpush1.bf16.msra.mxu0 %v1956
        %1965 = vmatprep.subr.bf16.mxu0 0
        %1966 = vmatpush1.bf16.msra.mxu0 %v1957
        %1967 = vmatprep.subr.bf16.mxu0 0
        %1968 = vmatpush1.bf16.msra.mxu0 0
        %1969 = vmatprep.subr.bf16.mxu0 0
        %1970 = vmatpush1.bf16.msra.mxu0 0
        %1971 = vmatprep.subr.bf16.mxu0 0
        %1972 = vmatpush1.bf16.msra.mxu0 0
        %1973 = vmatprep.subr.bf16.mxu0 0
        %1974 = vmatpush1.bf16.msra.mxu0 0
        %1975 = vmatprep.subr.bf16.mxu0 0
        %1976 = vmatpush1.bf16.msra.mxu0 0
        %1977 = vmatprep.subr.bf16.mxu0 0
        %1978 = vmatpush1.bf16.msra.mxu0 0
        %1979 = vmatprep.subr.bf16.mxu0 0
        %1980 = vmatpush1.bf16.msra.mxu0 0
        %1981 = vmatprep.subr.bf16.mxu0 0
        %1982 = vmatpush1.bf16.msra.mxu0 0
        %1983 = vmatprep.subr.bf16.mxu0 0
        %1984 = vmatpush1.bf16.msra.mxu0 0
        %1985 = vmatprep.subr.bf16.mxu0 0
        %1986 = vmatpush1.bf16.msra.mxu0 0
        %1987 = vmatprep.subr.bf16.mxu0 0
        %1988 = vmatpush1.bf16.msra.mxu0 0
        %1989 = vmatprep.subr.bf16.mxu0 0
        %1990 = vmatpush1.bf16.msra.mxu0 0
        %1991 = vmatprep.subr.bf16.mxu0 0
        %1992 = vmatpush1.bf16.msra.mxu0 0
        %1993 = vmatprep.subr.bf16.mxu0 0
        %1994 = vmatpush1.bf16.msra.mxu0 0
        %1995 = vmatprep.mubr.bf16.mxu0 0
        %1996 = vmatmul.mubr.bf16.gmra.mrb[0].mxu0 %v1961
        %v1997 = vpop.f32.mrb[0].mxu0
        %v1998 = vadd.f32 %v1947, %v1997
        %v1999 = vpop.f32.mrb[0].mxu0
        %v2000 = vpop.f32.mrb[0].mxu0
        %v2001 = vpop.f32.mrb[0].mxu0
        %2002 = vdwg.mxu0
        %2003 = vst [vmem:[%s792] sm:$0x1] %v1998
        %s2004 = sand.u32 %s582, 1
        %s2005 = scalar_lea.sflag [#allocation3], %s2004
        %s2006 = sand.u32 %s582, 1
        %s2007 = smul.addr %s2006, 8
        %s2008 = scalar_lea.vmem [#allocation2], %s2007
        %s2009 = sand.u32 %s608, 1
        %s2010 = scalar_lea.sflag [#allocation5], %s2009
        %s2011 = sand.u32 %s608, 1
        %s2012 = scalar_lea.vmem [#allocation4], %s2011
        // Predicated region
        $region121: #{tpu_custom_call.1} parent=119 // pred_check
          %p2013 = pneg %p592
        $region122: #{tpu_custom_call.1} parent=119 // pred_check_branch
          %2015 = sbr.rel (%p2013) target = $region124
        $region123: #{tpu_custom_call.1} parent=119 // pred_region
          %s2017 = ssub.s32 128, 128
          %2018 = vsyncadd %s2005, %s2017
          %s2019 = smul.addr %s44, 128
          %s2020 = scalar_lea.hbm %s25, %s2019
          %s2022 = sshll.u32 %s2008, 4
          %s2023 = int_to_ptr.vmem [resolvable:$true] %s2022
          %2025 = dma.vmem_to_hbm [thread:$0]  %s2023, 128, %s2020, %s2005
        $region124: #{tpu_custom_call.1} parent=119 // pred_fallthru
          _
        // Predicated region
        $region125: #{tpu_custom_call.1} parent=119 // pred_check
          %p2026 = pneg %p618
        $region126: #{tpu_custom_call.1} parent=119 // pred_check_branch
          %2028 = sbr.rel (%p2026) target = $region128
        $region127: #{tpu_custom_call.1} parent=119 // pred_region
          %s2030 = ssub.s32 16, 16
          %2031 = vsyncadd %s2010, %s2030
          %s2032 = smul.addr %s44, 16
          %s2033 = scalar_lea.hbm %s26, %s2032
          %s2035 = sshll.u32 %s2012, 4
          %s2036 = int_to_ptr.vmem [resolvable:$true] %s2035
          %2038 = dma.vmem_to_hbm [thread:$0]  %s2036, 16, %s2033, %s2010
        $region128: #{tpu_custom_call.1} parent=119 // pred_fallthru
          _
      $region120: #{tpu_custom_call.1} parent=5 // pred_fallthru
        _
      %p2039 = scmp.le.s32.totalorder 2, %s39
      // Predicated region
      $region129: #{tpu_custom_call.1} parent=5 // pred_check
        %p2040 = pneg %p2039
      $region130: #{tpu_custom_call.1} parent=5 // pred_check_branch
        %2042 = sbr.rel (%p2040) target = $region132
      $region131: #{tpu_custom_call.1} parent=5 // pred_region
        %s2043 = ssub.s32 %s39, 2
        // Predicated region
        $region133: #{tpu_custom_call.1} parent=131 // pred_check
          %p2044 = pneg %p598
        $region134: #{tpu_custom_call.1} parent=131 // pred_check_branch
          %2046 = sbr.rel (%p2044) target = $region136
        $region135: #{tpu_custom_call.1} parent=131 // pred_region
          %s2047 = sand.u32 %s583, 1
          %s2048 = scalar_lea.sflag [#allocation3], %s2047
          %s2049 = sand.u32 %s583, 1
          %s2050 = smul.addr %s2049, 8
          %s2051 = scalar_lea.vmem [#allocation2], %s2050
          %2052 = dma.done %s2048, 128
        $region136: #{tpu_custom_call.1} parent=131 // pred_fallthru
          _
        // Predicated region
        $region137: #{tpu_custom_call.1} parent=131 // pred_check
          %p2053 = pneg %p624
        $region138: #{tpu_custom_call.1} parent=131 // pred_check_branch
          %2055 = sbr.rel (%p2053) target = $region140
        $region139: #{tpu_custom_call.1} parent=131 // pred_region
          %s2056 = sand.u32 %s609, 1
          %s2057 = scalar_lea.sflag [#allocation5], %s2056
          %s2058 = sand.u32 %s609, 1
          %s2059 = scalar_lea.vmem [#allocation4], %s2058
          %2060 = dma.done %s2057, 16
        $region140: #{tpu_custom_call.1} parent=131 // pred_fallthru
          _
      $region132: #{tpu_custom_call.1} parent=5 // pred_fallthru
        _
    $region6: #{tpu_custom_call.1} parent=1 // loop_footer
      %s43 = sadd.s32 1, %s39
    $region7: #{tpu_custom_call.1} parent=1 // loop_footer_branch
      %38 = sbr.rel target = $region3
    $region8: #{tpu_custom_call.1} parent=1 // loop_exit
      _
    %2061 = vsyncpa [#allocation3], 1
    %s2062 = scalar_lea.sflag [#allocation3], 1
    %2063 = vsyncpa %s2062, 1
    %2064 = vsyncpa [#allocation5], 1
    %s2065 = scalar_lea.sflag [#allocation5], 1
    %2066 = vsyncpa %s2065, 1

// kernel: tpu_custom_call.1
$region0: #{tpu_custom_call.1}
  #allocation0 [shape = 'u32[]', space=smem, size = 0x4, offset = 0x4, fixed_abs, tag = 'smem constant byte address 0x4 - core index']
  #allocation1 [shape = 'u32[144,128]{1,0:T(1,128)}', space=vmem, size = 0x12000, scoped, tag = 'internal scratch']
  %s0 = inlined_call_operand.vmem [shape: f32[2,8,32], index: 0, kind: input, shape index: {}]
  %s1 = inlined_call_operand.vmem [shape: f32[1,32], index: 1, kind: input, shape index: {}]
  %s2 = inlined_call_operand.vmem [shape: f32[1,32], index: 2, kind: input, shape index: {}]
  %s3 = inlined_call_operand.vmem [shape: bf16[32,96], index: 3, kind: input, shape index: {}]
  %s4 = inlined_call_operand.vmem [shape: f32[1,96], index: 4, kind: input, shape index: {}]
  %s5 = inlined_call_operand.vmem [shape: bf16[32,32], index: 5, kind: input, shape index: {}]
  %s6 = inlined_call_operand.vmem [shape: f32[1,32], index: 6, kind: input, shape index: {}]
  %s7 = inlined_call_operand.vmem [shape: f32[1,32], index: 7, kind: input, shape index: {}]
  %s8 = inlined_call_operand.vmem [shape: f32[1,32], index: 8, kind: input, shape index: {}]
  %s9 = inlined_call_operand.vmem [shape: bf16[32,128], index: 9, kind: input, shape index: {}]
  %s10 = inlined_call_operand.vmem [shape: f32[1,128], index: 10, kind: input, shape index: {}]
  %s11 = inlined_call_operand.vmem [shape: bf16[128,32], index: 11, kind: input, shape index: {}]
  %s12 = inlined_call_operand.vmem [shape: f32[1,32], index: 12, kind: input, shape index: {}]
  %s13 = inlined_call_operand.vmem [shape: f32[1,32], index: 13, kind: input, shape index: {}]
  %s14 = inlined_call_operand.vmem [shape: f32[1,32], index: 14, kind: input, shape index: {}]
  %s15 = inlined_call_operand.vmem [shape: bf16[32,128], index: 15, kind: input, shape index: {}]
  %s16 = inlined_call_operand.vmem [shape: f32[1,128], index: 16, kind: input, shape index: {}]
  %s17 = inlined_call_operand.vmem [shape: bf16[128,32], index: 17, kind: input, shape index: {}]
  %s18 = inlined_call_operand.vmem [shape: f32[1,32], index: 18, kind: input, shape index: {}]
  %s19 = inlined_call_operand.vmem [shape: bf16[32,128], index: 19, kind: input, shape index: {}]
  %s20 = inlined_call_operand.vmem [shape: f32[1,128], index: 20, kind: input, shape index: {}]
  %s21 = inlined_call_operand.vmem [shape: bf16[128,32], index: 21, kind: input, shape index: {}]
  %s22 = inlined_call_operand.vmem [shape: f32[1,32], index: 22, kind: input, shape index: {}]
  %s23 = inlined_call_operand.vmem [shape: bf16[32,128], index: 23, kind: input, shape index: {}]
  %s24 = inlined_call_operand.vmem [shape: f32[1,128], index: 24, kind: input, shape index: {}]
  %s25 = inlined_call_operand.hbm [shape: f32[2,8,32], index: 25, kind: output, shape index: {0}]
  %s26 = inlined_call_operand.hbm [shape: f32[2,1,128], index: 26, kind: output, shape index: {1}]
  %27 = xla_tuple %s25, %s26
  %s28 = sld [smem:[#allocation0]]
  $region141: #{tpu_custom_call.1} parent=0
    _
  %s30 = ssub.s32 1, %s28
  %s31 = scalar_select 0, %s30, %s28
  $region1: #{tpu_custom_call.1} parent=0
    #allocation2 [shape = 'u8[8192]{0}', space=vmem, size = 0x2000, scoped, tag = 'output window, operand 0']
    #allocation3 [shape = 's32[2]{0}', space=sflag, size = 0x8, scoped, tag = 'scoped memory for tpu_custom_call.1']
    #allocation4 [shape = 'u8[1024]{0}', space=vmem, size = 0x400, scoped, tag = 'output window, operand 1']
    #allocation5 [shape = 's32[2]{0}', space=sflag, size = 0x8, scoped, tag = 'scoped memory for tpu_custom_call.1']
    %32 = vsyncpa [#allocation3], 0
    %s33 = scalar_lea.sflag [#allocation3], 1
    %34 = vsyncpa %s33, 0
    %35 = vsyncpa [#allocation5], 0
    %s36 = scalar_lea.sflag [#allocation5], 1
    %37 = vsyncpa %s36, 0
    loop: start=0, step=1, limit=4
    $region2: #{tpu_custom_call.1} parent=1 // loop_pre_header
      _
    $region3: #{tpu_custom_call.1} parent=1 // loop_header
      %s39 = sphi 0, %s43
      %p40 = scmp.ge.s32.totalorder %s39, 4
      %s49 = sphi 0, %s51
      %s52 = sphi 0, %s49
      %s53 = sphi 0, %s52
      %s69 = sphi 0, %s53
      %s73 = sphi 0, %s73
      %s75 = sphi 0, %s73
      %s76 = sphi 0, %s75
      %s90 = sphi 0, %s76
      %s94 = sphi 0, %s94
      %s96 = sphi 0, %s94
      %s97 = sphi 0, %s96
      %s111 = sphi 0, %s97
      %s115 = sphi 0, %s115
      %s117 = sphi 0, %s115
      %s118 = sphi 0, %s117
      %s132 = sphi 0, %s118
      %s136 = sphi 0, %s136
      %s138 = sphi 0, %s136
      %s139 = sphi 0, %s138
      %s153 = sphi 0, %s139
      %s157 = sphi 0, %s157
      %s159 = sphi 0, %s157
      %s160 = sphi 0, %s159
      %s174 = sphi 0, %s160
      %s178 = sphi 0, %s178
      %s180 = sphi 0, %s178
      %s181 = sphi 0, %s180
      %s195 = sphi 0, %s181
      %s199 = sphi 0, %s199
      %s201 = sphi 0, %s199
      %s202 = sphi 0, %s201
      %s216 = sphi 0, %s202
      %s220 = sphi 0, %s220
      %s222 = sphi 0, %s220
      %s223 = sphi 0, %s222
      %s237 = sphi 0, %s223
      %s241 = sphi 0, %s241
      %s243 = sphi 0, %s241
      %s244 = sphi 0, %s243
      %s258 = sphi 0, %s244
      %s262 = sphi 0, %s262
      %s264 = sphi 0, %s262
      %s265 = sphi 0, %s264
      %s279 = sphi 0, %s265
      %s283 = sphi 0, %s283
      %s285 = sphi 0, %s283
      %s286 = sphi 0, %s285
      %s300 = sphi 0, %s286
      %s304 = sphi 0, %s304
      %s306 = sphi 0, %s304
      %s307 = sphi 0, %s306
      %s321 = sphi 0, %s307
      %s325 = sphi 0, %s325
      %s327 = sphi 0, %s325
      %s328 = sphi 0, %s327
      %s342 = sphi 0, %s328
      %s346 = sphi 0, %s346
      %s348 = sphi 0, %s346
      %s349 = sphi 0, %s348
      %s363 = sphi 0, %s349
      %s367 = sphi 0, %s367
      %s369 = sphi 0, %s367
      %s370 = sphi 0, %s369
      %s384 = sphi 0, %s370
      %s388 = sphi 0, %s388
      %s390 = sphi 0, %s388
      %s391 = sphi 0, %s390
      %s405 = sphi 0, %s391
      %s409 = sphi 0, %s409
      %s411 = sphi 0, %s409
      %s412 = sphi 0, %s411
      %s426 = sphi 0, %s412
      %s430 = sphi 0, %s430
      %s432 = sphi 0, %s430
      %s433 = sphi 0, %s432
      %s447 = sphi 0, %s433
      %s451 = sphi 0, %s451
      %s453 = sphi 0, %s451
      %s454 = sphi 0, %s453
      %s468 = sphi 0, %s454
      %s472 = sphi 0, %s472
      %s474 = sphi 0, %s472
      %s475 = sphi 0, %s474
      %s489 = sphi 0, %s475
      %s493 = sphi 0, %s493
      %s495 = sphi 0, %s493
      %s496 = sphi 0, %s495
      %s510 = sphi 0, %s496
      %s514 = sphi 0, %s514
      %s516 = sphi 0, %s514
      %s517 = sphi 0, %s516
      %s531 = sphi 0, %s517
      %s535 = sphi 0, %s535
      %s537 = sphi 0, %s535
      %s538 = sphi 0, %s537
      %s552 = sphi 0, %s538
      %s556 = sphi 0, %s556
      %s558 = sphi 0, %s556
      %s559 = sphi 0, %s558
      %s573 = sphi 0, %s559
      %s579 = sphi 0, %s581
      %s582 = sphi 0, %s579
      %s583 = sphi 0, %s582
      %s599 = sphi 0, %s583
      %s605 = sphi 0, %s607
      %s608 = sphi 0, %s605
      %s609 = sphi 0, %s608
      %s625 = sphi 0, %s609
    $region4: #{tpu_custom_call.1} parent=1 // loop_header_branch
      %42 = sbr.rel (%p40) target = $region8
    $region5: #{tpu_custom_call.1} parent=1 // loop_body
      %s44 = ssub.s32 %s39, 1
      %s45 = ssub.s32 %s39, 2
      %s46 = sadd.s32 %s39, 1
      %s47 = ssub.s32 %s39, %s46
      %p48 = scmp.eq.s32.totalorder %s47, 0
      %s50 = sadd.s32 %s49, 1
      %s51 = scalar_select %p48, %s49, %s50
      %p54 = pneg %p48
      %p55 = scmp.eq.s32.totalorder %s39, 1
      %p56 = por %p54, %p55
      %p57 = scmp.ne.s32.totalorder %s49, %s52
      %p58 = scmp.eq.s32.totalorder %s39, 0
      %p59 = por %p57, %p58
      %p60 = scmp.ne.s32.totalorder %s49, %s52
      %p61 = scmp.eq.s32.totalorder %s44, 1
      %p62 = por %p60, %p61
      %p63 = scmp.ne.s32.totalorder %s52, %s53
      %p64 = scmp.eq.s32.totalorder %s44, 0
      %p65 = por %p63, %p64
      %p66 = scmp.ne.s32.totalorder %s52, %s53
      %p67 = scmp.eq.s32.totalorder %s45, 1
      %p68 = por %p66, %p67
      %p70 = scmp.ne.s32.totalorder %s53, %s69
      %p71 = scmp.eq.s32.totalorder %s45, 0
      %p72 = por %p70, %p71
      %s74 = sadd.s32 %s73, 1
      %p77 = scmp.eq.s32.totalorder %s39, 1
      %p78 = scmp.ne.s32.totalorder %s73, %s75
      %p79 = scmp.eq.s32.totalorder %s39, 0
      %p80 = por %p78, %p79
      %p81 = scmp.ne.s32.totalorder %s73, %s75
      %p82 = scmp.eq.s32.totalorder %s44, 1
      %p83 = por %p81, %p82
      %p84 = scmp.ne.s32.totalorder %s75, %s76
      %p85 = scmp.eq.s32.totalorder %s44, 0
      %p86 = por %p84, %p85
      %p87 = scmp.ne.s32.totalorder %s75, %s76
      %p88 = scmp.eq.s32.totalorder %s45, 1
      %p89 = por %p87, %p88
      %p91 = scmp.ne.s32.totalorder %s76, %s90
      %p92 = scmp.eq.s32.totalorder %s45, 0
      %p93 = por %p91, %p92
      %s95 = sadd.s32 %s94, 1
      %p98 = scmp.eq.s32.totalorder %s39, 1
      %p99 = scmp.ne.s32.totalorder %s94, %s96
      %p100 = scmp.eq.s32.totalorder %s39, 0
      %p101 = por %p99, %p100
      %p102 = scmp.ne.s32.totalorder %s94, %s96
      %p103 = scmp.eq.s32.totalorder %s44, 1
      %p104 = por %p102, %p103
      %p105 = scmp.ne.s32.totalorder %s96, %s97
      %p106 = scmp.eq.s32.totalorder %s44, 0
      %p107 = por %p105, %p106
      %p108 = scmp.ne.s32.totalorder %s96, %s97
      %p109 = scmp.eq.s32.totalorder %s45, 1
      %p110 = por %p108, %p109
      %p112 = scmp.ne.s32.totalorder %s97, %s111
      %p113 = scmp.eq.s32.totalorder %s45, 0
      %p114 = por %p112, %p113
      %s116 = sadd.s32 %s115, 1
      %p119 = scmp.eq.s32.totalorder %s39, 1
      %p120 = scmp.ne.s32.totalorder %s115, %s117
      %p121 = scmp.eq.s32.totalorder %s39, 0
      %p122 = por %p120, %p121
      %p123 = scmp.ne.s32.totalorder %s115, %s117
      %p124 = scmp.eq.s32.totalorder %s44, 1
      %p125 = por %p123, %p124
      %p126 = scmp.ne.s32.totalorder %s117, %s118
      %p127 = scmp.eq.s32.totalorder %s44, 0
      %p128 = por %p126, %p127
      %p129 = scmp.ne.s32.totalorder %s117, %s118
      %p130 = scmp.eq.s32.totalorder %s45, 1
      %p131 = por %p129, %p130
      %p133 = scmp.ne.s32.totalorder %s118, %s132
      %p134 = scmp.eq.s32.totalorder %s45, 0
      %p135 = por %p133, %p134
      %s137 = sadd.s32 %s136, 1
      %p140 = scmp.eq.s32.totalorder %s39, 1
      %p141 = scmp.ne.s32.totalorder %s136, %s138
      %p142 = scmp.eq.s32.totalorder %s39, 0
      %p143 = por %p141, %p142
      %p144 = scmp.ne.s32.totalorder %s136, %s138
      %p145 = scmp.eq.s32.totalorder %s44, 1
      %p146 = por %p144, %p145
      %p147 = scmp.ne.s32.totalorder %s138, %s139
      %p148 = scmp.eq.s32.totalorder %s44, 0
      %p149 = por %p147, %p148
      %p150 = scmp.ne.s32.totalorder %s138, %s139
      %p151 = scmp.eq.s32.totalorder %s45, 1
      %p152 = por %p150, %p151
      %p154 = scmp.ne.s32.totalorder %s139, %s153
      %p155 = scmp.eq.s32.totalorder %s45, 0
      %p156 = por %p154, %p155
      %s158 = sadd.s32 %s157, 1
      %p161 = scmp.eq.s32.totalorder %s39, 1
      %p162 = scmp.ne.s32.totalorder %s157, %s159
      %p163 = scmp.eq.s32.totalorder %s39, 0
      %p164 = por %p162, %p163
      %p165 = scmp.ne.s32.totalorder %s157, %s159
      %p166 = scmp.eq.s32.totalorder %s44, 1
      %p167 = por %p165, %p166
      %p168 = scmp.ne.s32.totalorder %s159, %s160
      %p169 = scmp.eq.s32.totalorder %s44, 0
      %p170 = por %p168, %p169
      %p171 = scmp.ne.s32.totalorder %s159, %s160
      %p172 = scmp.eq.s32.totalorder %s45, 1
      %p173 = por %p171, %p172
      %p175 = scmp.ne.s32.totalorder %s160, %s174
      %p176 = scmp.eq.s32.totalorder %s45, 0
      %p177 = por %p175, %p176
      %s179 = sadd.s32 %s178, 1
      %p182 = scmp.eq.s32.totalorder %s39, 1
      %p183 = scmp.ne.s32.totalorder %s178, %s180
      %p184 = scmp.eq.s32.totalorder %s39, 0
      %p185 = por %p183, %p184
      %p186 = scmp.ne.s32.totalorder %s178, %s180
      %p187 = scmp.eq.s32.totalorder %s44, 1
      %p188 = por %p186, %p187
      %p189 = scmp.ne.s32.totalorder %s180, %s181
      %p190 = scmp.eq.s32.totalorder %s44, 0
      %p191 = por %p189, %p190
      %p192 = scmp.ne.s32.totalorder %s180, %s181
      %p193 = scmp.eq.s32.totalorder %s45, 1
      %p194 = por %p192, %p193
      %p196 = scmp.ne.s32.totalorder %s181, %s195
      %p197 = scmp.eq.s32.totalorder %s45, 0
      %p198 = por %p196, %p197
      %s200 = sadd.s32 %s199, 1
      %p203 = scmp.eq.s32.totalorder %s39, 1
      %p204 = scmp.ne.s32.totalorder %s199, %s201
      %p205 = scmp.eq.s32.totalorder %s39, 0
      %p206 = por %p204, %p205
      %p207 = scmp.ne.s32.totalorder %s199, %s201
      %p208 = scmp.eq.s32.totalorder %s44, 1
      %p209 = por %p207, %p208
      %p210 = scmp.ne.s32.totalorder %s201, %s202
      %p211 = scmp.eq.s32.totalorder %s44, 0
      %p212 = por %p210, %p211
      %p213 = scmp.ne.s32.totalorder %s201, %s202
      %p214 = scmp.eq.s32.totalorder %s45, 1
      %p215 = por %p213, %p214
      %p217 = scmp.ne.s32.totalorder %s202, %s216
      %p218 = scmp.eq.s32.totalorder %s45, 0
      %p219 = por %p217, %p218
      %s221 = sadd.s32 %s220, 1
      %p224 = scmp.eq.s32.totalorder %s39, 1
      %p225 = scmp.ne.s32.totalorder %s220, %s222
      %p226 = scmp.eq.s32.totalorder %s39, 0
      %p227 = por %p225, %p226
      %p228 = scmp.ne.s32.totalorder %s220, %s222
      %p229 = scmp.eq.s32.totalorder %s44, 1
      %p230 = por %p228, %p229
      %p231 = scmp.ne.s32.totalorder %s222, %s223
      %p232 = scmp.eq.s32.totalorder %s44, 0
      %p233 = por %p231, %p232
      %p234 = scmp.ne.s32.totalorder %s222, %s223
      %p235 = scmp.eq.s32.totalorder %s45, 1
      %p236 = por %p234, %p235
      %p238 = scmp.ne.s32.totalorder %s223, %s237
      %p239 = scmp.eq.s32.totalorder %s45, 0
      %p240 = por %p238, %p239
      %s242 = sadd.s32 %s241, 1
      %p245 = scmp.eq.s32.totalorder %s39, 1
      %p246 = scmp.ne.s32.totalorder %s241, %s243
      %p247 = scmp.eq.s32.totalorder %s39, 0
      %p248 = por %p246, %p247
      %p249 = scmp.ne.s32.totalorder %s241, %s243
      %p250 = scmp.eq.s32.totalorder %s44, 1
      %p251 = por %p249, %p250
      %p252 = scmp.ne.s32.totalorder %s243, %s244
      %p253 = scmp.eq.s32.totalorder %s44, 0
      %p254 = por %p252, %p253
      %p255 = scmp.ne.s32.totalorder %s243, %s244
      %p256 = scmp.eq.s32.totalorder %s45, 1
      %p257 = por %p255, %p256
      %p259 = scmp.ne.s32.totalorder %s244, %s258
      %p260 = scmp.eq.s32.totalorder %s45, 0
      %p261 = por %p259, %p260
      %s263 = sadd.s32 %s262, 1
      %p266 = scmp.eq.s32.totalorder %s39, 1
      %p267 = scmp.ne.s32.totalorder %s262, %s264
      %p268 = scmp.eq.s32.totalorder %s39, 0
      %p269 = por %p267, %p268
      %p270 = scmp.ne.s32.totalorder %s262, %s264
      %p271 = scmp.eq.s32.totalorder %s44, 1
      %p272 = por %p270, %p271
      %p273 = scmp.ne.s32.totalorder %s264, %s265
      %p274 = scmp.eq.s32.totalorder %s44, 0
      %p275 = por %p273, %p274
      %p276 = scmp.ne.s32.totalorder %s264, %s265
      %p277 = scmp.eq.s32.totalorder %s45, 1
      %p278 = por %p276, %p277
      %p280 = scmp.ne.s32.totalorder %s265, %s279
      %p281 = scmp.eq.s32.totalorder %s45, 0
      %p282 = por %p280, %p281
      %s284 = sadd.s32 %s283, 1
      %p287 = scmp.eq.s32.totalorder %s39, 1
      %p288 = scmp.ne.s32.totalorder %s283, %s285
      %p289 = scmp.eq.s32.totalorder %s39, 0
      %p290 = por %p288, %p289
      %p291 = scmp.ne.s32.totalorder %s283, %s285
      %p292 = scmp.eq.s32.totalorder %s44, 1
      %p293 = por %p291, %p292
      %p294 = scmp.ne.s32.totalorder %s285, %s286
      %p295 = scmp.eq.s32.totalorder %s44, 0
      %p296 = por %p294, %p295
      %p297 = scmp.ne.s32.totalorder %s285, %s286
      %p298 = scmp.eq.s32.totalorder %s45, 1
      %p299 = por %p297, %p298
      %p301 = scmp.ne.s32.totalorder %s286, %s300
      %p302 = scmp.eq.s32.totalorder %s45, 0
      %p303 = por %p301, %p302
      %s305 = sadd.s32 %s304, 1
      %p308 = scmp.eq.s32.totalorder %s39, 1
      %p309 = scmp.ne.s32.totalorder %s304, %s306
      %p310 = scmp.eq.s32.totalorder %s39, 0
      %p311 = por %p309, %p310
      %p312 = scmp.ne.s32.totalorder %s304, %s306
      %p313 = scmp.eq.s32.totalorder %s44, 1
      %p314 = por %p312, %p313
      %p315 = scmp.ne.s32.totalorder %s306, %s307
      %p316 = scmp.eq.s32.totalorder %s44, 0
      %p317 = por %p315, %p316
      %p318 = scmp.ne.s32.totalorder %s306, %s307
      %p319 = scmp.eq.s32.totalorder %s45, 1
      %p320 = por %p318, %p319
      %p322 = scmp.ne.s32.totalorder %s307, %s321
      %p323 = scmp.eq.s32.totalorder %s45, 0
      %p324 = por %p322, %p323
      %s326 = sadd.s32 %s325, 1
      %p329 = scmp.eq.s32.totalorder %s39, 1
      %p330 = scmp.ne.s32.totalorder %s325, %s327
      %p331 = scmp.eq.s32.totalorder %s39, 0
      %p332 = por %p330, %p331
      %p333 = scmp.ne.s32.totalorder %s325, %s327
      %p334 = scmp.eq.s32.totalorder %s44, 1
      %p335 = por %p333, %p334
      %p336 = scmp.ne.s32.totalorder %s327, %s328
      %p337 = scmp.eq.s32.totalorder %s44, 0
      %p338 = por %p336, %p337
      %p339 = scmp.ne.s32.totalorder %s327, %s328
      %p340 = scmp.eq.s32.totalorder %s45, 1
      %p341 = por %p339, %p340
      %p343 = scmp.ne.s32.totalorder %s328, %s342
      %p344 = scmp.eq.s32.totalorder %s45, 0
      %p345 = por %p343, %p344
      %s347 = sadd.s32 %s346, 1
      %p350 = scmp.eq.s32.totalorder %s39, 1
      %p351 = scmp.ne.s32.totalorder %s346, %s348
      %p352 = scmp.eq.s32.totalorder %s39, 0
      %p353 = por %p351, %p352
      %p354 = scmp.ne.s32.totalorder %s346, %s348
      %p355 = scmp.eq.s32.totalorder %s44, 1
      %p356 = por %p354, %p355
      %p357 = scmp.ne.s32.totalorder %s348, %s349
      %p358 = scmp.eq.s32.totalorder %s44, 0
      %p359 = por %p357, %p358
      %p360 = scmp.ne.s32.totalorder %s348, %s349
      %p361 = scmp.eq.s32.totalorder %s45, 1
      %p362 = por %p360, %p361
      %p364 = scmp.ne.s32.totalorder %s349, %s363
      %p365 = scmp.eq.s32.totalorder %s45, 0
      %p366 = por %p364, %p365
      %s368 = sadd.s32 %s367, 1
      %p371 = scmp.eq.s32.totalorder %s39, 1
      %p372 = scmp.ne.s32.totalorder %s367, %s369
      %p373 = scmp.eq.s32.totalorder %s39, 0
      %p374 = por %p372, %p373
      %p375 = scmp.ne.s32.totalorder %s367, %s369
      %p376 = scmp.eq.s32.totalorder %s44, 1
      %p377 = por %p375, %p376
      %p378 = scmp.ne.s32.totalorder %s369, %s370
      %p379 = scmp.eq.s32.totalorder %s44, 0
      %p380 = por %p378, %p379
      %p381 = scmp.ne.s32.totalorder %s369, %s370
      %p382 = scmp.eq.s32.totalorder %s45, 1
      %p383 = por %p381, %p382
      %p385 = scmp.ne.s32.totalorder %s370, %s384
      %p386 = scmp.eq.s32.totalorder %s45, 0
      %p387 = por %p385, %p386
      %s389 = sadd.s32 %s388, 1
      %p392 = scmp.eq.s32.totalorder %s39, 1
      %p393 = scmp.ne.s32.totalorder %s388, %s390
      %p394 = scmp.eq.s32.totalorder %s39, 0
      %p395 = por %p393, %p394
      %p396 = scmp.ne.s32.totalorder %s388, %s390
      %p397 = scmp.eq.s32.totalorder %s44, 1
      %p398 = por %p396, %p397
      %p399 = scmp.ne.s32.totalorder %s390, %s391
      %p400 = scmp.eq.s32.totalorder %s44, 0
      %p401 = por %p399, %p400
      %p402 = scmp.ne.s32.totalorder %s390, %s391
      %p403 = scmp.eq.s32.totalorder %s45, 1
      %p404 = por %p402, %p403
      %p406 = scmp.ne.s32.totalorder %s391, %s405
      %p407 = scmp.eq.s32.totalorder %s45, 0
      %p408 = por %p406, %p407
      %s410 = sadd.s32 %s409, 1
      %p413 = scmp.eq.s32.totalorder %s39, 1
      %p414 = scmp.ne.s32.totalorder %s409, %s411
      %p415 = scmp.eq.s32.totalorder %s39, 0
      %p416 = por %p414, %p415
      %p417 = scmp.ne.s32.totalorder %s409, %s411
      %p418 = scmp.eq.s32.totalorder %s44, 1
      %p419 = por %p417, %p418
      %p420 = scmp.ne.s32.totalorder %s411, %s412
      %p421 = scmp.eq.s32.totalorder %s44, 0
      %p422 = por %p420, %p421
      %p423 = scmp.ne.s32.totalorder %s411, %s412
      %p424 = scmp.eq.s32.totalorder %s45, 1
      %p425 = por %p423, %p424
      %p427 = scmp.ne.s32.totalorder %s412, %s426
      %p428 = scmp.eq.s32.totalorder %s45, 0
      %p429 = por %p427, %p428
      %s431 = sadd.s32 %s430, 1
      %p434 = scmp.eq.s32.totalorder %s39, 1
      %p435 = scmp.ne.s32.totalorder %s430, %s432
      %p436 = scmp.eq.s32.totalorder %s39, 0
      %p437 = por %p435, %p436
      %p438 = scmp.ne.s32.totalorder %s430, %s432
      %p439 = scmp.eq.s32.totalorder %s44, 1
      %p440 = por %p438, %p439
      %p441 = scmp.ne.s32.totalorder %s432, %s433
      %p442 = scmp.eq.s32.totalorder %s44, 0
      %p443 = por %p441, %p442
      %p444 = scmp.ne.s32.totalorder %s432, %s433
      %p445 = scmp.eq.s32.totalorder %s45, 1
      %p446 = por %p444, %p445
      %p448 = scmp.ne.s32.totalorder %s433, %s447
      %p449 = scmp.eq.s32.totalorder %s45, 0
      %p450 = por %p448, %p449
      %s452 = sadd.s32 %s451, 1
      %p455 = scmp.eq.s32.totalorder %s39, 1
      %p456 = scmp.ne.s32.totalorder %s451, %s453
      %p457 = scmp.eq.s32.totalorder %s39, 0
      %p458 = por %p456, %p457
      %p459 = scmp.ne.s32.totalorder %s451, %s453
      %p460 = scmp.eq.s32.totalorder %s44, 1
      %p461 = por %p459, %p460
      %p462 = scmp.ne.s32.totalorder %s453, %s454
      %p463 = scmp.eq.s32.totalorder %s44, 0
      %p464 = por %p462, %p463
      %p465 = scmp.ne.s32.totalorder %s453, %s454
      %p466 = scmp.eq.s32.totalorder %s45, 1
      %p467 = por %p465, %p466
      %p469 = scmp.ne.s32.totalorder %s454, %s468
      %p470 = scmp.eq.s32.totalorder %s45, 0
      %p471 = por %p469, %p470
      %s473 = sadd.s32 %s472, 1
      %p476 = scmp.eq.s32.totalorder %s39, 1
      %p477 = scmp.ne.s32.totalorder %s472, %s474
      %p478 = scmp.eq.s32.totalorder %s39, 0
      %p479 = por %p477, %p478
      %p480 = scmp.ne.s32.totalorder %s472, %s474
      %p481 = scmp.eq.s32.totalorder %s44, 1
      %p482 = por %p480, %p481
      %p483 = scmp.ne.s32.totalorder %s474, %s475
      %p484 = scmp.eq.s32.totalorder %s44, 0
      %p485 = por %p483, %p484
      %p486 = scmp.ne.s32.totalorder %s474, %s475
      %p487 = scmp.eq.s32.totalorder %s45, 1
      %p488 = por %p486, %p487
      %p490 = scmp.ne.s32.totalorder %s475, %s489
      %p491 = scmp.eq.s32.totalorder %s45, 0
      %p492 = por %p490, %p491
      %s494 = sadd.s32 %s493, 1
      %p497 = scmp.eq.s32.totalorder %s39, 1
      %p498 = scmp.ne.s32.totalorder %s493, %s495
      %p499 = scmp.eq.s32.totalorder %s39, 0
      %p500 = por %p498, %p499
      %p501 = scmp.ne.s32.totalorder %s493, %s495
      %p502 = scmp.eq.s32.totalorder %s44, 1
      %p503 = por %p501, %p502
      %p504 = scmp.ne.s32.totalorder %s495, %s496
      %p505 = scmp.eq.s32.totalorder %s44, 0
      %p506 = por %p504, %p505
      %p507 = scmp.ne.s32.totalorder %s495, %s496
      %p508 = scmp.eq.s32.totalorder %s45, 1
      %p509 = por %p507, %p508
      %p511 = scmp.ne.s32.totalorder %s496, %s510
      %p512 = scmp.eq.s32.totalorder %s45, 0
      %p513 = por %p511, %p512
      %s515 = sadd.s32 %s514, 1
      %p518 = scmp.eq.s32.totalorder %s39, 1
      %p519 = scmp.ne.s32.totalorder %s514, %s516
      %p520 = scmp.eq.s32.totalorder %s39, 0
      %p521 = por %p519, %p520
      %p522 = scmp.ne.s32.totalorder %s514, %s516
      %p523 = scmp.eq.s32.totalorder %s44, 1
      %p524 = por %p522, %p523
      %p525 = scmp.ne.s32.totalorder %s516, %s517
      %p526 = scmp.eq.s32.totalorder %s44, 0
      %p527 = por %p525, %p526
      %p528 = scmp.ne.s32.totalorder %s516, %s517
      %p529 = scmp.eq.s32.totalorder %s45, 1
      %p530 = por %p528, %p529
      %p532 = scmp.ne.s32.totalorder %s517, %s531
      %p533 = scmp.eq.s32.totalorder %s45, 0
      %p534 = por %p532, %p533
      %s536 = sadd.s32 %s535, 1
      %p539 = scmp.eq.s32.totalorder %s39, 1
      %p540 = scmp.ne.s32.totalorder %s535, %s537
      %p541 = scmp.eq.s32.totalorder %s39, 0
      %p542 = por %p540, %p541
      %p543 = scmp.ne.s32.totalorder %s535, %s537
      %p544 = scmp.eq.s32.totalorder %s44, 1
      %p545 = por %p543, %p544
      %p546 = scmp.ne.s32.totalorder %s537, %s538
      %p547 = scmp.eq.s32.totalorder %s44, 0
      %p548 = por %p546, %p547
      %p549 = scmp.ne.s32.totalorder %s537, %s538
      %p550 = scmp.eq.s32.totalorder %s45, 1
      %p551 = por %p549, %p550
      %p553 = scmp.ne.s32.totalorder %s538, %s552
      %p554 = scmp.eq.s32.totalorder %s45, 0
      %p555 = por %p553, %p554
      %s557 = sadd.s32 %s556, 1
      %p560 = scmp.eq.s32.totalorder %s39, 1
      %p561 = scmp.ne.s32.totalorder %s556, %s558
      %p562 = scmp.eq.s32.totalorder %s39, 0
      %p563 = por %p561, %p562
      %p564 = scmp.ne.s32.totalorder %s556, %s558
      %p565 = scmp.eq.s32.totalorder %s44, 1
      %p566 = por %p564, %p565
      %p567 = scmp.ne.s32.totalorder %s558, %s559
      %p568 = scmp.eq.s32.totalorder %s44, 0
      %p569 = por %p567, %p568
      %p570 = scmp.ne.s32.totalorder %s558, %s559
      %p571 = scmp.eq.s32.totalorder %s45, 1
      %p572 = por %p570, %p571
      %p574 = scmp.ne.s32.totalorder %s559, %s573
      %p575 = scmp.eq.s32.totalorder %s45, 0
      %p576 = por %p574, %p575
      %s577 = ssub.s32 %s39, %s46
      %p578 = scmp.eq.s32.totalorder %s577, 0
      %s580 = sadd.s32 %s579, 1
      %s581 = scalar_select %p578, %s579, %s580
      %p584 = pneg %p578
      %p585 = scmp.eq.s32.totalorder %s39, 1
      %p586 = por %p584, %p585
      %p587 = scmp.ne.s32.totalorder %s579, %s582
      %p588 = scmp.eq.s32.totalorder %s39, 0
      %p589 = por %p587, %p588
      %p590 = scmp.ne.s32.totalorder %s579, %s582
      %p591 = scmp.eq.s32.totalorder %s44, 1
      %p592 = por %p590, %p591
      %p593 = scmp.ne.s32.totalorder %s582, %s583
      %p594 = scmp.eq.s32.totalorder %s44, 0
      %p595 = por %p593, %p594
      %p596 = scmp.ne.s32.totalorder %s582, %s583
      %p597 = scmp.eq.s32.totalorder %s45, 1
      %p598 = por %p596, %p597
      %p600 = scmp.ne.s32.totalorder %s583, %s599
      %p601 = scmp.eq.s32.totalorder %s45, 0
      %p602 = por %p600, %p601
      %s603 = ssub.s32 %s39, %s46
      %p604 = scmp.eq.s32.totalorder %s603, 0
      %s606 = sadd.s32 %s605, 1
      %s607 = scalar_select %p604, %s605, %s606
      %p610 = pneg %p604
      %p611 = scmp.eq.s32.totalorder %s39, 1
      %p612 = por %p610, %p611
      %p613 = scmp.ne.s32.totalorder %s605, %s608
      %p614 = scmp.eq.s32.totalorder %s39, 0
      %p615 = por %p613, %p614
      %p616 = scmp.ne.s32.totalorder %s605, %s608
      %p617 = scmp.eq.s32.totalorder %s44, 1
      %p618 = por %p616, %p617
      %p619 = scmp.ne.s32.totalorder %s608, %s609
      %p620 = scmp.eq.s32.totalorder %s44, 0
      %p621 = por %p619, %p620
      %p622 = scmp.ne.s32.totalorder %s608, %s609
      %p623 = scmp.eq.s32.totalorder %s45, 1
      %p624 = por %p622, %p623
      %p626 = scmp.ne.s32.totalorder %s609, %s625
      %p627 = scmp.eq.s32.totalorder %s45, 0
      %p628 = por %p626, %p627
      %p629 = scmp.le.s32.totalorder 1, %s39
      %p630 = scmp.lt.s32.totalorder %s39, 3
      %p631 = pnand %p629, %p630
      %p632 = pneg %p631
      // Predicated region
      $region9: #{tpu_custom_call.1} parent=5 // pred_check
        _
      $region10: #{tpu_custom_call.1} parent=5 // pred_check_branch
        %634 = sbr.rel (%p631) target = $region12
      $region11: #{tpu_custom_call.1} parent=5 // pred_region
        %s635 = ssub.s32 %s39, 1
        // Predicated region
        $region13: #{tpu_custom_call.1} parent=11 // pred_check
          %p636 = pneg %p86
        $region14: #{tpu_custom_call.1} parent=11 // pred_check_branch
          %638 = sbr.rel (%p636) target = $region16
        $region15: #{tpu_custom_call.1} parent=11 // pred_region
          _
        $region16: #{tpu_custom_call.1} parent=11 // pred_fallthru
          _
        // Predicated region
        $region17: #{tpu_custom_call.1} parent=11 // pred_check
          %p639 = pneg %p107
        $region18: #{tpu_custom_call.1} parent=11 // pred_check_branch
          %641 = sbr.rel (%p639) target = $region20
        $region19: #{tpu_custom_call.1} parent=11 // pred_region
          _
        $region20: #{tpu_custom_call.1} parent=11 // pred_fallthru
          _
        // Predicated region
        $region21: #{tpu_custom_call.1} parent=11 // pred_check
          %p642 = pneg %p128
        $region22: #{tpu_custom_call.1} parent=11 // pred_check_branch
          %644 = sbr.rel (%p642) target = $region24
        $region23: #{tpu_custom_call.1} parent=11 // pred_region
          _
        $region24: #{tpu_custom_call.1} parent=11 // pred_fallthru
          _
        // Predicated region
        $region25: #{tpu_custom_call.1} parent=11 // pred_check
          %p645 = pneg %p149
        $region26: #{tpu_custom_call.1} parent=11 // pred_check_branch
          %647 = sbr.rel (%p645) target = $region28
        $region27: #{tpu_custom_call.1} parent=11 // pred_region
          _
        $region28: #{tpu_custom_call.1} parent=11 // pred_fallthru
          _
        // Predicated region
        $region29: #{tpu_custom_call.1} parent=11 // pred_check
          %p648 = pneg %p170
        $region30: #{tpu_custom_call.1} parent=11 // pred_check_branch
          %650 = sbr.rel (%p648) target = $region32
        $region31: #{tpu_custom_call.1} parent=11 // pred_region
          _
        $region32: #{tpu_custom_call.1} parent=11 // pred_fallthru
          _
        // Predicated region
        $region33: #{tpu_custom_call.1} parent=11 // pred_check
          %p651 = pneg %p191
        $region34: #{tpu_custom_call.1} parent=11 // pred_check_branch
          %653 = sbr.rel (%p651) target = $region36
        $region35: #{tpu_custom_call.1} parent=11 // pred_region
          _
        $region36: #{tpu_custom_call.1} parent=11 // pred_fallthru
          _
        // Predicated region
        $region37: #{tpu_custom_call.1} parent=11 // pred_check
          %p654 = pneg %p212
        $region38: #{tpu_custom_call.1} parent=11 // pred_check_branch
          %656 = sbr.rel (%p654) target = $region40
        $region39: #{tpu_custom_call.1} parent=11 // pred_region
          _
        $region40: #{tpu_custom_call.1} parent=11 // pred_fallthru
          _
        // Predicated region
        $region41: #{tpu_custom_call.1} parent=11 // pred_check
          %p657 = pneg %p233
        $region42: #{tpu_custom_call.1} parent=11 // pred_check_branch
          %659 = sbr.rel (%p657) target = $region44
        $region43: #{tpu_custom_call.1} parent=11 // pred_region
          _
        $region44: #{tpu_custom_call.1} parent=11 // pred_fallthru
          _
        // Predicated region
        $region45: #{tpu_custom_call.1} parent=11 // pred_check
          %p660 = pneg %p254
        $region46: #{tpu_custom_call.1} parent=11 // pred_check_branch
          %662 = sbr.rel (%p660) target = $region48
        $region47: #{tpu_custom_call.1} parent=11 // pred_region
          _
        $region48: #{tpu_custom_call.1} parent=11 // pred_fallthru
          _
        // Predicated region
        $region49: #{tpu_custom_call.1} parent=11 // pred_check
          %p663 = pneg %p275
        $region50: #{tpu_custom_call.1} parent=11 // pred_check_branch
          %665 = sbr.rel (%p663) target = $region52
        $region51: #{tpu_custom_call.1} parent=11 // pred_region
          _
        $region52: #{tpu_custom_call.1} parent=11 // pred_fallthru
          _
        // Predicated region
        $region53: #{tpu_custom_call.1} parent=11 // pred_check
          %p666 = pneg %p296
        $region54: #{tpu_custom_call.1} parent=11 // pred_check_branch
          %668 = sbr.rel (%p666) target = $region56
        $region55: #{tpu_custom_call.1} parent=11 // pred_region
          _
        $region56: #{tpu_custom_call.1} parent=11 // pred_fallthru
          _
        // Predicated region
        $region57: #{tpu_custom_call.1} parent=11 // pred_check
          %p669 = pneg %p317
        $region58: #{tpu_custom_call.1} parent=11 // pred_check_branch
          %671 = sbr.rel (%p669) target = $region60
        $region59: #{tpu_custom_call.1} parent=11 // pred_region
          _
        $region60: #{tpu_custom_call.1} parent=11 // pred_fallthru
          _
        // Predicated region
        $region61: #{tpu_custom_call.1} parent=11 // pred_check
          %p672 = pneg %p338
        $region62: #{tpu_custom_call.1} parent=11 // pred_check_branch
          %674 = sbr.rel (%p672) target = $region64
        $region63: #{tpu_custom_call.1} parent=11 // pred_region
          _
        $region64: #{tpu_custom_call.1} parent=11 // pred_fallthru
          _
        // Predicated region
        $region65: #{tpu_custom_call.1} parent=11 // pred_check
          %p675 = pneg %p359
        $region66: #{tpu_custom_call.1} parent=11 // pred_check_branch
          %677 = sbr.rel (%p675) target = $region68
        $region67: #{tpu_custom_call.1} parent=11 // pred_region
          _
        $region68: #{tpu_custom_call.1} parent=11 // pred_fallthru
          _
        // Predicated region
        $region69: #{tpu_custom_call.1} parent=11 // pred_check
          %p678 = pneg %p380
        $region70: #{tpu_custom_call.1} parent=11 // pred_check_branch
          %680 = sbr.rel (%p678) target = $region72
        $region71: #{tpu_custom_call.1} parent=11 // pred_region
          _
        $region72: #{tpu_custom_call.1} parent=11 // pred_fallthru
          _
        // Predicated region
        $region73: #{tpu_custom_call.1} parent=11 // pred_check
          %p681 = pneg %p401
        $region74: #{tpu_custom_call.1} parent=11 // pred_check_branch
          %683 = sbr.rel (%p681) target = $region76
        $region75: #{tpu_custom_call.1} parent=11 // pred_region
          _
        $region76: #{tpu_custom_call.1} parent=11 // pred_fallthru
          _
        // Predicated region
        $region77: #{tpu_custom_call.1} parent=11 // pred_check
          %p684 = pneg %p422
        $region78: #{tpu_custom_call.1} parent=11 // pred_check_branch
          %686 = sbr.rel (%p684) target = $region80
        $region79: #{tpu_custom_call.1} parent=11 // pred_region
          _
        $region80: #{tpu_custom_call.1} parent=11 // pred_fallthru
          _
        // Predicated region
        $region81: #{tpu_custom_call.1} parent=11 // pred_check
          %p687 = pneg %p443
        $region82: #{tpu_custom_call.1} parent=11 // pred_check_branch
          %689 = sbr.rel (%p687) target = $region84
        $region83: #{tpu_custom_call.1} parent=11 // pred_region
          _
        $region84: #{tpu_custom_call.1} parent=11 // pred_fallthru
          _
        // Predicated region
        $region85: #{tpu_custom_call.1} parent=11 // pred_check
          %p690 = pneg %p464
        $region86: #{tpu_custom_call.1} parent=11 // pred_check_branch
          %692 = sbr.rel (%p690) target = $region88
        $region87: #{tpu_custom_call.1} parent=11 // pred_region
          _
        $region88: #{tpu_custom_call.1} parent=11 // pred_fallthru
          _
        // Predicated region
        $region89: #{tpu_custom_call.1} parent=11 // pred_check
          %p693 = pneg %p485
        $region90: #{tpu_custom_call.1} parent=11 // pred_check_branch
          %695 = sbr.rel (%p693) target = $region92
        $region91: #{tpu_custom_call.1} parent=11 // pred_region
          _
        $region92: #{tpu_custom_call.1} parent=11 // pred_fallthru
          _
        // Predicated region
        $region93: #{tpu_custom_call.1} parent=11 // pred_check
          %p696 = pneg %p506
        $region94: #{tpu_custom_call.1} parent=11 // pred_check_branch
          %698 = sbr.rel (%p696) target = $region96
        $region95: #{tpu_custom_call.1} parent=11 // pred_region
          _
        $region96: #{tpu_custom_call.1} parent=11 // pred_fallthru
          _
        // Predicated region
        $region97: #{tpu_custom_call.1} parent=11 // pred_check
          %p699 = pneg %p527
        $region98: #{tpu_custom_call.1} parent=11 // pred_check_branch
          %701 = sbr.rel (%p699) target = $region100
        $region99: #{tpu_custom_call.1} parent=11 // pred_region
          _
        $region100: #{tpu_custom_call.1} parent=11 // pred_fallthru
          _
        // Predicated region
        $region101: #{tpu_custom_call.1} parent=11 // pred_check
          %p702 = pneg %p548
        $region102: #{tpu_custom_call.1} parent=11 // pred_check_branch
          %704 = sbr.rel (%p702) target = $region104
        $region103: #{tpu_custom_call.1} parent=11 // pred_region
          _
        $region104: #{tpu_custom_call.1} parent=11 // pred_fallthru
          _
        // Predicated region
        $region105: #{tpu_custom_call.1} parent=11 // pred_check
          %p705 = pneg %p569
        $region106: #{tpu_custom_call.1} parent=11 // pred_check_branch
          %707 = sbr.rel (%p705) target = $region108
        $region107: #{tpu_custom_call.1} parent=11 // pred_region
          _
        $region108: #{tpu_custom_call.1} parent=11 // pred_fallthru
          _
      $region12: #{tpu_custom_call.1} parent=5 // pred_fallthru
        _
      %p708 = scmp.lt.s32.totalorder %s39, 2
      // Predicated region
      $region109: #{tpu_custom_call.1} parent=5 // pred_check
        %p709 = pneg %p708
      $region110: #{tpu_custom_call.1} parent=5 // pred_check_branch
        %711 = sbr.rel (%p709) target = $region112
      $region111: #{tpu_custom_call.1} parent=5 // pred_region
        // Predicated region
        $region113: #{tpu_custom_call.1} parent=111 // pred_check
          %p712 = pneg %p59
        $region114: #{tpu_custom_call.1} parent=111 // pred_check_branch
          %714 = sbr.rel (%p712) target = $region116
        $region115: #{tpu_custom_call.1} parent=111 // pred_region
          %p715 = scmp.lt.s32.totalorder %s39, 1
          %s716 = scalar_select %p715, %s39, 1
          %s717 = smul.addr %s716, 8
          %s718 = scalar_lea.vmem %s0, %s717
        $region116: #{tpu_custom_call.1} parent=111 // pred_fallthru
          _
      $region112: #{tpu_custom_call.1} parent=5 // pred_fallthru
        _
      %p719 = scmp.le.s32.totalorder 1, %s39
      %p720 = scmp.lt.s32.totalorder %s39, 3
      %p721 = pnand %p719, %p720
      %p722 = pneg %p721
      // Predicated region
      $region117: #{tpu_custom_call.1} parent=5 // pred_check
        _
      $region118: #{tpu_custom_call.1} parent=5 // pred_check_branch
        %724 = sbr.rel (%p721) target = $region120
      $region119: #{tpu_custom_call.1} parent=5 // pred_region
        %s725 = ssub.s32 %s39, 1
        %p726 = scmp.lt.s32.totalorder %s44, 1
        %s727 = scalar_select %p726, %s44, 1
        %s728 = smul.addr %s727, 8
        %s729 = scalar_lea.vmem %s0, %s728
        %p730 = pneg %p65
        %p731 = pneg %p62
        %p732 = pneg %p86
        %p733 = pneg %p83
        %p734 = pneg %p107
        %p735 = pneg %p104
        %p736 = pneg %p128
        %p737 = pneg %p125
        %p738 = pneg %p149
        %p739 = pneg %p146
        %p740 = pneg %p170
        %p741 = pneg %p167
        %p742 = pneg %p191
        %p743 = pneg %p188
        %p744 = pneg %p212
        %p745 = pneg %p209
        %p746 = pneg %p233
        %p747 = pneg %p230
        %p748 = pneg %p254
        %p749 = pneg %p251
        %p750 = pneg %p275
        %p751 = pneg %p272
        %p752 = pneg %p296
        %p753 = pneg %p293
        %p754 = pneg %p317
        %p755 = pneg %p314
        %p756 = pneg %p338
        %p757 = pneg %p335
        %p758 = pneg %p359
        %p759 = pneg %p356
        %p760 = pneg %p380
        %p761 = pneg %p377
        %p762 = pneg %p401
        %p763 = pneg %p398
        %p764 = pneg %p422
        %p765 = pneg %p419
        %p766 = pneg %p443
        %p767 = pneg %p440
        %p768 = pneg %p464
        %p769 = pneg %p461
        %p770 = pneg %p485
        %p771 = pneg %p482
        %p772 = pneg %p506
        %p773 = pneg %p503
        %p774 = pneg %p527
        %p775 = pneg %p524
        %p776 = pneg %p548
        %p777 = pneg %p545
        %p778 = pneg %p569
        %p779 = pneg %p566
        %p780 = pneg %p595
        %p781 = pneg %p592
        %s782 = sand.u32 %s582, 1
        %s783 = scalar_lea.sflag [#allocation3], %s782
        %s784 = sand.u32 %s582, 1
        %s785 = smul.addr %s784, 8
        %s786 = scalar_lea.vmem [#allocation2], %s785
        %p787 = pneg %p621
        %p788 = pneg %p618
        %s789 = sand.u32 %s608, 1
        %s790 = scalar_lea.sflag [#allocation5], %s789
        %s791 = sand.u32 %s608, 1
        %s792 = scalar_lea.vmem [#allocation4], %s791
        %p793 = scmp.lt.s32.totalorder %s44, 1
        %s794 = scalar_select %p793, %s44, 1
        %s795 = smul.addr %s794, 8
        %s796 = scalar_lea.vmem %s0, %s795
        %v798 = vld [vmem:[%s796] sm:$0xff]
        %v799 = vld [vmem:[%s1] sm:$0x1]
        %v800 = vld [vmem:[%s2] sm:$0x1]
        %vm801 = vcmask 261120
        %v802 = vsel %vm801, %v798, 0.0
        %803 = vadd.xlane.f32.xlu0 %v802
        %v804 = vpop.xlane.xlu0 %803
        %v805 = vrcp.pop 32.0
        %v806 = vmul.f32 %v804, %v805
        %v807 = vsub.f32 %v798, %v806
        %v808 = vmul.f32 %v807, %v807
        %v809 = vsel %vm801, %v808, 0.0
        %810 = vadd.xlane.f32.xlu0 %v809
        %v811 = vpop.xlane.xlu0 %810
        %v812 = vmul.f32 %v811, %v805
        %v813 = vadd.f32 %v812, 1e-06
        %v814 = vrsqrt.pop %v813
        %v815 = vmul.f32 %v807, %v814
        %v817 = vlaneseq
        %v818 = vshrl.u32 %v817, 7
        %v819 = vsub.s32 0, %v818
        %v820 = vrot.slane %v799, %v819
        %v822 = vmul.f32 %v815, %v820
        %v824 = vlaneseq
        %v825 = vshrl.u32 %v824, 7
        %v826 = vsub.s32 0, %v825
        %v827 = vrot.slane %v800, %v826
        %v829 = vadd.f32 %v822, %v827
        %v830 = vpack.c.bf16 %v829, %v829
        %v831 = vld [vmem:[%s4] sm:$0x1]
        %v832 = vld [vmem:[%s3] sm:$0xf]
        %v833 = vld [vmem:[%s3 + $0x4] sm:$0xf]
        %v834 = vld [vmem:[%s3 + $0x8] sm:$0xf]
        %v835 = vld [vmem:[%s3 + $0xc] sm:$0xf]
        %v837 = vlaneseq
        %v838 = vshrl.u32 %v837, 7
        %v839 = vsub.s32 0, %v838
        %v840 = vrot.slane %v831, %v839
        %v846 = vunpack.c.l.b16 %v832
        %v847 = vunpack.c.l.b16 %v833
        %v848 = vunpack.c.l.b16 %v834
        %v849 = vunpack.c.l.b16 %v835
        %v850 = vpack.c.b16 %v847, %v846
        %v851 = vpack.c.b16 %v849, %v848
        %v855 = vsel %vm801, %v830, 0
        %857 = vmatprep.subr.bf16.mxu0 0
        %858 = vmatpush1.bf16.msra.mxu0 %v850
        %859 = vmatprep.subr.bf16.mxu0 0
        %860 = vmatpush1.bf16.msra.mxu0 %v851
        %861 = vmatprep.subr.bf16.mxu0 0
        %862 = vmatpush1.bf16.msra.mxu0 0
        %863 = vmatprep.subr.bf16.mxu0 0
        %864 = vmatpush1.bf16.msra.mxu0 0
        %865 = vmatprep.subr.bf16.mxu0 0
        %866 = vmatpush1.bf16.msra.mxu0 0
        %867 = vmatprep.subr.bf16.mxu0 0
        %868 = vmatpush1.bf16.msra.mxu0 0
        %869 = vmatprep.subr.bf16.mxu0 0
        %870 = vmatpush1.bf16.msra.mxu0 0
        %871 = vmatprep.subr.bf16.mxu0 0
        %872 = vmatpush1.bf16.msra.mxu0 0
        %873 = vmatprep.subr.bf16.mxu0 0
        %874 = vmatpush1.bf16.msra.mxu0 0
        %875 = vmatprep.subr.bf16.mxu0 0
        %876 = vmatpush1.bf16.msra.mxu0 0
        %877 = vmatprep.subr.bf16.mxu0 0
        %878 = vmatpush1.bf16.msra.mxu0 0
        %879 = vmatprep.subr.bf16.mxu0 0
        %880 = vmatpush1.bf16.msra.mxu0 0
        %881 = vmatprep.subr.bf16.mxu0 0
        %882 = vmatpush1.bf16.msra.mxu0 0
        %883 = vmatprep.subr.bf16.mxu0 0
        %884 = vmatpush1.bf16.msra.mxu0 0
        %885 = vmatprep.subr.bf16.mxu0 0
        %886 = vmatpush1.bf16.msra.mxu0 0
        %887 = vmatprep.subr.bf16.mxu0 0
        %888 = vmatpush1.bf16.msra.mxu0 0
        %889 = vmatprep.mubr.bf16.mxu0 0
        %890 = vmatmul.mubr.bf16.gmra.mrb[0].mxu0 %v855
        %v891 = vpop.f32.mrb[0].mxu0
        %v892 = vadd.f32 %v840, %v891
        %v893 = vpop.f32.mrb[0].mxu0
        %v894 = vpop.f32.mrb[0].mxu0
        %v895 = vpop.f32.mrb[0].mxu0
        %896 = vdwg.mxu0
        %v897 = vmul.f32 %v892, 0.25
        %898 = vrot.lane.b32.xlu0 %v850, 96
        %v899 = vpop.permute.xlu0 %898
        %900 = vrot.lane.b32.xlu0 %v851, 96
        %v901 = vpop.permute.xlu0 %900
        %904 = vrot.lane.b32.xlu0 %v840, 96
        %v905 = vpop.permute.xlu0 %904
        %907 = vmatprep.subr.bf16.mxu0 0
        %908 = vmatpush1.bf16.msra.mxu0 %v899
        %909 = vmatprep.subr.bf16.mxu0 0
        %910 = vmatpush1.bf16.msra.mxu0 %v901
        %911 = vmatprep.subr.bf16.mxu0 0
        %912 = vmatpush1.bf16.msra.mxu0 0
        %913 = vmatprep.subr.bf16.mxu0 0
        %914 = vmatpush1.bf16.msra.mxu0 0
        %915 = vmatprep.subr.bf16.mxu0 0
        %916 = vmatpush1.bf16.msra.mxu0 0
        %917 = vmatprep.subr.bf16.mxu0 0
        %918 = vmatpush1.bf16.msra.mxu0 0
        %919 = vmatprep.subr.bf16.mxu0 0
        %920 = vmatpush1.bf16.msra.mxu0 0
        %921 = vmatprep.subr.bf16.mxu0 0
        %922 = vmatpush1.bf16.msra.mxu0 0
        %923 = vmatprep.subr.bf16.mxu0 0
        %924 = vmatpush1.bf16.msra.mxu0 0
        %925 = vmatprep.subr.bf16.mxu0 0
        %926 = vmatpush1.bf16.msra.mxu0 0
        %927 = vmatprep.subr.bf16.mxu0 0
        %928 = vmatpush1.bf16.msra.mxu0 0
        %929 = vmatprep.subr.bf16.mxu0 0
        %930 = vmatpush1.bf16.msra.mxu0 0
        %931 = vmatprep.subr.bf16.mxu0 0
        %932 = vmatpush1.bf16.msra.mxu0 0
        %933 = vmatprep.subr.bf16.mxu0 0
        %934 = vmatpush1.bf16.msra.mxu0 0
        %935 = vmatprep.subr.bf16.mxu0 0
        %936 = vmatpush1.bf16.msra.mxu0 0
        %937 = vmatprep.subr.bf16.mxu0 0
        %938 = vmatpush1.bf16.msra.mxu0 0
        %939 = vmatprep.mubr.bf16.mxu0 0
        %940 = vmatmul.mubr.bf16.gmra.mrb[0].mxu0 %v855
        %v941 = vpop.f32.mrb[0].mxu0
        %v942 = vadd.f32 %v905, %v941
        %v943 = vpop.f32.mrb[0].mxu0
        %v944 = vpop.f32.mrb[0].mxu0
        %v945 = vpop.f32.mrb[0].mxu0
        %946 = vdwg.mxu0
        %947 = vrot.lane.b32.xlu0 %v850, 64
        %v948 = vpop.permute.xlu0 %947
        %949 = vrot.lane.b32.xlu0 %v851, 64
        %v950 = vpop.permute.xlu0 %949
        %953 = vrot.lane.b32.xlu0 %v840, 64
        %v954 = vpop.permute.xlu0 %953
        %956 = vmatprep.subr.bf16.mxu0 0
        %957 = vmatpush1.bf16.msra.mxu0 %v948
        %958 = vmatprep.subr.bf16.mxu0 0
        %959 = vmatpush1.bf16.msra.mxu0 %v950
        %960 = vmatprep.subr.bf16.mxu0 0
        %961 = vmatpush1.bf16.msra.mxu0 0
        %962 = vmatprep.subr.bf16.mxu0 0
        %963 = vmatpush1.bf16.msra.mxu0 0
        %964 = vmatprep.subr.bf16.mxu0 0
        %965 = vmatpush1.bf16.msra.mxu0 0
        %966 = vmatprep.subr.bf16.mxu0 0
        %967 = vmatpush1.bf16.msra.mxu0 0
        %968 = vmatprep.subr.bf16.mxu0 0
        %969 = vmatpush1.bf16.msra.mxu0 0
        %970 = vmatprep.subr.bf16.mxu0 0
        %971 = vmatpush1.bf16.msra.mxu0 0
        %972 = vmatprep.subr.bf16.mxu0 0
        %973 = vmatpush1.bf16.msra.mxu0 0
        %974 = vmatprep.subr.bf16.mxu0 0
        %975 = vmatpush1.bf16.msra.mxu0 0
        %976 = vmatprep.subr.bf16.mxu0 0
        %977 = vmatpush1.bf16.msra.mxu0 0
        %978 = vmatprep.subr.bf16.mxu0 0
        %979 = vmatpush1.bf16.msra.mxu0 0
        %980 = vmatprep.subr.bf16.mxu0 0
        %981 = vmatpush1.bf16.msra.mxu0 0
        %982 = vmatprep.subr.bf16.mxu0 0
        %983 = vmatpush1.bf16.msra.mxu0 0
        %984 = vmatprep.subr.bf16.mxu0 0
        %985 = vmatpush1.bf16.msra.mxu0 0
        %986 = vmatprep.subr.bf16.mxu0 0
        %987 = vmatpush1.bf16.msra.mxu0 0
        %988 = vmatprep.mubr.bf16.mxu0 0
        %989 = vmatmul.mubr.bf16.gmra.mrb[0].mxu0 %v855
        %v990 = vpop.f32.mrb[0].mxu0
        %v991 = vadd.f32 %v954, %v990
        %v992 = vpop.f32.mrb[0].mxu0
        %v993 = vpop.f32.mrb[0].mxu0
        %v994 = vpop.f32.mrb[0].mxu0
        %995 = vdwg.mxu0
        %v996 = vpack.c.bf16 %v897, %v897
        %v997 = vpack.c.bf16 %v942, %v942
        %v998 = vpack.c.bf16 %v991, %v991
        %vm999 = vcmask 130048
        %v1001 = vsel %vm999, %v996, 0
        %v1004 = vsel %vm999, %v997, 0
        %1006 = vmatprep.subr.bf16.mxu0 0
        %1007 = vmatpush1.bf16.xpose.msra.mxu0 %v1004
        %1008 = vmatprep.subr.bf16.mxu0 0
        %1009 = vmatpush1.bf16.xpose.msra.mxu0 0
        %1010 = vmatprep.subr.bf16.mxu0 0
        %1011 = vmatpush1.bf16.xpose.msra.mxu0 0
        %1012 = vmatprep.subr.bf16.mxu0 0
        %1013 = vmatpush1.bf16.xpose.msra.mxu0 0
        %1014 = vmatprep.subr.bf16.mxu0 0
        %1015 = vmatpush1.bf16.xpose.msra.mxu0 0
        %1016 = vmatprep.subr.bf16.mxu0 0
        %1017 = vmatpush1.bf16.xpose.msra.mxu0 0
        %1018 = vmatprep.subr.bf16.mxu0 0
        %1019 = vmatpush1.bf16.xpose.msra.mxu0 0
        %1020 = vmatprep.subr.bf16.mxu0 0
        %1021 = vmatpush1.bf16.xpose.msra.mxu0 0
        %1022 = vmatprep.subr.bf16.mxu0 0
        %1023 = vmatpush1.bf16.xpose.msra.mxu0 0
        %1024 = vmatprep.subr.bf16.mxu0 0
        %1025 = vmatpush1.bf16.xpose.msra.mxu0 0
        %1026 = vmatprep.subr.bf16.mxu0 0
        %1027 = vmatpush1.bf16.xpose.msra.mxu0 0
        %1028 = vmatprep.subr.bf16.mxu0 0
        %1029 = vmatpush1.bf16.xpose.msra.mxu0 0
        %1030 = vmatprep.subr.bf16.mxu0 0
        %1031 = vmatpush1.bf16.xpose.msra.mxu0 0
        %1032 = vmatprep.subr.bf16.mxu0 0
        %1033 = vmatpush1.bf16.xpose.msra.mxu0 0
        %1034 = vmatprep.subr.bf16.mxu0 0
        %1035 = vmatpush1.bf16.xpose.msra.mxu0 0
        %1036 = vmatprep.subr.bf16.mxu0 0
        %1037 = vmatpush1.bf16.xpose.msra.mxu0 0
        %1038 = vmatprep.mubr.bf16.mxu0 0
        %1039 = vmatmul.mubr.bf16.gmra.mrb[0].mxu0 %v1001
        %v1040 = vpop.f32.mrb[0].mxu0
        %v1041 = vadd.f32 0.0, %v1040
        %v1042 = vpop.f32.mrb[0].mxu0
        %v1043 = vpop.f32.mrb[0].mxu0
        %v1044 = vpop.f32.mrb[0].mxu0
        %1045 = vdwg.mxu0
        %vm1046 = vcmask 64512
        %v1047 = vsel %vm1046, %v1041, -inf
        %1048 = vmax.xlane.f32.xlu0 %v1047
        %v1049 = vpop.xlane.xlu0 %1048
        %v1050 = vsub.f32 %v1041, %v1049
        %v1051 = vmul.f32 %v1050, 1.442695
        %v1052 = vpow.pop %v1051
        %v1053 = vsel %vm1046, %v1052, 0.0
        %1054 = vadd.xlane.f32.xlu0 %v1053
        %v1055 = vpop.xlane.xlu0 %1054
        %v1056 = vrcp.pop %v1055
        %v1057 = vmul.f32 %v1052, %v1056
        %v1058 = vpack.c.bf16 %v1057, %v1057
        %v1060 = vsel %vm1046, %v1058, 0
        %vm1062 = vcmask 1043456
        %v1064 = vsel %vm1062, %v998, 0
        %1066 = vmatprep.subr.bf16.mxu0 0
        %1067 = vmatpush1.bf16.msra.mxu0 %v1064
        %1068 = vmatprep.subr.bf16.mxu0 0
        %1069 = vmatpush1.bf16.msra.mxu0 0
        %1070 = vmatprep.subr.bf16.mxu0 0
        %1071 = vmatpush1.bf16.msra.mxu0 0
        %1072 = vmatprep.subr.bf16.mxu0 0
        %1073 = vmatpush1.bf16.msra.mxu0 0
        %1074 = vmatprep.subr.bf16.mxu0 0
        %1075 = vmatpush1.bf16.msra.mxu0 0
        %1076 = vmatprep.subr.bf16.mxu0 0
        %1077 = vmatpush1.bf16.msra.mxu0 0
        %1078 = vmatprep.subr.bf16.mxu0 0
        %1079 = vmatpush1.bf16.msra.mxu0 0
        %1080 = vmatprep.subr.bf16.mxu0 0
        %1081 = vmatpush1.bf16.msra.mxu0 0
        %1082 = vmatprep.subr.bf16.mxu0 0
        %1083 = vmatpush1.bf16.msra.mxu0 0
        %1084 = vmatprep.subr.bf16.mxu0 0
        %1085 = vmatpush1.bf16.msra.mxu0 0
        %1086 = vmatprep.subr.bf16.mxu0 0
        %1087 = vmatpush1.bf16.msra.mxu0 0
        %1088 = vmatprep.subr.bf16.mxu0 0
        %1089 = vmatpush1.bf16.msra.mxu0 0
        %1090 = vmatprep.subr.bf16.mxu0 0
        %1091 = vmatpush1.bf16.msra.mxu0 0
        %1092 = vmatprep.subr.bf16.mxu0 0
        %1093 = vmatpush1.bf16.msra.mxu0 0
        %1094 = vmatprep.subr.bf16.mxu0 0
        %1095 = vmatpush1.bf16.msra.mxu0 0
        %1096 = vmatprep.subr.bf16.mxu0 0
        %1097 = vmatpush1.bf16.msra.mxu0 0
        %1098 = vmatprep.mubr.bf16.mxu0 0
        %1099 = vmatmul.mubr.bf16.gmra.mrb[0].mxu0 %v1060
        %v1100 = vpop.f32.mrb[0].mxu0
        %v1101 = vadd.f32 0.0, %v1100
        %v1102 = vpop.f32.mrb[0].mxu0
        %v1103 = vpop.f32.mrb[0].mxu0
        %v1104 = vpop.f32.mrb[0].mxu0
        %1105 = vdwg.mxu0
        %v1106 = vpack.c.bf16 %v1101, %v1101
        %v1107 = vld [vmem:[%s5] sm:$0xf]
        %v1108 = vld [vmem:[%s5 + $0x4] sm:$0xf]
        %1110 = vrot.lane.b32.xlu0 %v996, 112
        %v1111 = vpop.permute.xlu0 %1110
        %1113 = vrot.lane.b32.xlu0 %v997, 112
        %v1114 = vpop.permute.xlu0 %1113
        %v1116 = vsel %vm999, %v1111, 0
        %v1119 = vsel %vm999, %v1114, 0
        %1121 = vmatprep.subr.bf16.mxu0 0
        %1122 = vmatpush1.bf16.xpose.msra.mxu0 %v1119
        %1123 = vmatprep.subr.bf16.mxu0 0
        %1124 = vmatpush1.bf16.xpose.msra.mxu0 0
        %1125 = vmatprep.subr.bf16.mxu0 0
        %1126 = vmatpush1.bf16.xpose.msra.mxu0 0
        %1127 = vmatprep.subr.bf16.mxu0 0
        %1128 = vmatpush1.bf16.xpose.msra.mxu0 0
        %1129 = vmatprep.subr.bf16.mxu0 0
        %1130 = vmatpush1.bf16.xpose.msra.mxu0 0
        %1131 = vmatprep.subr.bf16.mxu0 0
        %1132 = vmatpush1.bf16.xpose.msra.mxu0 0
        %1133 = vmatprep.subr.bf16.mxu0 0
        %1134 = vmatpush1.bf16.xpose.msra.mxu0 0
        %1135 = vmatprep.subr.bf16.mxu0 0
        %1136 = vmatpush1.bf16.xpose.msra.mxu0 0
        %1137 = vmatprep.subr.bf16.mxu0 0
        %1138 = vmatpush1.bf16.xpose.msra.mxu0 0
        %1139 = vmatprep.subr.bf16.mxu0 0
        %1140 = vmatpush1.bf16.xpose.msra.mxu0 0
        %1141 = vmatprep.subr.bf16.mxu0 0
        %1142 = vmatpush1.bf16.xpose.msra.mxu0 0
        %1143 = vmatprep.subr.bf16.mxu0 0
        %1144 = vmatpush1.bf16.xpose.msra.mxu0 0
        %1145 = vmatprep.subr.bf16.mxu0 0
        %1146 = vmatpush1.bf16.xpose.msra.mxu0 0
        %1147 = vmatprep.subr.bf16.mxu0 0
        %1148 = vmatpush1.bf16.xpose.msra.mxu0 0
        %1149 = vmatprep.subr.bf16.mxu0 0
        %1150 = vmatpush1.bf16.xpose.msra.mxu0 0
        %1151 = vmatprep.subr.bf16.mxu0 0
        %1152 = vmatpush1.bf16.xpose.msra.mxu0 0
        %1153 = vmatprep.mubr.bf16.mxu0 0
        %1154 = vmatmul.mubr.bf16.gmra.mrb[0].mxu0 %v1116
        %v1155 = vpop.f32.mrb[0].mxu0
        %v1156 = vadd.f32 0.0, %v1155
        %v1157 = vpop.f32.mrb[0].mxu0
        %v1158 = vpop.f32.mrb[0].mxu0
        %v1159 = vpop.f32.mrb[0].mxu0
        %1160 = vdwg.mxu0
        %v1161 = vsel %vm1046, %v1156, -inf
        %1162 = vmax.xlane.f32.xlu0 %v1161
        %v1163 = vpop.xlane.xlu0 %1162
        %v1164 = vsub.f32 %v1156, %v1163
        %v1165 = vmul.f32 %v1164, 1.442695
        %v1166 = vpow.pop %v1165
        %v1167 = vsel %vm1046, %v1166, 0.0
        %1168 = vadd.xlane.f32.xlu0 %v1167
        %v1169 = vpop.xlane.xlu0 %1168
        %v1170 = vrcp.pop %v1169
        %v1171 = vmul.f32 %v1166, %v1170
        %v1172 = vpack.c.bf16 %v1171, %v1171
        %1174 = vrot.lane.b32.xlu0 %v998, 112
        %v1175 = vpop.permute.xlu0 %1174
        %v1177 = vsel %vm1046, %v1172, 0
        %v1180 = vsel %vm1062, %v1175, 0
        %1182 = vmatprep.subr.bf16.mxu0 0
        %1183 = vmatpush1.bf16.msra.mxu0 %v1180
        %1184 = vmatprep.subr.bf16.mxu0 0
        %1185 = vmatpush1.bf16.msra.mxu0 0
        %1186 = vmatprep.subr.bf16.mxu0 0
        %1187 = vmatpush1.bf16.msra.mxu0 0
        %1188 = vmatprep.subr.bf16.mxu0 0
        %1189 = vmatpush1.bf16.msra.mxu0 0
        %1190 = vmatprep.subr.bf16.mxu0 0
        %1191 = vmatpush1.bf16.msra.mxu0 0
        %1192 = vmatprep.subr.bf16.mxu0 0
        %1193 = vmatpush1.bf16.msra.mxu0 0
        %1194 = vmatprep.subr.bf16.mxu0 0
        %1195 = vmatpush1.bf16.msra.mxu0 0
        %1196 = vmatprep.subr.bf16.mxu0 0
        %1197 = vmatpush1.bf16.msra.mxu0 0
        %1198 = vmatprep.subr.bf16.mxu0 0
        %1199 = vmatpush1.bf16.msra.mxu0 0
        %1200 = vmatprep.subr.bf16.mxu0 0
        %1201 = vmatpush1.bf16.msra.mxu0 0
        %1202 = vmatprep.subr.bf16.mxu0 0
        %1203 = vmatpush1.bf16.msra.mxu0 0
        %1204 = vmatprep.subr.bf16.mxu0 0
        %1205 = vmatpush1.bf16.msra.mxu0 0
        %1206 = vmatprep.subr.bf16.mxu0 0
        %1207 = vmatpush1.bf16.msra.mxu0 0
        %1208 = vmatprep.subr.bf16.mxu0 0
        %1209 = vmatpush1.bf16.msra.mxu0 0
        %1210 = vmatprep.subr.bf16.mxu0 0
        %1211 = vmatpush1.bf16.msra.mxu0 0
        %1212 = vmatprep.subr.bf16.mxu0 0
        %1213 = vmatpush1.bf16.msra.mxu0 0
        %1214 = vmatprep.mubr.bf16.mxu0 0
        %1215 = vmatmul.mubr.bf16.gmra.mrb[0].mxu0 %v1177
        %v1216 = vpop.f32.mrb[0].mxu0
        %v1217 = vadd.f32 0.0, %v1216
        %v1218 = vpop.f32.mrb[0].mxu0
        %v1219 = vpop.f32.mrb[0].mxu0
        %v1220 = vpop.f32.mrb[0].mxu0
        %1221 = vdwg.mxu0
        %v1222 = vpack.c.bf16 %v1217, %v1217
        %v1223 = vld [vmem:[%s5 + $0x8] sm:$0xf]
        %v1224 = vld [vmem:[%s5 + $0xc] sm:$0xf]
        %v1227 = vunpack.c.l.b16 %v1223
        %v1228 = vunpack.c.l.b16 %v1224
        %v1229 = vpack.c.b16 %v1228, %v1227
        %v1232 = vsel %vm999, %v1222, 0
        %1234 = vmatprep.subr.bf16.mxu0 0
        %1235 = vmatpush1.bf16.msra.mxu0 %v1229
        %1236 = vmatprep.subr.bf16.mxu0 0
        %1237 = vmatpush1.bf16.msra.mxu0 0
        %1238 = vmatprep.subr.bf16.mxu0 0
        %1239 = vmatpush1.bf16.msra.mxu0 0
        %1240 = vmatprep.subr.bf16.mxu0 0
        %1241 = vmatpush1.bf16.msra.mxu0 0
        %1242 = vmatprep.subr.bf16.mxu0 0
        %1243 = vmatpush1.bf16.msra.mxu0 0
        %1244 = vmatprep.subr.bf16.mxu0 0
        %1245 = vmatpush1.bf16.msra.mxu0 0
        %1246 = vmatprep.subr.bf16.mxu0 0
        %1247 = vmatpush1.bf16.msra.mxu0 0
        %1248 = vmatprep.subr.bf16.mxu0 0
        %1249 = vmatpush1.bf16.msra.mxu0 0
        %1250 = vmatprep.subr.bf16.mxu0 0
        %1251 = vmatpush1.bf16.msra.mxu0 0
        %1252 = vmatprep.subr.bf16.mxu0 0
        %1253 = vmatpush1.bf16.msra.mxu0 0
        %1254 = vmatprep.subr.bf16.mxu0 0
        %1255 = vmatpush1.bf16.msra.mxu0 0
        %1256 = vmatprep.subr.bf16.mxu0 0
        %1257 = vmatpush1.bf16.msra.mxu0 0
        %1258 = vmatprep.subr.bf16.mxu0 0
        %1259 = vmatpush1.bf16.msra.mxu0 0
        %1260 = vmatprep.subr.bf16.mxu0 0
        %1261 = vmatpush1.bf16.msra.mxu0 0
        %1262 = vmatprep.subr.bf16.mxu0 0
        %1263 = vmatpush1.bf16.msra.mxu0 0
        %1264 = vmatprep.subr.bf16.mxu0 0
        %1265 = vmatpush1.bf16.msra.mxu0 0
        %1266 = vmatprep.mubr.bf16.mxu0 0
        %1267 = vmatmul.mubr.bf16.gmra.mrb[0].mxu0 %v1232
        %v1268 = vpop.f32.mrb[0].mxu0
        %v1269 = vadd.f32 0.0, %v1268
        %v1270 = vpop.f32.mrb[0].mxu0
        %v1271 = vpop.f32.mrb[0].mxu0
        %v1272 = vpop.f32.mrb[0].mxu0
        %1273 = vdwg.mxu0
        %v1276 = vunpack.c.l.b16 %v1107
        %v1277 = vunpack.c.l.b16 %v1108
        %v1278 = vpack.c.b16 %v1277, %v1276
        %v1281 = vsel %vm999, %v1106, 0
        %1283 = vmatprep.subr.bf16.mxu0 0
        %1284 = vmatpush1.bf16.msra.mxu0 %v1278
        %1285 = vmatprep.subr.bf16.mxu0 0
        %1286 = vmatpush1.bf16.msra.mxu0 0
        %1287 = vmatprep.subr.bf16.mxu0 0
        %1288 = vmatpush1.bf16.msra.mxu0 0
        %1289 = vmatprep.subr.bf16.mxu0 0
        %1290 = vmatpush1.bf16.msra.mxu0 0
        %1291 = vmatprep.subr.bf16.mxu0 0
        %1292 = vmatpush1.bf16.msra.mxu0 0
        %1293 = vmatprep.subr.bf16.mxu0 0
        %1294 = vmatpush1.bf16.msra.mxu0 0
        %1295 = vmatprep.subr.bf16.mxu0 0
        %1296 = vmatpush1.bf16.msra.mxu0 0
        %1297 = vmatprep.subr.bf16.mxu0 0
        %1298 = vmatpush1.bf16.msra.mxu0 0
        %1299 = vmatprep.subr.bf16.mxu0 0
        %1300 = vmatpush1.bf16.msra.mxu0 0
        %1301 = vmatprep.subr.bf16.mxu0 0
        %1302 = vmatpush1.bf16.msra.mxu0 0
        %1303 = vmatprep.subr.bf16.mxu0 0
        %1304 = vmatpush1.bf16.msra.mxu0 0
        %1305 = vmatprep.subr.bf16.mxu0 0
        %1306 = vmatpush1.bf16.msra.mxu0 0
        %1307 = vmatprep.subr.bf16.mxu0 0
        %1308 = vmatpush1.bf16.msra.mxu0 0
        %1309 = vmatprep.subr.bf16.mxu0 0
        %1310 = vmatpush1.bf16.msra.mxu0 0
        %1311 = vmatprep.subr.bf16.mxu0 0
        %1312 = vmatpush1.bf16.msra.mxu0 0
        %1313 = vmatprep.subr.bf16.mxu0 0
        %1314 = vmatpush1.bf16.msra.mxu0 0
        %1315 = vmatprep.mubr.bf16.mxu0 0
        %1316 = vmatmul.mubr.bf16.gmra.mrb[0].mxu0 %v1281
        %v1317 = vpop.f32.mrb[0].mxu0
        %v1318 = vadd.f32 %v1269, %v1317
        %v1319 = vpop.f32.mrb[0].mxu0
        %v1320 = vpop.f32.mrb[0].mxu0
        %v1321 = vpop.f32.mrb[0].mxu0
        %1322 = vdwg.mxu0
        %v1323 = vadd.f32 %v798, %v1318
        %v1324 = vld [vmem:[%s6] sm:$0x1]
        %v1326 = vlaneseq
        %v1327 = vshrl.u32 %v1326, 7
        %v1328 = vsub.s32 0, %v1327
        %v1329 = vrot.slane %v1324, %v1328
        %v1331 = vadd.f32 %v1323, %v1329
        %v1332 = vld [vmem:[%s7] sm:$0x1]
        %v1333 = vld [vmem:[%s8] sm:$0x1]
        %v1334 = vsel %vm801, %v1331, 0.0
        %1335 = vadd.xlane.f32.xlu0 %v1334
        %v1336 = vpop.xlane.xlu0 %1335
        %v1337 = vmul.f32 %v1336, %v805
        %v1338 = vsub.f32 %v1331, %v1337
        %v1339 = vmul.f32 %v1338, %v1338
        %v1340 = vsel %vm801, %v1339, 0.0
        %1341 = vadd.xlane.f32.xlu0 %v1340
        %v1342 = vpop.xlane.xlu0 %1341
        %v1343 = vmul.f32 %v1342, %v805
        %v1344 = vadd.f32 %v1343, 1e-06
        %v1345 = vrsqrt.pop %v1344
        %v1346 = vmul.f32 %v1338, %v1345
        %v1348 = vlaneseq
        %v1349 = vshrl.u32 %v1348, 7
        %v1350 = vsub.s32 0, %v1349
        %v1351 = vrot.slane %v1332, %v1350
        %v1353 = vmul.f32 %v1346, %v1351
        %v1355 = vlaneseq
        %v1356 = vshrl.u32 %v1355, 7
        %v1357 = vsub.s32 0, %v1356
        %v1358 = vrot.slane %v1333, %v1357
        %v1360 = vadd.f32 %v1353, %v1358
        %v1361 = vpack.c.bf16 %v1360, %v1360
        %v1362 = vld [vmem:[%s10] sm:$0x1]
        %v1363 = vld [vmem:[%s12] sm:$0x1]
        %v1364 = vld [vmem:[%s9] sm:$0xf]
        %v1365 = vld [vmem:[%s9 + $0x4] sm:$0xf]
        %v1366 = vld [vmem:[%s9 + $0x8] sm:$0xf]
        %v1367 = vld [vmem:[%s9 + $0xc] sm:$0xf]
        %v1369 = vlaneseq
        %v1370 = vshrl.u32 %v1369, 7
        %v1371 = vsub.s32 0, %v1370
        %v1372 = vrot.slane %v1362, %v1371
        %v1378 = vunpack.c.l.b16 %v1364
        %v1379 = vunpack.c.l.b16 %v1365
        %v1380 = vunpack.c.l.b16 %v1366
        %v1381 = vunpack.c.l.b16 %v1367
        %v1382 = vpack.c.b16 %v1379, %v1378
        %v1383 = vpack.c.b16 %v1381, %v1380
        %v1387 = vsel %vm801, %v1361, 0
        %1389 = vmatprep.subr.bf16.mxu0 0
        %1390 = vmatpush1.bf16.msra.mxu0 %v1382
        %1391 = vmatprep.subr.bf16.mxu0 0
        %1392 = vmatpush1.bf16.msra.mxu0 %v1383
        %1393 = vmatprep.subr.bf16.mxu0 0
        %1394 = vmatpush1.bf16.msra.mxu0 0
        %1395 = vmatprep.subr.bf16.mxu0 0
        %1396 = vmatpush1.bf16.msra.mxu0 0
        %1397 = vmatprep.subr.bf16.mxu0 0
        %1398 = vmatpush1.bf16.msra.mxu0 0
        %1399 = vmatprep.subr.bf16.mxu0 0
        %1400 = vmatpush1.bf16.msra.mxu0 0
        %1401 = vmatprep.subr.bf16.mxu0 0
        %1402 = vmatpush1.bf16.msra.mxu0 0
        %1403 = vmatprep.subr.bf16.mxu0 0
        %1404 = vmatpush1.bf16.msra.mxu0 0
        %1405 = vmatprep.subr.bf16.mxu0 0
        %1406 = vmatpush1.bf16.msra.mxu0 0
        %1407 = vmatprep.subr.bf16.mxu0 0
        %1408 = vmatpush1.bf16.msra.mxu0 0
        %1409 = vmatprep.subr.bf16.mxu0 0
        %1410 = vmatpush1.bf16.msra.mxu0 0
        %1411 = vmatprep.subr.bf16.mxu0 0
        %1412 = vmatpush1.bf16.msra.mxu0 0
        %1413 = vmatprep.subr.bf16.mxu0 0
        %1414 = vmatpush1.bf16.msra.mxu0 0
        %1415 = vmatprep.subr.bf16.mxu0 0
        %1416 = vmatpush1.bf16.msra.mxu0 0
        %1417 = vmatprep.subr.bf16.mxu0 0
        %1418 = vmatpush1.bf16.msra.mxu0 0
        %1419 = vmatprep.subr.bf16.mxu0 0
        %1420 = vmatpush1.bf16.msra.mxu0 0
        %1421 = vmatprep.mubr.bf16.mxu0 0
        %1422 = vmatmul.mubr.bf16.gmra.mrb[0].mxu0 %v1387
        %v1423 = vpop.f32.mrb[0].mxu0
        %v1424 = vadd.f32 %v1372, %v1423
        %v1425 = vpop.f32.mrb[0].mxu0
        %v1426 = vpop.f32.mrb[0].mxu0
        %v1427 = vpop.f32.mrb[0].mxu0
        %1428 = vdwg.mxu0
        %v1429 = vmul.f32 %v1424, 0.5
        %v1430 = vmul.f32 %v1424, 0.044715
        %v1431 = vmul.f32 %v1430, %v1424
        %v1432 = vmul.f32 %v1431, %v1424
        %v1433 = vadd.f32 %v1424, %v1432
        %v1434 = vmul.f32 %v1433, 0.7978846
        %v1435 = vtanh.pop %v1434
        %v1436 = vadd.f32 %v1435, 1.0
        %v1437 = vmul.f32 %v1429, %v1436
        %v1438 = vpack.c.bf16 %v1437, %v1437
        %v1439 = vld [vmem:[%s11] sm:$0xf]
        %v1440 = vld [vmem:[%s11 + $0x4] sm:$0xf]
        %v1441 = vld [vmem:[%s11 + $0x8] sm:$0xf]
        %v1442 = vld [vmem:[%s11 + $0xc] sm:$0xf]
        %v1443 = vld [vmem:[%s11 + $0x10] sm:$0xf]
        %v1444 = vld [vmem:[%s11 + $0x14] sm:$0xf]
        %v1445 = vld [vmem:[%s11 + $0x18] sm:$0xf]
        %v1446 = vld [vmem:[%s11 + $0x1c] sm:$0xf]
        %v1447 = vld [vmem:[%s11 + $0x20] sm:$0xf]
        %v1448 = vld [vmem:[%s11 + $0x24] sm:$0xf]
        %v1449 = vld [vmem:[%s11 + $0x28] sm:$0xf]
        %v1450 = vld [vmem:[%s11 + $0x2c] sm:$0xf]
        %v1451 = vld [vmem:[%s11 + $0x30] sm:$0xf]
        %v1452 = vld [vmem:[%s11 + $0x34] sm:$0xf]
        %v1453 = vld [vmem:[%s11 + $0x38] sm:$0xf]
        %v1454 = vld [vmem:[%s11 + $0x3c] sm:$0xf]
        %v1456 = vlaneseq
        %v1457 = vshrl.u32 %v1456, 7
        %v1458 = vsub.s32 0, %v1457
        %v1459 = vrot.slane %v1363, %v1458
        %v1477 = vunpack.c.l.b16 %v1439
        %v1478 = vunpack.c.l.b16 %v1440
        %v1479 = vunpack.c.l.b16 %v1441
        %v1480 = vunpack.c.l.b16 %v1442
        %v1481 = vunpack.c.l.b16 %v1443
        %v1482 = vunpack.c.l.b16 %v1444
        %v1483 = vunpack.c.l.b16 %v1445
        %v1484 = vunpack.c.l.b16 %v1446
        %v1485 = vunpack.c.l.b16 %v1447
        %v1486 = vunpack.c.l.b16 %v1448
        %v1487 = vunpack.c.l.b16 %v1449
        %v1488 = vunpack.c.l.b16 %v1450
        %v1489 = vunpack.c.l.b16 %v1451
        %v1490 = vunpack.c.l.b16 %v1452
        %v1491 = vunpack.c.l.b16 %v1453
        %v1492 = vunpack.c.l.b16 %v1454
        %v1493 = vpack.c.b16 %v1478, %v1477
        %v1494 = vpack.c.b16 %v1480, %v1479
        %v1495 = vpack.c.b16 %v1482, %v1481
        %v1496 = vpack.c.b16 %v1484, %v1483
        %v1497 = vpack.c.b16 %v1486, %v1485
        %v1498 = vpack.c.b16 %v1488, %v1487
        %v1499 = vpack.c.b16 %v1490, %v1489
        %v1500 = vpack.c.b16 %v1492, %v1491
        %1509 = vmatprep.subr.bf16.mxu0 0
        %1510 = vmatpush1.bf16.msra.mxu0 %v1493
        %1511 = vmatprep.subr.bf16.mxu0 0
        %1512 = vmatpush1.bf16.msra.mxu0 %v1494
        %1513 = vmatprep.subr.bf16.mxu0 0
        %1514 = vmatpush1.bf16.msra.mxu0 %v1495
        %1515 = vmatprep.subr.bf16.mxu0 0
        %1516 = vmatpush1.bf16.msra.mxu0 %v1496
        %1517 = vmatprep.subr.bf16.mxu0 0
        %1518 = vmatpush1.bf16.msra.mxu0 %v1497
        %1519 = vmatprep.subr.bf16.mxu0 0
        %1520 = vmatpush1.bf16.msra.mxu0 %v1498
        %1521 = vmatprep.subr.bf16.mxu0 0
        %1522 = vmatpush1.bf16.msra.mxu0 %v1499
        %1523 = vmatprep.subr.bf16.mxu0 0
        %1524 = vmatpush1.bf16.msra.mxu0 %v1500
        %1525 = vmatprep.subr.bf16.mxu0 0
        %1526 = vmatpush1.bf16.msra.mxu0 0
        %1527 = vmatprep.subr.bf16.mxu0 0
        %1528 = vmatpush1.bf16.msra.mxu0 0
        %1529 = vmatprep.subr.bf16.mxu0 0
        %1530 = vmatpush1.bf16.msra.mxu0 0
        %1531 = vmatprep.subr.bf16.mxu0 0
        %1532 = vmatpush1.bf16.msra.mxu0 0
        %1533 = vmatprep.subr.bf16.mxu0 0
        %1534 = vmatpush1.bf16.msra.mxu0 0
        %1535 = vmatprep.subr.bf16.mxu0 0
        %1536 = vmatpush1.bf16.msra.mxu0 0
        %1537 = vmatprep.subr.bf16.mxu0 0
        %1538 = vmatpush1.bf16.msra.mxu0 0
        %1539 = vmatprep.subr.bf16.mxu0 0
        %1540 = vmatpush1.bf16.msra.mxu0 0
        %1541 = vmatprep.mubr.bf16.mxu0 0
        %1542 = vmatmul.mubr.bf16.gmra.mrb[0].mxu0 %v1438
        %v1543 = vpop.f32.mrb[0].mxu0
        %v1544 = vadd.f32 %v1459, %v1543
        %v1545 = vpop.f32.mrb[0].mxu0
        %v1546 = vpop.f32.mrb[0].mxu0
        %v1547 = vpop.f32.mrb[0].mxu0
        %1548 = vdwg.mxu0
        %v1549 = vadd.f32 %v1331, %v1544
        %v1550 = vld [vmem:[%s13] sm:$0x1]
        %v1551 = vld [vmem:[%s14] sm:$0x1]
        %v1552 = vsel %vm801, %v1549, 0.0
        %1553 = vadd.xlane.f32.xlu0 %v1552
        %v1554 = vpop.xlane.xlu0 %1553
        %v1555 = vmul.f32 %v1554, %v805
        %v1556 = vsub.f32 %v1549, %v1555
        %v1557 = vmul.f32 %v1556, %v1556
        %v1558 = vsel %vm801, %v1557, 0.0
        %1559 = vadd.xlane.f32.xlu0 %v1558
        %v1560 = vpop.xlane.xlu0 %1559
        %v1561 = vmul.f32 %v1560, %v805
        %v1562 = vadd.f32 %v1561, 1e-06
        %v1563 = vrsqrt.pop %v1562
        %v1564 = vmul.f32 %v1556, %v1563
        %v1566 = vlaneseq
        %v1567 = vshrl.u32 %v1566, 7
        %v1568 = vsub.s32 0, %v1567
        %v1569 = vrot.slane %v1550, %v1568
        %v1571 = vmul.f32 %v1564, %v1569
        %v1573 = vlaneseq
        %v1574 = vshrl.u32 %v1573, 7
        %v1575 = vsub.s32 0, %v1574
        %v1576 = vrot.slane %v1551, %v1575
        %v1578 = vadd.f32 %v1571, %v1576
        %v1579 = vpack.c.bf16 %v1578, %v1578
        %v1580 = vld [vmem:[%s16] sm:$0x1]
        %v1581 = vld [vmem:[%s18] sm:$0x1]
        %v1582 = vld [vmem:[%s15] sm:$0xf]
        %v1583 = vld [vmem:[%s15 + $0x4] sm:$0xf]
        %v1584 = vld [vmem:[%s15 + $0x8] sm:$0xf]
        %v1585 = vld [vmem:[%s15 + $0xc] sm:$0xf]
        %v1587 = vlaneseq
        %v1588 = vshrl.u32 %v1587, 7
        %v1589 = vsub.s32 0, %v1588
        %v1590 = vrot.slane %v1580, %v1589
        %v1596 = vunpack.c.l.b16 %v1582
        %v1597 = vunpack.c.l.b16 %v1583
        %v1598 = vunpack.c.l.b16 %v1584
        %v1599 = vunpack.c.l.b16 %v1585
        %v1600 = vpack.c.b16 %v1597, %v1596
        %v1601 = vpack.c.b16 %v1599, %v1598
        %v1605 = vsel %vm801, %v1579, 0
        %1607 = vmatprep.subr.bf16.mxu0 0
        %1608 = vmatpush1.bf16.msra.mxu0 %v1600
        %1609 = vmatprep.subr.bf16.mxu0 0
        %1610 = vmatpush1.bf16.msra.mxu0 %v1601
        %1611 = vmatprep.subr.bf16.mxu0 0
        %1612 = vmatpush1.bf16.msra.mxu0 0
        %1613 = vmatprep.subr.bf16.mxu0 0
        %1614 = vmatpush1.bf16.msra.mxu0 0
        %1615 = vmatprep.subr.bf16.mxu0 0
        %1616 = vmatpush1.bf16.msra.mxu0 0
        %1617 = vmatprep.subr.bf16.mxu0 0
        %1618 = vmatpush1.bf16.msra.mxu0 0
        %1619 = vmatprep.subr.bf16.mxu0 0
        %1620 = vmatpush1.bf16.msra.mxu0 0
        %1621 = vmatprep.subr.bf16.mxu0 0
        %1622 = vmatpush1.bf16.msra.mxu0 0
        %1623 = vmatprep.subr.bf16.mxu0 0
        %1624 = vmatpush1.bf16.msra.mxu0 0
        %1625 = vmatprep.subr.bf16.mxu0 0
        %1626 = vmatpush1.bf16.msra.mxu0 0
        %1627 = vmatprep.subr.bf16.mxu0 0
        %1628 = vmatpush1.bf16.msra.mxu0 0
        %1629 = vmatprep.subr.bf16.mxu0 0
        %1630 = vmatpush1.bf16.msra.mxu0 0
        %1631 = vmatprep.subr.bf16.mxu0 0
        %1632 = vmatpush1.bf16.msra.mxu0 0
        %1633 = vmatprep.subr.bf16.mxu0 0
        %1634 = vmatpush1.bf16.msra.mxu0 0
        %1635 = vmatprep.subr.bf16.mxu0 0
        %1636 = vmatpush1.bf16.msra.mxu0 0
        %1637 = vmatprep.subr.bf16.mxu0 0
        %1638 = vmatpush1.bf16.msra.mxu0 0
        %1639 = vmatprep.mubr.bf16.mxu0 0
        %1640 = vmatmul.mubr.bf16.gmra.mrb[0].mxu0 %v1605
        %v1641 = vpop.f32.mrb[0].mxu0
        %v1642 = vadd.f32 %v1590, %v1641
        %v1643 = vpop.f32.mrb[0].mxu0
        %v1644 = vpop.f32.mrb[0].mxu0
        %v1645 = vpop.f32.mrb[0].mxu0
        %1646 = vdwg.mxu0
        %v1647 = vmul.f32 %v1642, 0.5
        %v1648 = vmul.f32 %v1642, 0.044715
        %v1649 = vmul.f32 %v1648, %v1642
        %v1650 = vmul.f32 %v1649, %v1642
        %v1651 = vadd.f32 %v1642, %v1650
        %v1652 = vmul.f32 %v1651, 0.7978846
        %v1653 = vtanh.pop %v1652
        %v1654 = vadd.f32 %v1653, 1.0
        %v1655 = vmul.f32 %v1647, %v1654
        %v1656 = vpack.c.bf16 %v1655, %v1655
        %v1657 = vld [vmem:[%s17] sm:$0xf]
        %v1658 = vld [vmem:[%s17 + $0x4] sm:$0xf]
        %v1659 = vld [vmem:[%s17 + $0x8] sm:$0xf]
        %v1660 = vld [vmem:[%s17 + $0xc] sm:$0xf]
        %v1661 = vld [vmem:[%s17 + $0x10] sm:$0xf]
        %v1662 = vld [vmem:[%s17 + $0x14] sm:$0xf]
        %v1663 = vld [vmem:[%s17 + $0x18] sm:$0xf]
        %v1664 = vld [vmem:[%s17 + $0x1c] sm:$0xf]
        %v1665 = vld [vmem:[%s17 + $0x20] sm:$0xf]
        %v1666 = vld [vmem:[%s17 + $0x24] sm:$0xf]
        %v1667 = vld [vmem:[%s17 + $0x28] sm:$0xf]
        %v1668 = vld [vmem:[%s17 + $0x2c] sm:$0xf]
        %v1669 = vld [vmem:[%s17 + $0x30] sm:$0xf]
        %v1670 = vld [vmem:[%s17 + $0x34] sm:$0xf]
        %v1671 = vld [vmem:[%s17 + $0x38] sm:$0xf]
        %v1672 = vld [vmem:[%s17 + $0x3c] sm:$0xf]
        %v1674 = vlaneseq
        %v1675 = vshrl.u32 %v1674, 7
        %v1676 = vsub.s32 0, %v1675
        %v1677 = vrot.slane %v1581, %v1676
        %v1695 = vunpack.c.l.b16 %v1657
        %v1696 = vunpack.c.l.b16 %v1658
        %v1697 = vunpack.c.l.b16 %v1659
        %v1698 = vunpack.c.l.b16 %v1660
        %v1699 = vunpack.c.l.b16 %v1661
        %v1700 = vunpack.c.l.b16 %v1662
        %v1701 = vunpack.c.l.b16 %v1663
        %v1702 = vunpack.c.l.b16 %v1664
        %v1703 = vunpack.c.l.b16 %v1665
        %v1704 = vunpack.c.l.b16 %v1666
        %v1705 = vunpack.c.l.b16 %v1667
        %v1706 = vunpack.c.l.b16 %v1668
        %v1707 = vunpack.c.l.b16 %v1669
        %v1708 = vunpack.c.l.b16 %v1670
        %v1709 = vunpack.c.l.b16 %v1671
        %v1710 = vunpack.c.l.b16 %v1672
        %v1711 = vpack.c.b16 %v1696, %v1695
        %v1712 = vpack.c.b16 %v1698, %v1697
        %v1713 = vpack.c.b16 %v1700, %v1699
        %v1714 = vpack.c.b16 %v1702, %v1701
        %v1715 = vpack.c.b16 %v1704, %v1703
        %v1716 = vpack.c.b16 %v1706, %v1705
        %v1717 = vpack.c.b16 %v1708, %v1707
        %v1718 = vpack.c.b16 %v1710, %v1709
        %1727 = vmatprep.subr.bf16.mxu0 0
        %1728 = vmatpush1.bf16.msra.mxu0 %v1711
        %1729 = vmatprep.subr.bf16.mxu0 0
        %1730 = vmatpush1.bf16.msra.mxu0 %v1712
        %1731 = vmatprep.subr.bf16.mxu0 0
        %1732 = vmatpush1.bf16.msra.mxu0 %v1713
        %1733 = vmatprep.subr.bf16.mxu0 0
        %1734 = vmatpush1.bf16.msra.mxu0 %v1714
        %1735 = vmatprep.subr.bf16.mxu0 0
        %1736 = vmatpush1.bf16.msra.mxu0 %v1715
        %1737 = vmatprep.subr.bf16.mxu0 0
        %1738 = vmatpush1.bf16.msra.mxu0 %v1716
        %1739 = vmatprep.subr.bf16.mxu0 0
        %1740 = vmatpush1.bf16.msra.mxu0 %v1717
        %1741 = vmatprep.subr.bf16.mxu0 0
        %1742 = vmatpush1.bf16.msra.mxu0 %v1718
        %1743 = vmatprep.subr.bf16.mxu0 0
        %1744 = vmatpush1.bf16.msra.mxu0 0
        %1745 = vmatprep.subr.bf16.mxu0 0
        %1746 = vmatpush1.bf16.msra.mxu0 0
        %1747 = vmatprep.subr.bf16.mxu0 0
        %1748 = vmatpush1.bf16.msra.mxu0 0
        %1749 = vmatprep.subr.bf16.mxu0 0
        %1750 = vmatpush1.bf16.msra.mxu0 0
        %1751 = vmatprep.subr.bf16.mxu0 0
        %1752 = vmatpush1.bf16.msra.mxu0 0
        %1753 = vmatprep.subr.bf16.mxu0 0
        %1754 = vmatpush1.bf16.msra.mxu0 0
        %1755 = vmatprep.subr.bf16.mxu0 0
        %1756 = vmatpush1.bf16.msra.mxu0 0
        %1757 = vmatprep.subr.bf16.mxu0 0
        %1758 = vmatpush1.bf16.msra.mxu0 0
        %1759 = vmatprep.mubr.bf16.mxu0 0
        %1760 = vmatmul.mubr.bf16.gmra.mrb[0].mxu0 %v1656
        %v1761 = vpop.f32.mrb[0].mxu0
        %v1762 = vadd.f32 %v1677, %v1761
        %v1763 = vpop.f32.mrb[0].mxu0
        %v1764 = vpop.f32.mrb[0].mxu0
        %v1765 = vpop.f32.mrb[0].mxu0
        %1766 = vdwg.mxu0
        %v1767 = vtanh.pop %v1762
        %1768 = vst.msk [vmem:[%s786] sm:$0xff] %vm801, %v1767
        %v1769 = vld [vmem:[%s20] sm:$0x1]
        %v1770 = vld [vmem:[%s22] sm:$0x1]
        %v1771 = vld [vmem:[%s19] sm:$0xf]
        %v1772 = vld [vmem:[%s19 + $0x4] sm:$0xf]
        %v1773 = vld [vmem:[%s19 + $0x8] sm:$0xf]
        %v1774 = vld [vmem:[%s19 + $0xc] sm:$0xf]
        %v1779 = vunpack.c.l.b16 %v1771
        %v1780 = vunpack.c.l.b16 %v1772
        %v1781 = vunpack.c.l.b16 %v1773
        %v1782 = vunpack.c.l.b16 %v1774
        %v1783 = vpack.c.b16 %v1780, %v1779
        %v1784 = vpack.c.b16 %v1782, %v1781
        %1787 = vmatprep.subr.bf16.mxu0 0
        %1788 = vmatpush1.bf16.msra.mxu0 %v1783
        %1789 = vmatprep.subr.bf16.mxu0 0
        %1790 = vmatpush1.bf16.msra.mxu0 %v1784
        %1791 = vmatprep.subr.bf16.mxu0 0
        %1792 = vmatpush1.bf16.msra.mxu0 0
        %1793 = vmatprep.subr.bf16.mxu0 0
        %1794 = vmatpush1.bf16.msra.mxu0 0
        %1795 = vmatprep.subr.bf16.mxu0 0
        %1796 = vmatpush1.bf16.msra.mxu0 0
        %1797 = vmatprep.subr.bf16.mxu0 0
        %1798 = vmatpush1.bf16.msra.mxu0 0
        %1799 = vmatprep.subr.bf16.mxu0 0
        %1800 = vmatpush1.bf16.msra.mxu0 0
        %1801 = vmatprep.subr.bf16.mxu0 0
        %1802 = vmatpush1.bf16.msra.mxu0 0
        %1803 = vmatprep.subr.bf16.mxu0 0
        %1804 = vmatpush1.bf16.msra.mxu0 0
        %1805 = vmatprep.subr.bf16.mxu0 0
        %1806 = vmatpush1.bf16.msra.mxu0 0
        %1807 = vmatprep.subr.bf16.mxu0 0
        %1808 = vmatpush1.bf16.msra.mxu0 0
        %1809 = vmatprep.subr.bf16.mxu0 0
        %1810 = vmatpush1.bf16.msra.mxu0 0
        %1811 = vmatprep.subr.bf16.mxu0 0
        %1812 = vmatpush1.bf16.msra.mxu0 0
        %1813 = vmatprep.subr.bf16.mxu0 0
        %1814 = vmatpush1.bf16.msra.mxu0 0
        %1815 = vmatprep.subr.bf16.mxu0 0
        %1816 = vmatpush1.bf16.msra.mxu0 0
        %1817 = vmatprep.subr.bf16.mxu0 0
        %1818 = vmatpush1.bf16.msra.mxu0 0
        %1819 = vmatprep.mubr.bf16.mxu0 0
        %1820 = vmatmul.mubr.bf16.gmra.mrb[0].mxu0 %v1605
        %v1821 = vpop.f32.mrb[0].mxu0
        %v1822 = vadd.f32 %v1769, %v1821
        %v1823 = vpop.f32.mrb[0].mxu0
        %v1824 = vpop.f32.mrb[0].mxu0
        %v1825 = vpop.f32.mrb[0].mxu0
        %1826 = vdwg.mxu0
        %v1827 = vmul.f32 %v1822, 0.5
        %v1828 = vmul.f32 %v1822, 0.044715
        %v1829 = vmul.f32 %v1828, %v1822
        %v1830 = vmul.f32 %v1829, %v1822
        %v1831 = vadd.f32 %v1822, %v1830
        %v1832 = vmul.f32 %v1831, 0.7978846
        %v1833 = vtanh.pop %v1832
        %v1834 = vadd.f32 %v1833, 1.0
        %v1835 = vmul.f32 %v1827, %v1834
        %v1836 = vpack.c.bf16 %v1835, %v1835
        %v1837 = vld [vmem:[%s21] sm:$0xf]
        %v1838 = vld [vmem:[%s21 + $0x4] sm:$0xf]
        %v1839 = vld [vmem:[%s21 + $0x8] sm:$0xf]
        %v1840 = vld [vmem:[%s21 + $0xc] sm:$0xf]
        %v1841 = vld [vmem:[%s21 + $0x10] sm:$0xf]
        %v1842 = vld [vmem:[%s21 + $0x14] sm:$0xf]
        %v1843 = vld [vmem:[%s21 + $0x18] sm:$0xf]
        %v1844 = vld [vmem:[%s21 + $0x1c] sm:$0xf]
        %v1845 = vld [vmem:[%s21 + $0x20] sm:$0xf]
        %v1846 = vld [vmem:[%s21 + $0x24] sm:$0xf]
        %v1847 = vld [vmem:[%s21 + $0x28] sm:$0xf]
        %v1848 = vld [vmem:[%s21 + $0x2c] sm:$0xf]
        %v1849 = vld [vmem:[%s21 + $0x30] sm:$0xf]
        %v1850 = vld [vmem:[%s21 + $0x34] sm:$0xf]
        %v1851 = vld [vmem:[%s21 + $0x38] sm:$0xf]
        %v1852 = vld [vmem:[%s21 + $0x3c] sm:$0xf]
        %v1869 = vunpack.c.l.b16 %v1837
        %v1870 = vunpack.c.l.b16 %v1838
        %v1871 = vunpack.c.l.b16 %v1839
        %v1872 = vunpack.c.l.b16 %v1840
        %v1873 = vunpack.c.l.b16 %v1841
        %v1874 = vunpack.c.l.b16 %v1842
        %v1875 = vunpack.c.l.b16 %v1843
        %v1876 = vunpack.c.l.b16 %v1844
        %v1877 = vunpack.c.l.b16 %v1845
        %v1878 = vunpack.c.l.b16 %v1846
        %v1879 = vunpack.c.l.b16 %v1847
        %v1880 = vunpack.c.l.b16 %v1848
        %v1881 = vunpack.c.l.b16 %v1849
        %v1882 = vunpack.c.l.b16 %v1850
        %v1883 = vunpack.c.l.b16 %v1851
        %v1884 = vunpack.c.l.b16 %v1852
        %v1885 = vpack.c.b16 %v1870, %v1869
        %v1886 = vpack.c.b16 %v1872, %v1871
        %v1887 = vpack.c.b16 %v1874, %v1873
        %v1888 = vpack.c.b16 %v1876, %v1875
        %v1889 = vpack.c.b16 %v1878, %v1877
        %v1890 = vpack.c.b16 %v1880, %v1879
        %v1891 = vpack.c.b16 %v1882, %v1881
        %v1892 = vpack.c.b16 %v1884, %v1883
        %1901 = vmatprep.subr.bf16.mxu0 0
        %1902 = vmatpush1.bf16.msra.mxu0 %v1885
        %1903 = vmatprep.subr.bf16.mxu0 0
        %1904 = vmatpush1.bf16.msra.mxu0 %v1886
        %1905 = vmatprep.subr.bf16.mxu0 0
        %1906 = vmatpush1.bf16.msra.mxu0 %v1887
        %1907 = vmatprep.subr.bf16.mxu0 0
        %1908 = vmatpush1.bf16.msra.mxu0 %v1888
        %1909 = vmatprep.subr.bf16.mxu0 0
        %1910 = vmatpush1.bf16.msra.mxu0 %v1889
        %1911 = vmatprep.subr.bf16.mxu0 0
        %1912 = vmatpush1.bf16.msra.mxu0 %v1890
        %1913 = vmatprep.subr.bf16.mxu0 0
        %1914 = vmatpush1.bf16.msra.mxu0 %v1891
        %1915 = vmatprep.subr.bf16.mxu0 0
        %1916 = vmatpush1.bf16.msra.mxu0 %v1892
        %1917 = vmatprep.subr.bf16.mxu0 0
        %1918 = vmatpush1.bf16.msra.mxu0 0
        %1919 = vmatprep.subr.bf16.mxu0 0
        %1920 = vmatpush1.bf16.msra.mxu0 0
        %1921 = vmatprep.subr.bf16.mxu0 0
        %1922 = vmatpush1.bf16.msra.mxu0 0
        %1923 = vmatprep.subr.bf16.mxu0 0
        %1924 = vmatpush1.bf16.msra.mxu0 0
        %1925 = vmatprep.subr.bf16.mxu0 0
        %1926 = vmatpush1.bf16.msra.mxu0 0
        %1927 = vmatprep.subr.bf16.mxu0 0
        %1928 = vmatpush1.bf16.msra.mxu0 0
        %1929 = vmatprep.subr.bf16.mxu0 0
        %1930 = vmatpush1.bf16.msra.mxu0 0
        %1931 = vmatprep.subr.bf16.mxu0 0
        %1932 = vmatpush1.bf16.msra.mxu0 0
        %1933 = vmatprep.mubr.bf16.mxu0 0
        %1934 = vmatmul.mubr.bf16.gmra.mrb[0].mxu0 %v1836
        %v1935 = vpop.f32.mrb[0].mxu0
        %v1936 = vadd.f32 %v1770, %v1935
        %v1937 = vpop.f32.mrb[0].mxu0
        %v1938 = vpop.f32.mrb[0].mxu0
        %v1939 = vpop.f32.mrb[0].mxu0
        %1940 = vdwg.mxu0
        %v1941 = vadd.f32 %v1936, %v1578
        %v1942 = vpack.c.bf16 %v1941, %v1941
        %v1943 = vld [vmem:[%s23] sm:$0xf]
        %v1944 = vld [vmem:[%s23 + $0x4] sm:$0xf]
        %v1945 = vld [vmem:[%s23 + $0x8] sm:$0xf]
        %v1946 = vld [vmem:[%s23 + $0xc] sm:$0xf]
        %v1947 = vld [vmem:[%s24] sm:$0x1]
        %v1952 = vunpack.c.l.b16 %v1943
        %v1953 = vunpack.c.l.b16 %v1944
        %v1954 = vunpack.c.l.b16 %v1945
        %v1955 = vunpack.c.l.b16 %v1946
        %v1956 = vpack.c.b16 %v1953, %v1952
        %v1957 = vpack.c.b16 %v1955, %v1954
        %v1961 = vsel %vm801, %v1942, 0
        %1963 = vmatprep.subr.bf16.mxu0 0
        %1964 = vmatpush1.bf16.msra.mxu0 %v1956
        %1965 = vmatprep.subr.bf16.mxu0 0
        %1966 = vmatpush1.bf16.msra.mxu0 %v1957
        %1967 = vmatprep.subr.bf16.mxu0 0
        %1968 = vmatpush1.bf16.msra.mxu0 0
        %1969 = vmatprep.subr.bf16.mxu0 0
        %1970 = vmatpush1.bf16.msra.mxu0 0
        %1971 = vmatprep.subr.bf16.mxu0 0
        %1972 = vmatpush1.bf16.msra.mxu0 0
        %1973 = vmatprep.subr.bf16.mxu0 0
        %1974 = vmatpush1.bf16.msra.mxu0 0
        %1975 = vmatprep.subr.bf16.mxu0 0
        %1976 = vmatpush1.bf16.msra.mxu0 0
        %1977 = vmatprep.subr.bf16.mxu0 0
        %1978 = vmatpush1.bf16.msra.mxu0 0
        %1979 = vmatprep.subr.bf16.mxu0 0
        %1980 = vmatpush1.bf16.msra.mxu0 0
        %1981 = vmatprep.subr.bf16.mxu0 0
        %1982 = vmatpush1.bf16.msra.mxu0 0
        %1983 = vmatprep.subr.bf16.mxu0 0
        %1984 = vmatpush1.bf16.msra.mxu0 0
        %1985 = vmatprep.subr.bf16.mxu0 0
        %1986 = vmatpush1.bf16.msra.mxu0 0
        %1987 = vmatprep.subr.bf16.mxu0 0
        %1988 = vmatpush1.bf16.msra.mxu0 0
        %1989 = vmatprep.subr.bf16.mxu0 0
        %1990 = vmatpush1.bf16.msra.mxu0 0
        %1991 = vmatprep.subr.bf16.mxu0 0
        %1992 = vmatpush1.bf16.msra.mxu0 0
        %1993 = vmatprep.subr.bf16.mxu0 0
        %1994 = vmatpush1.bf16.msra.mxu0 0
        %1995 = vmatprep.mubr.bf16.mxu0 0
        %1996 = vmatmul.mubr.bf16.gmra.mrb[0].mxu0 %v1961
        %v1997 = vpop.f32.mrb[0].mxu0
        %v1998 = vadd.f32 %v1947, %v1997
        %v1999 = vpop.f32.mrb[0].mxu0
        %v2000 = vpop.f32.mrb[0].mxu0
        %v2001 = vpop.f32.mrb[0].mxu0
        %2002 = vdwg.mxu0
        %2003 = vst [vmem:[%s792] sm:$0x1] %v1998
        %s2004 = sand.u32 %s582, 1
        %s2005 = scalar_lea.sflag [#allocation3], %s2004
        %s2006 = sand.u32 %s582, 1
        %s2007 = smul.addr %s2006, 8
        %s2008 = scalar_lea.vmem [#allocation2], %s2007
        %s2009 = sand.u32 %s608, 1
        %s2010 = scalar_lea.sflag [#allocation5], %s2009
        %s2011 = sand.u32 %s608, 1
        %s2012 = scalar_lea.vmem [#allocation4], %s2011
        // Predicated region
        $region121: #{tpu_custom_call.1} parent=119 // pred_check
          %p2013 = pneg %p592
        $region122: #{tpu_custom_call.1} parent=119 // pred_check_branch
          %2015 = sbr.rel (%p2013) target = $region124
        $region123: #{tpu_custom_call.1} parent=119 // pred_region
          %s2017 = ssub.s32 128, 128
          %2018 = vsyncadd %s2005, %s2017
          %s2019 = smul.addr %s44, 128
          %s2020 = scalar_lea.hbm %s25, %s2019
          %s2022 = sshll.u32 %s2008, 4
          %s2023 = int_to_ptr.vmem [resolvable:$true] %s2022
          %2025 = dma.vmem_to_hbm [thread:$0]  %s2023, 128, %s2020, %s2005
        $region124: #{tpu_custom_call.1} parent=119 // pred_fallthru
          _
        // Predicated region
        $region125: #{tpu_custom_call.1} parent=119 // pred_check
          %p2026 = pneg %p618
        $region126: #{tpu_custom_call.1} parent=119 // pred_check_branch
          %2028 = sbr.rel (%p2026) target = $region128
        $region127: #{tpu_custom_call.1} parent=119 // pred_region
          %s2030 = ssub.s32 16, 16
          %2031 = vsyncadd %s2010, %s2030
          %s2032 = smul.addr %s44, 16
          %s2033 = scalar_lea.hbm %s26, %s2032
          %s2035 = sshll.u32 %s2012, 4
          %s2036 = int_to_ptr.vmem [resolvable:$true] %s2035
          %2038 = dma.vmem_to_hbm [thread:$0]  %s2036, 16, %s2033, %s2010
        $region128: #{tpu_custom_call.1} parent=119 // pred_fallthru
          _
      $region120: #{tpu_custom_call.1} parent=5 // pred_fallthru
        _
      %p2039 = scmp.le.s32.totalorder 2, %s39
      // Predicated region
      $region129: #{tpu_custom_call.1} parent=5 // pred_check
        %p2040 = pneg %p2039
      $region130: #{tpu_custom_call.1} parent=5 // pred_check_branch
        %2042 = sbr.rel (%p2040) target = $region132
      $region131: #{tpu_custom_call.1} parent=5 // pred_region
        %s2043 = ssub.s32 %s39, 2
        // Predicated region
        $region133: #{tpu_custom_call.1} parent=131 // pred_check
          %p2044 = pneg %p598
        $region134: #{tpu_custom_call.1} parent=131 // pred_check_branch
          %2046 = sbr.rel (%p2044) target = $region136
        $region135: #{tpu_custom_call.1} parent=131 // pred_region
          %s2047 = sand.u32 %s583, 1
          %s2048 = scalar_lea.sflag [#allocation3], %s2047
          %s2049 = sand.u32 %s583, 1
          %s2050 = smul.addr %s2049, 8
          %s2051 = scalar_lea.vmem [#allocation2], %s2050
          %2052 = dma.done %s2048, 128
        $region136: #{tpu_custom_call.1} parent=131 // pred_fallthru
          _
        // Predicated region
        $region137: #{tpu_custom_call.1} parent=131 // pred_check
          %p2053 = pneg %p624
        $region138: #{tpu_custom_call.1} parent=131 // pred_check_branch
          %2055 = sbr.rel (%p2053) target = $region140
        $region139: #{tpu_custom_call.1} parent=131 // pred_region
          %s2056 = sand.u32 %s609, 1
          %s2057 = scalar_lea.sflag [#allocation5], %s2056
          %s2058 = sand.u32 %s609, 1
          %s2059 = scalar_lea.vmem [#allocation4], %s2058
          %2060 = dma.done %s2057, 16
        $region140: #{tpu_custom_call.1} parent=131 // pred_fallthru
          _
      $region132: #{tpu_custom_call.1} parent=5 // pred_fallthru
        _
    $region6: #{tpu_custom_call.1} parent=1 // loop_footer
      %s43 = sadd.s32 1, %s39
    $region7: #{tpu_custom_call.1} parent=1 // loop_footer_branch
      %38 = sbr.rel target = $region3
    $region8: #{tpu_custom_call.1} parent=1 // loop_exit
      _
    %2061 = vsyncpa [#allocation3], 1
    %s2062 = scalar_lea.sflag [#allocation3], 1
    %2063 = vsyncpa %s2062, 1
    %2064 = vsyncpa [#allocation5], 1
    %s2065 = scalar_lea.sflag [#allocation5], 1
    %2066 = vsyncpa %s2065, 1

</llo_original>
